<compile_context>
chip_gen: v5e
topology: v5e:2x2
jax: 0.10.0
libtpu: 0.0.40
codegen_flags: <defaults>
</compile_context>

<pallas_src>
import functools

import jax
import jax.numpy as jnp
from jax.experimental import pallas as pl
from jax.experimental.pallas import tpu as pltpu


def _tap_shifts(H, W):
    """Flattened-DHW index offset for each of the 27 taps (kd, kh, kw)."""
    HW = H * W
    shifts = []
    for kd in range(3):
        for kh in range(3):
            for kw in range(3):
                shifts.append((kd - 1) * HW + (kh - 1) * W + (kw - 1))
    return shifts


def _conv_same_masks(D, H, W):
    """f32 validity mask (27, D*H*W) for a 3x3x3 'same' (zero-padded) conv."""
    d = jnp.arange(D).reshape(D, 1, 1)
    h = jnp.arange(H).reshape(1, H, 1)
    w = jnp.arange(W).reshape(1, 1, W)
    rows = []
    for kd in range(3):
        for kh in range(3):
            for kw in range(3):
                dd, dh, dw = kd - 1, kh - 1, kw - 1
                m = ((d + dd >= 0) & (d + dd < D) &
                     (h + dh >= 0) & (h + dh < H) &
                     (w + dw >= 0) & (w + dw < W))
                rows.append(m.reshape(-1))
    return jnp.stack(rows, axis=0).astype(jnp.float32)


# ----------------------------------------------------------------------------
# Fused generator kernel.  One batch element per grid step; all intermediates
# stay in VMEM / vregs (never round-trip through HBM).
# ----------------------------------------------------------------------------
def _fused_generator_kernel(noise0_ref, atlas_ref, f1_ref, b1_ref, w2t_ref,
                            b2_ref, masks_ref, wh_ref, bh_ref, o_ref, *,
                            DHW, H, W, Cin, slope):
    # noise0_ref: (B,)        SMEM, noise[:, 0] per batch element
    # atlas_ref : (Cin, DHW)  atlas, channels-first, flattened spatial
    # f1_ref    : (8, DHW)    precomputed W1_flat @ tap_masks   (conv1 fold)
    # b1_ref    : (8, 1)      conv1 bias
    # w2t_ref   : (27, 8)     conv2 weights [tap, ci]
    # b2_ref    : (1, 1)      conv2 bias
    # masks_ref : (27, DHW)   per-tap validity mask ("same" zero padding)
    # wh_ref    : (out_c, Cin+1)  folded 1x1x1 head     bh_ref: (out_c, 1)
    # o_ref     : (out_c, DHW)
    b = pl.program_id(0)
    nval = noise0_ref[b]                                 # per-batch noise scalar

    # ---- noise_processor[0]: Conv3d(1->8,k3,p1)+LReLU on a constant field ---
    # exact fold: h1[co,p] = n * (W1 @ masks)[co,p] + b1[co]
    h1 = nval * f1_ref[...] + b1_ref[...]                # (8, DHW)
    h1 = jnp.where(h1 > 0, h1, slope * h1)

    # ---- noise_processor[2]: Conv3d(8->1,k3,p1)+LReLU ------------------------
    # Channel contraction first (MXU), then 27 single-row shifts (XLU) with
    # per-tap zero-padding masks (VPU FMAs).
    g_all = jnp.dot(w2t_ref[...], h1,
                    preferred_element_type=jnp.float32)  # (27, DHW)

    shifts = _tap_shifts(H, W)
    h2 = jnp.zeros((1, DHW), jnp.float32)
    for t, s in enumerate(shifts):
        g = pltpu.roll(g_all[t:t + 1, :], (-s) % DHW, 1)  # g[p] = G[t, p+s]
        h2 = h2 + masks_ref[pl.ds(t, 1), :] * g
    h2 = h2 + b2_ref[...]
    h2 = jnp.where(h2 > 0, h2, slope * h2)

    # ---- cat([atlas, processed_noise]) -> folded swin stand-in + final_conv --
    wh = wh_ref[...]                                     # (out_c, Cin+1)
    out = wh[:, Cin:Cin + 1] * h2 + bh_ref[...]
    for c in range(Cin):
        out = out + wh[:, c:c + 1] * atlas_ref[pl.ds(c, 1), :]
    o_ref[...] = out.astype(o_ref.dtype)


# ----------------------------------------------------------------------------
# Parameters (PyTorch Conv3d weight layout (Co, Ci, K, K, K), converted in the
# wrapper so real SwinGAN weights could be dropped in without silent mismatch).
# ----------------------------------------------------------------------------
def init_params(key, in_channels=1, out_channels=1, feature_size=24):
    ks = jax.random.split(key, 4)
    std = 0.02
    return {
        # Generator.noise_processor: Conv3d(1,8,k3,p1), Conv3d(8,1,k3,p1)
        "np_w1": jax.random.normal(ks[0], (8, 1, 3, 3, 3), jnp.float32) * std,
        "np_b1": jnp.zeros((8,), jnp.float32),
        "np_w2": jax.random.normal(ks[1], (1, 8, 3, 3, 3), jnp.float32) * std,
        "np_b2": jnp.zeros((1,), jnp.float32),
        # TODO(synk): the MONAI SwinUNETR encoder/decoder has no clean Pallas
        # equivalent here; stand-in is a learned 1x1x1 projection
        # (in_channels+1 -> feature_size) so the rest of the pipeline is exact.
        "swin_w": jax.random.normal(
            ks[2], (feature_size, in_channels + 1, 1, 1, 1), jnp.float32) * std,
        "swin_b": jnp.zeros((feature_size,), jnp.float32),
        # Generator.final_conv: Conv3d(feature_size, out_channels, k1)
        "fc_w": jax.random.normal(
            ks[3], (out_channels, feature_size, 1, 1, 1), jnp.float32) * std,
        "fc_b": jnp.zeros((out_channels,), jnp.float32),
    }


# ----------------------------------------------------------------------------
# SwinGAN.forward (generator path) wrapper
# ----------------------------------------------------------------------------
def swin_gan_forward(params, atlas_ncdhw, noise):
    """atlas_ncdhw: (B, Cin, D, H, W); noise: (B, noise_dim) -> (B, out_c, D, H, W)."""
    B, Cin, D, H, W = atlas_ncdhw.shape
    DHW = D * H * W
    out_c = params["fc_w"].shape[0]
    F = params["swin_w"].shape[0]

    # Channels-first, flattened-spatial (lane-dense) layout; pure reshape.
    atlas = atlas_ncdhw.reshape(B, Cin, DHW).astype(jnp.float32)
    # noise.dim()==2 branch of Generator.forward: channel 0 only.
    noise0 = noise[:, 0].astype(jnp.float32)                      # (B,)

    masks = _conv_same_masks(D, H, W)                             # (27, DHW)

    # noise_processor weights flattened over the 27 taps.
    w1 = params["np_w1"].reshape(8, 27).astype(jnp.float32)       # [co, tap]
    b1 = params["np_b1"].reshape(8, 1).astype(jnp.float32)
    w2t = params["np_w2"].reshape(8, 27).astype(jnp.float32).T    # (27, 8) [tap, ci]
    b2 = params["np_b2"].reshape(1, 1).astype(jnp.float32)

    # Exact conv1 fold for the spatially-constant noise field:
    # Conv3d(1->8,k3,p1)(n * ones) = n * (W1_flat @ masks) + b1.
    field1 = w1 @ masks                                           # (8, DHW)

    # Fold (1x1x1 swin stand-in) o (1x1x1 final_conv) into one linear head (exact).
    sw = params["swin_w"].reshape(F, Cin + 1).astype(jnp.float32)
    fw = params["fc_w"].reshape(out_c, F).astype(jnp.float32)
    wh = fw @ sw                                                  # (out_c, Cin+1)
    bh = (fw @ params["swin_b"].astype(jnp.float32)
          + params["fc_b"].astype(jnp.float32)).reshape(out_c, 1)

    kernel = functools.partial(_fused_generator_kernel, DHW=DHW, H=H, W=W,
                               Cin=Cin, slope=0.2)

    out_flat = pl.pallas_call(
        kernel,
        out_shape=jax.ShapeDtypeStruct((B, out_c, DHW), jnp.float32),
        grid=(B,),
        in_specs=[
            pl.BlockSpec(memory_space=pltpu.MemorySpace.SMEM),     # noise0 (B,)
            pl.BlockSpec((None, Cin, DHW), lambda b: (b, 0, 0)),   # atlas
            pl.BlockSpec((8, DHW), lambda b: (0, 0)),              # folded conv1 field
            pl.BlockSpec((8, 1), lambda b: (0, 0)),                # b1
            pl.BlockSpec((27, 8), lambda b: (0, 0)),               # w2^T
            pl.BlockSpec((1, 1), lambda b: (0, 0)),                # b2
            pl.BlockSpec((27, DHW), lambda b: (0, 0)),             # tap masks
            pl.BlockSpec((out_c, Cin + 1), lambda b: (0, 0)),      # folded head W
            pl.BlockSpec((out_c, 1), lambda b: (0, 0)),            # folded head b
        ],
        out_specs=pl.BlockSpec((None, out_c, DHW), lambda b: (b, 0, 0)),
        compiler_params=pltpu.CompilerParams(
            dimension_semantics=("parallel",),
            vmem_limit_bytes=32 * 1024 * 1024),
    )(noise0, atlas, field1, b1, w2t, b2, masks, wh, bh)

    # TODO(synk): for production volumes (96^3-128^3) add a spatial grid axis
    # over D with a K//2 halo so the per-block working set fits v7x's 64 MiB
    # VMEM; the full demo volume (2048 voxels) fits comfortably as one block.
    return out_flat.reshape(B, out_c, D, H, W)


if __name__ == "__main__":
    key = jax.random.PRNGKey(0)
    k_param, k_atlas, k_noise = jax.random.split(key, 3)

    B, C, D, H, W = 2, 1, 8, 16, 16      # D*H*W = 2048 (multiple of 128)
    noise_dim = 16
    feature_size = 24

    params = init_params(k_param, in_channels=C, out_channels=1,
                         feature_size=feature_size)
    atlas = jax.random.uniform(k_atlas, (B, C, D, H, W), jnp.float32)
    noise = jax.random.normal(k_noise, (B, noise_dim), jnp.float32)

    out = jax.jit(swin_gan_forward)(params, atlas, noise)
    out = jax.block_until_ready(out)
    assert out.shape == (B, 1, D, H, W), out.shape
    print("KERNEL_OK")
</pallas_src>

<mosaic_0001>
module attributes {stable_mosaic.version = 11 : i64} {
  func.func @_fused_generator_kernel(%arg0: i32, %arg1: memref<2xf32, #tpu.memory_space<smem>>, %arg2: memref<1x1x2048xf32, #tpu.memory_space<vmem>>, %arg3: memref<8x2048xf32, #tpu.memory_space<vmem>>, %arg4: memref<8x1xf32, #tpu.memory_space<vmem>>, %arg5: memref<27x8xf32, #tpu.memory_space<vmem>>, %arg6: memref<1x1xf32, #tpu.memory_space<vmem>>, %arg7: memref<27x2048xf32, #tpu.memory_space<vmem>>, %arg8: memref<1x2xf32, #tpu.memory_space<vmem>>, %arg9: memref<1x1xf32, #tpu.memory_space<vmem>>, %arg10: memref<1x1x2048xf32, #tpu.memory_space<vmem>>) attributes {dimension_semantics = [#tpu.dimension_semantics<parallel>], iteration_bounds = array<i64: 2>, scalar_prefetch = 0 : i64, scratch_operands = 0 : i64, tpu.core_type = #tpu.core_type<tc>, window_params = [{transform_indices = @transform_0, window_bounds = array<i64: 2>}, {transform_indices = @transform_1, window_bounds = array<i64: 1, 1, 2048>}, {pipeline_mode = #tpu.pipeline_mode<synchronous>, transform_indices = @transform_2, window_bounds = array<i64: 8, 2048>}, {pipeline_mode = #tpu.pipeline_mode<synchronous>, transform_indices = @transform_3, window_bounds = array<i64: 8, 1>}, {pipeline_mode = #tpu.pipeline_mode<synchronous>, transform_indices = @transform_4, window_bounds = array<i64: 27, 8>}, {pipeline_mode = #tpu.pipeline_mode<synchronous>, transform_indices = @transform_5, window_bounds = array<i64: 1, 1>}, {pipeline_mode = #tpu.pipeline_mode<synchronous>, transform_indices = @transform_6, window_bounds = array<i64: 27, 2048>}, {pipeline_mode = #tpu.pipeline_mode<synchronous>, transform_indices = @transform_7, window_bounds = array<i64: 1, 2>}, {pipeline_mode = #tpu.pipeline_mode<synchronous>, transform_indices = @transform_8, window_bounds = array<i64: 1, 1>}, {transform_indices = @transform_9, window_bounds = array<i64: 1, 1, 2048>}]} {
    %0 = arith.index_cast %arg0 : i32 to index
    %1 = memref.load %arg1[%0] : memref<2xf32, #tpu.memory_space<smem>>
    %c0 = arith.constant 0 : index
    %c0_0 = arith.constant 0 : index
    %2 = vector.load %arg3[%c0, %c0_0] : memref<8x2048xf32, #tpu.memory_space<vmem>>, vector<8x2048xf32>
    %3 = vector.broadcast %1 : f32 to vector<8x2048xf32>
    %4 = arith.mulf %3, %2 : vector<8x2048xf32>
    %c0_1 = arith.constant 0 : index
    %c0_2 = arith.constant 0 : index
    %5 = vector.load %arg4[%c0_1, %c0_2] : memref<8x1xf32, #tpu.memory_space<vmem>>, vector<8x1xf32>
    %6 = vector.broadcast %5 : vector<8x1xf32> to vector<8x2048xf32>
    %7 = arith.addf %4, %6 : vector<8x2048xf32>
    %cst = arith.constant 0.000000e+00 : f32
    %8 = vector.broadcast %cst : f32 to vector<8x2048xf32>
    %9 = arith.cmpf ogt, %7, %8 : vector<8x2048xf32>
    %cst_3 = arith.constant 2.000000e-01 : f32
    %10 = vector.broadcast %cst_3 : f32 to vector<8x2048xf32>
    %11 = arith.mulf %10, %7 : vector<8x2048xf32>
    %12 = arith.select %9, %7, %11 : vector<8x2048xi1>, vector<8x2048xf32>
    %c0_4 = arith.constant 0 : index
    %c0_5 = arith.constant 0 : index
    %13 = vector.load %arg5[%c0_4, %c0_5] : memref<27x8xf32, #tpu.memory_space<vmem>>, vector<27x8xf32>
    %cst_6 = arith.constant dense<0.000000e+00> : vector<27x2048xf32>
    %14 = tpu.matmul %13, %12, %cst_6 {dimension_numbers = #tpu.dot_dimension_numbers<[1], [0], [0], [1], [0, 0, 1, 1], [], []>} : vector<27x8xf32>, vector<8x2048xf32>, vector<27x2048xf32> -> vector<27x2048xf32>
    %cst_7 = arith.constant 0.000000e+00 : f32
    %15 = vector.broadcast %cst_7 : f32 to vector<1x2048xf32>
    %16 = vector.extract_strided_slice %14 {offsets = [0, 0], sizes = [1, 2048], strides = [1, 1]} : vector<27x2048xf32> to vector<1x2048xf32>
    %c273_i32 = arith.constant 273 : i32
    %17 = tpu.dynamic_rotate %16 by %c273_i32 dim 1 : vector<1x2048xf32>, i32 -> vector<1x2048xf32>
    %c0_8 = arith.constant 0 : index
    %c0_9 = arith.constant 0 : index
    %18 = vector.load %arg7[%c0_8, %c0_9] : memref<27x2048xf32, #tpu.memory_space<vmem>>, vector<1x2048xf32>
    %19 = arith.mulf %18, %17 : vector<1x2048xf32>
    %20 = arith.addf %15, %19 : vector<1x2048xf32>
    %21 = vector.extract_strided_slice %14 {offsets = [1, 0], sizes = [1, 2048], strides = [1, 1]} : vector<27x2048xf32> to vector<1x2048xf32>
    %c272_i32 = arith.constant 272 : i32
    %22 = tpu.dynamic_rotate %21 by %c272_i32 dim 1 : vector<1x2048xf32>, i32 -> vector<1x2048xf32>
    %c1 = arith.constant 1 : index
    %c0_10 = arith.constant 0 : index
    %23 = vector.load %arg7[%c1, %c0_10] : memref<27x2048xf32, #tpu.memory_space<vmem>>, vector<1x2048xf32>
    %24 = arith.mulf %23, %22 : vector<1x2048xf32>
    %25 = arith.addf %20, %24 : vector<1x2048xf32>
    %26 = vector.extract_strided_slice %14 {offsets = [2, 0], sizes = [1, 2048], strides = [1, 1]} : vector<27x2048xf32> to vector<1x2048xf32>
    %c271_i32 = arith.constant 271 : i32
    %27 = tpu.dynamic_rotate %26 by %c271_i32 dim 1 : vector<1x2048xf32>, i32 -> vector<1x2048xf32>
    %c2 = arith.constant 2 : index
    %c0_11 = arith.constant 0 : index
    %28 = vector.load %arg7[%c2, %c0_11] : memref<27x2048xf32, #tpu.memory_space<vmem>>, vector<1x2048xf32>
    %29 = arith.mulf %28, %27 : vector<1x2048xf32>
    %30 = arith.addf %25, %29 : vector<1x2048xf32>
    %31 = vector.extract_strided_slice %14 {offsets = [3, 0], sizes = [1, 2048], strides = [1, 1]} : vector<27x2048xf32> to vector<1x2048xf32>
    %c257_i32 = arith.constant 257 : i32
    %32 = tpu.dynamic_rotate %31 by %c257_i32 dim 1 : vector<1x2048xf32>, i32 -> vector<1x2048xf32>
    %c3 = arith.constant 3 : index
    %c0_12 = arith.constant 0 : index
    %33 = vector.load %arg7[%c3, %c0_12] : memref<27x2048xf32, #tpu.memory_space<vmem>>, vector<1x2048xf32>
    %34 = arith.mulf %33, %32 : vector<1x2048xf32>
    %35 = arith.addf %30, %34 : vector<1x2048xf32>
    %36 = vector.extract_strided_slice %14 {offsets = [4, 0], sizes = [1, 2048], strides = [1, 1]} : vector<27x2048xf32> to vector<1x2048xf32>
    %c256_i32 = arith.constant 256 : i32
    %37 = tpu.dynamic_rotate %36 by %c256_i32 dim 1 : vector<1x2048xf32>, i32 -> vector<1x2048xf32>
    %c4 = arith.constant 4 : index
    %c0_13 = arith.constant 0 : index
    %38 = vector.load %arg7[%c4, %c0_13] : memref<27x2048xf32, #tpu.memory_space<vmem>>, vector<1x2048xf32>
    %39 = arith.mulf %38, %37 : vector<1x2048xf32>
    %40 = arith.addf %35, %39 : vector<1x2048xf32>
    %41 = vector.extract_strided_slice %14 {offsets = [5, 0], sizes = [1, 2048], strides = [1, 1]} : vector<27x2048xf32> to vector<1x2048xf32>
    %c255_i32 = arith.constant 255 : i32
    %42 = tpu.dynamic_rotate %41 by %c255_i32 dim 1 : vector<1x2048xf32>, i32 -> vector<1x2048xf32>
    %c5 = arith.constant 5 : index
    %c0_14 = arith.constant 0 : index
    %43 = vector.load %arg7[%c5, %c0_14] : memref<27x2048xf32, #tpu.memory_space<vmem>>, vector<1x2048xf32>
    %44 = arith.mulf %43, %42 : vector<1x2048xf32>
    %45 = arith.addf %40, %44 : vector<1x2048xf32>
    %46 = vector.extract_strided_slice %14 {offsets = [6, 0], sizes = [1, 2048], strides = [1, 1]} : vector<27x2048xf32> to vector<1x2048xf32>
    %c241_i32 = arith.constant 241 : i32
    %47 = tpu.dynamic_rotate %46 by %c241_i32 dim 1 : vector<1x2048xf32>, i32 -> vector<1x2048xf32>
    %c6 = arith.constant 6 : index
    %c0_15 = arith.constant 0 : index
    %48 = vector.load %arg7[%c6, %c0_15] : memref<27x2048xf32, #tpu.memory_space<vmem>>, vector<1x2048xf32>
    %49 = arith.mulf %48, %47 : vector<1x2048xf32>
    %50 = arith.addf %45, %49 : vector<1x2048xf32>
    %51 = vector.extract_strided_slice %14 {offsets = [7, 0], sizes = [1, 2048], strides = [1, 1]} : vector<27x2048xf32> to vector<1x2048xf32>
    %c240_i32 = arith.constant 240 : i32
    %52 = tpu.dynamic_rotate %51 by %c240_i32 dim 1 : vector<1x2048xf32>, i32 -> vector<1x2048xf32>
    %c7 = arith.constant 7 : index
    %c0_16 = arith.constant 0 : index
    %53 = vector.load %arg7[%c7, %c0_16] : memref<27x2048xf32, #tpu.memory_space<vmem>>, vector<1x2048xf32>
    %54 = arith.mulf %53, %52 : vector<1x2048xf32>
    %55 = arith.addf %50, %54 : vector<1x2048xf32>
    %56 = vector.extract_strided_slice %14 {offsets = [8, 0], sizes = [1, 2048], strides = [1, 1]} : vector<27x2048xf32> to vector<1x2048xf32>
    %c239_i32 = arith.constant 239 : i32
    %57 = tpu.dynamic_rotate %56 by %c239_i32 dim 1 : vector<1x2048xf32>, i32 -> vector<1x2048xf32>
    %c8 = arith.constant 8 : index
    %c0_17 = arith.constant 0 : index
    %58 = vector.load %arg7[%c8, %c0_17] : memref<27x2048xf32, #tpu.memory_space<vmem>>, vector<1x2048xf32>
    %59 = arith.mulf %58, %57 : vector<1x2048xf32>
    %60 = arith.addf %55, %59 : vector<1x2048xf32>
    %61 = vector.extract_strided_slice %14 {offsets = [9, 0], sizes = [1, 2048], strides = [1, 1]} : vector<27x2048xf32> to vector<1x2048xf32>
    %c17_i32 = arith.constant 17 : i32
    %62 = tpu.dynamic_rotate %61 by %c17_i32 dim 1 : vector<1x2048xf32>, i32 -> vector<1x2048xf32>
    %c9 = arith.constant 9 : index
    %c0_18 = arith.constant 0 : index
    %63 = vector.load %arg7[%c9, %c0_18] : memref<27x2048xf32, #tpu.memory_space<vmem>>, vector<1x2048xf32>
    %64 = arith.mulf %63, %62 : vector<1x2048xf32>
    %65 = arith.addf %60, %64 : vector<1x2048xf32>
    %66 = vector.extract_strided_slice %14 {offsets = [10, 0], sizes = [1, 2048], strides = [1, 1]} : vector<27x2048xf32> to vector<1x2048xf32>
    %c16_i32 = arith.constant 16 : i32
    %67 = tpu.dynamic_rotate %66 by %c16_i32 dim 1 : vector<1x2048xf32>, i32 -> vector<1x2048xf32>
    %c10 = arith.constant 10 : index
    %c0_19 = arith.constant 0 : index
    %68 = vector.load %arg7[%c10, %c0_19] : memref<27x2048xf32, #tpu.memory_space<vmem>>, vector<1x2048xf32>
    %69 = arith.mulf %68, %67 : vector<1x2048xf32>
    %70 = arith.addf %65, %69 : vector<1x2048xf32>
    %71 = vector.extract_strided_slice %14 {offsets = [11, 0], sizes = [1, 2048], strides = [1, 1]} : vector<27x2048xf32> to vector<1x2048xf32>
    %c15_i32 = arith.constant 15 : i32
    %72 = tpu.dynamic_rotate %71 by %c15_i32 dim 1 : vector<1x2048xf32>, i32 -> vector<1x2048xf32>
    %c11 = arith.constant 11 : index
    %c0_20 = arith.constant 0 : index
    %73 = vector.load %arg7[%c11, %c0_20] : memref<27x2048xf32, #tpu.memory_space<vmem>>, vector<1x2048xf32>
    %74 = arith.mulf %73, %72 : vector<1x2048xf32>
    %75 = arith.addf %70, %74 : vector<1x2048xf32>
    %76 = vector.extract_strided_slice %14 {offsets = [12, 0], sizes = [1, 2048], strides = [1, 1]} : vector<27x2048xf32> to vector<1x2048xf32>
    %c1_i32 = arith.constant 1 : i32
    %77 = tpu.dynamic_rotate %76 by %c1_i32 dim 1 : vector<1x2048xf32>, i32 -> vector<1x2048xf32>
    %c12 = arith.constant 12 : index
    %c0_21 = arith.constant 0 : index
    %78 = vector.load %arg7[%c12, %c0_21] : memref<27x2048xf32, #tpu.memory_space<vmem>>, vector<1x2048xf32>
    %79 = arith.mulf %78, %77 : vector<1x2048xf32>
    %80 = arith.addf %75, %79 : vector<1x2048xf32>
    %81 = vector.extract_strided_slice %14 {offsets = [13, 0], sizes = [1, 2048], strides = [1, 1]} : vector<27x2048xf32> to vector<1x2048xf32>
    %c0_i32 = arith.constant 0 : i32
    %82 = tpu.dynamic_rotate %81 by %c0_i32 dim 1 : vector<1x2048xf32>, i32 -> vector<1x2048xf32>
    %c13 = arith.constant 13 : index
    %c0_22 = arith.constant 0 : index
    %83 = vector.load %arg7[%c13, %c0_22] : memref<27x2048xf32, #tpu.memory_space<vmem>>, vector<1x2048xf32>
    %84 = arith.mulf %83, %82 : vector<1x2048xf32>
    %85 = arith.addf %80, %84 : vector<1x2048xf32>
    %86 = vector.extract_strided_slice %14 {offsets = [14, 0], sizes = [1, 2048], strides = [1, 1]} : vector<27x2048xf32> to vector<1x2048xf32>
    %c2047_i32 = arith.constant 2047 : i32
    %87 = tpu.dynamic_rotate %86 by %c2047_i32 dim 1 : vector<1x2048xf32>, i32 -> vector<1x2048xf32>
    %c14 = arith.constant 14 : index
    %c0_23 = arith.constant 0 : index
    %88 = vector.load %arg7[%c14, %c0_23] : memref<27x2048xf32, #tpu.memory_space<vmem>>, vector<1x2048xf32>
    %89 = arith.mulf %88, %87 : vector<1x2048xf32>
    %90 = arith.addf %85, %89 : vector<1x2048xf32>
    %91 = vector.extract_strided_slice %14 {offsets = [15, 0], sizes = [1, 2048], strides = [1, 1]} : vector<27x2048xf32> to vector<1x2048xf32>
    %c2033_i32 = arith.constant 2033 : i32
    %92 = tpu.dynamic_rotate %91 by %c2033_i32 dim 1 : vector<1x2048xf32>, i32 -> vector<1x2048xf32>
    %c15 = arith.constant 15 : index
    %c0_24 = arith.constant 0 : index
    %93 = vector.load %arg7[%c15, %c0_24] : memref<27x2048xf32, #tpu.memory_space<vmem>>, vector<1x2048xf32>
    %94 = arith.mulf %93, %92 : vector<1x2048xf32>
    %95 = arith.addf %90, %94 : vector<1x2048xf32>
    %96 = vector.extract_strided_slice %14 {offsets = [16, 0], sizes = [1, 2048], strides = [1, 1]} : vector<27x2048xf32> to vector<1x2048xf32>
    %c2032_i32 = arith.constant 2032 : i32
    %97 = tpu.dynamic_rotate %96 by %c2032_i32 dim 1 : vector<1x2048xf32>, i32 -> vector<1x2048xf32>
    %c16 = arith.constant 16 : index
    %c0_25 = arith.constant 0 : index
    %98 = vector.load %arg7[%c16, %c0_25] : memref<27x2048xf32, #tpu.memory_space<vmem>>, vector<1x2048xf32>
    %99 = arith.mulf %98, %97 : vector<1x2048xf32>
    %100 = arith.addf %95, %99 : vector<1x2048xf32>
    %101 = vector.extract_strided_slice %14 {offsets = [17, 0], sizes = [1, 2048], strides = [1, 1]} : vector<27x2048xf32> to vector<1x2048xf32>
    %c2031_i32 = arith.constant 2031 : i32
    %102 = tpu.dynamic_rotate %101 by %c2031_i32 dim 1 : vector<1x2048xf32>, i32 -> vector<1x2048xf32>
    %c17 = arith.constant 17 : index
    %c0_26 = arith.constant 0 : index
    %103 = vector.load %arg7[%c17, %c0_26] : memref<27x2048xf32, #tpu.memory_space<vmem>>, vector<1x2048xf32>
    %104 = arith.mulf %103, %102 : vector<1x2048xf32>
    %105 = arith.addf %100, %104 : vector<1x2048xf32>
    %106 = vector.extract_strided_slice %14 {offsets = [18, 0], sizes = [1, 2048], strides = [1, 1]} : vector<27x2048xf32> to vector<1x2048xf32>
    %c1809_i32 = arith.constant 1809 : i32
    %107 = tpu.dynamic_rotate %106 by %c1809_i32 dim 1 : vector<1x2048xf32>, i32 -> vector<1x2048xf32>
    %c18 = arith.constant 18 : index
    %c0_27 = arith.constant 0 : index
    %108 = vector.load %arg7[%c18, %c0_27] : memref<27x2048xf32, #tpu.memory_space<vmem>>, vector<1x2048xf32>
    %109 = arith.mulf %108, %107 : vector<1x2048xf32>
    %110 = arith.addf %105, %109 : vector<1x2048xf32>
    %111 = vector.extract_strided_slice %14 {offsets = [19, 0], sizes = [1, 2048], strides = [1, 1]} : vector<27x2048xf32> to vector<1x2048xf32>
    %c1808_i32 = arith.constant 1808 : i32
    %112 = tpu.dynamic_rotate %111 by %c1808_i32 dim 1 : vector<1x2048xf32>, i32 -> vector<1x2048xf32>
    %c19 = arith.constant 19 : index
    %c0_28 = arith.constant 0 : index
    %113 = vector.load %arg7[%c19, %c0_28] : memref<27x2048xf32, #tpu.memory_space<vmem>>, vector<1x2048xf32>
    %114 = arith.mulf %113, %112 : vector<1x2048xf32>
    %115 = arith.addf %110, %114 : vector<1x2048xf32>
    %116 = vector.extract_strided_slice %14 {offsets = [20, 0], sizes = [1, 2048], strides = [1, 1]} : vector<27x2048xf32> to vector<1x2048xf32>
    %c1807_i32 = arith.constant 1807 : i32
    %117 = tpu.dynamic_rotate %116 by %c1807_i32 dim 1 : vector<1x2048xf32>, i32 -> vector<1x2048xf32>
    %c20 = arith.constant 20 : index
    %c0_29 = arith.constant 0 : index
    %118 = vector.load %arg7[%c20, %c0_29] : memref<27x2048xf32, #tpu.memory_space<vmem>>, vector<1x2048xf32>
    %119 = arith.mulf %118, %117 : vector<1x2048xf32>
    %120 = arith.addf %115, %119 : vector<1x2048xf32>
    %121 = vector.extract_strided_slice %14 {offsets = [21, 0], sizes = [1, 2048], strides = [1, 1]} : vector<27x2048xf32> to vector<1x2048xf32>
    %c1793_i32 = arith.constant 1793 : i32
    %122 = tpu.dynamic_rotate %121 by %c1793_i32 dim 1 : vector<1x2048xf32>, i32 -> vector<1x2048xf32>
    %c21 = arith.constant 21 : index
    %c0_30 = arith.constant 0 : index
    %123 = vector.load %arg7[%c21, %c0_30] : memref<27x2048xf32, #tpu.memory_space<vmem>>, vector<1x2048xf32>
    %124 = arith.mulf %123, %122 : vector<1x2048xf32>
    %125 = arith.addf %120, %124 : vector<1x2048xf32>
    %126 = vector.extract_strided_slice %14 {offsets = [22, 0], sizes = [1, 2048], strides = [1, 1]} : vector<27x2048xf32> to vector<1x2048xf32>
    %c1792_i32 = arith.constant 1792 : i32
    %127 = tpu.dynamic_rotate %126 by %c1792_i32 dim 1 : vector<1x2048xf32>, i32 -> vector<1x2048xf32>
    %c22 = arith.constant 22 : index
    %c0_31 = arith.constant 0 : index
    %128 = vector.load %arg7[%c22, %c0_31] : memref<27x2048xf32, #tpu.memory_space<vmem>>, vector<1x2048xf32>
    %129 = arith.mulf %128, %127 : vector<1x2048xf32>
    %130 = arith.addf %125, %129 : vector<1x2048xf32>
    %131 = vector.extract_strided_slice %14 {offsets = [23, 0], sizes = [1, 2048], strides = [1, 1]} : vector<27x2048xf32> to vector<1x2048xf32>
    %c1791_i32 = arith.constant 1791 : i32
    %132 = tpu.dynamic_rotate %131 by %c1791_i32 dim 1 : vector<1x2048xf32>, i32 -> vector<1x2048xf32>
    %c23 = arith.constant 23 : index
    %c0_32 = arith.constant 0 : index
    %133 = vector.load %arg7[%c23, %c0_32] : memref<27x2048xf32, #tpu.memory_space<vmem>>, vector<1x2048xf32>
    %134 = arith.mulf %133, %132 : vector<1x2048xf32>
    %135 = arith.addf %130, %134 : vector<1x2048xf32>
    %136 = vector.extract_strided_slice %14 {offsets = [24, 0], sizes = [1, 2048], strides = [1, 1]} : vector<27x2048xf32> to vector<1x2048xf32>
    %c1777_i32 = arith.constant 1777 : i32
    %137 = tpu.dynamic_rotate %136 by %c1777_i32 dim 1 : vector<1x2048xf32>, i32 -> vector<1x2048xf32>
    %c24 = arith.constant 24 : index
    %c0_33 = arith.constant 0 : index
    %138 = vector.load %arg7[%c24, %c0_33] : memref<27x2048xf32, #tpu.memory_space<vmem>>, vector<1x2048xf32>
    %139 = arith.mulf %138, %137 : vector<1x2048xf32>
    %140 = arith.addf %135, %139 : vector<1x2048xf32>
    %141 = vector.extract_strided_slice %14 {offsets = [25, 0], sizes = [1, 2048], strides = [1, 1]} : vector<27x2048xf32> to vector<1x2048xf32>
    %c1776_i32 = arith.constant 1776 : i32
    %142 = tpu.dynamic_rotate %141 by %c1776_i32 dim 1 : vector<1x2048xf32>, i32 -> vector<1x2048xf32>
    %c25 = arith.constant 25 : index
    %c0_34 = arith.constant 0 : index
    %143 = vector.load %arg7[%c25, %c0_34] : memref<27x2048xf32, #tpu.memory_space<vmem>>, vector<1x2048xf32>
    %144 = arith.mulf %143, %142 : vector<1x2048xf32>
    %145 = arith.addf %140, %144 : vector<1x2048xf32>
    %146 = vector.extract_strided_slice %14 {offsets = [26, 0], sizes = [1, 2048], strides = [1, 1]} : vector<27x2048xf32> to vector<1x2048xf32>
    %c1775_i32 = arith.constant 1775 : i32
    %147 = tpu.dynamic_rotate %146 by %c1775_i32 dim 1 : vector<1x2048xf32>, i32 -> vector<1x2048xf32>
    %c26 = arith.constant 26 : index
    %c0_35 = arith.constant 0 : index
    %148 = vector.load %arg7[%c26, %c0_35] : memref<27x2048xf32, #tpu.memory_space<vmem>>, vector<1x2048xf32>
    %149 = arith.mulf %148, %147 : vector<1x2048xf32>
    %150 = arith.addf %145, %149 : vector<1x2048xf32>
    %c0_36 = arith.constant 0 : index
    %c0_37 = arith.constant 0 : index
    %151 = vector.load %arg6[%c0_36, %c0_37] : memref<1x1xf32, #tpu.memory_space<vmem>>, vector<1x1xf32>
    %152 = vector.broadcast %151 : vector<1x1xf32> to vector<1x2048xf32>
    %153 = arith.addf %150, %152 : vector<1x2048xf32>
    %cst_38 = arith.constant 0.000000e+00 : f32
    %154 = vector.broadcast %cst_38 : f32 to vector<1x2048xf32>
    %155 = arith.cmpf ogt, %153, %154 : vector<1x2048xf32>
    %cst_39 = arith.constant 2.000000e-01 : f32
    %156 = vector.broadcast %cst_39 : f32 to vector<1x2048xf32>
    %157 = arith.mulf %156, %153 : vector<1x2048xf32>
    %158 = arith.select %155, %153, %157 : vector<1x2048xi1>, vector<1x2048xf32>
    %c0_40 = arith.constant 0 : index
    %c0_41 = arith.constant 0 : index
    %159 = vector.load %arg8[%c0_40, %c0_41] : memref<1x2xf32, #tpu.memory_space<vmem>>, vector<1x2xf32>
    %160 = vector.extract_strided_slice %159 {offsets = [0, 1], sizes = [1, 1], strides = [1, 1]} : vector<1x2xf32> to vector<1x1xf32>
    %161 = vector.broadcast %160 : vector<1x1xf32> to vector<1x2048xf32>
    %162 = arith.mulf %161, %158 : vector<1x2048xf32>
    %c0_42 = arith.constant 0 : index
    %c0_43 = arith.constant 0 : index
    %163 = vector.load %arg9[%c0_42, %c0_43] : memref<1x1xf32, #tpu.memory_space<vmem>>, vector<1x1xf32>
    %164 = vector.broadcast %163 : vector<1x1xf32> to vector<1x2048xf32>
    %165 = arith.addf %162, %164 : vector<1x2048xf32>
    %166 = vector.extract_strided_slice %159 {offsets = [0, 0], sizes = [1, 1], strides = [1, 1]} : vector<1x2xf32> to vector<1x1xf32>
    %c0_44 = arith.constant 0 : index
    %c0_45 = arith.constant 0 : index
    %c0_46 = arith.constant 0 : index
    %167 = vector.load %arg2[%c0_44, %c0_45, %c0_46] : memref<1x1x2048xf32, #tpu.memory_space<vmem>>, vector<1x1x2048xf32>
    %168 = vector.shape_cast %167 : vector<1x1x2048xf32> to vector<1x2048xf32>
    %169 = vector.broadcast %166 : vector<1x1xf32> to vector<1x2048xf32>
    %170 = arith.mulf %169, %168 : vector<1x2048xf32>
    %171 = arith.addf %165, %170 : vector<1x2048xf32>
    %c0_47 = arith.constant 0 : index
    %c0_48 = arith.constant 0 : index
    %c0_49 = arith.constant 0 : index
    %172 = vector.load %arg10[%c0_47, %c0_48, %c0_49] : memref<1x1x2048xf32, #tpu.memory_space<vmem>>, vector<1x1x2048xf32>
    %173 = vector.shape_cast %172 : vector<1x1x2048xf32> to vector<1x2048xf32>
    %174 = vector.shape_cast %171 : vector<1x2048xf32> to vector<1x1x2048xf32>
    tpu.vector_store %arg10[%c0_47, %c0_48, %c0_49], %174 {strides = array<i32>} : memref<1x1x2048xf32, #tpu.memory_space<vmem>>, vector<1x1x2048xf32>,
    return
  }
  func.func @transform_0(%arg0: i32) -> i32 {
    %c0_i32 = arith.constant 0 : i32
    %c0_i32_0 = arith.constant 0 : i32
    return %c0_i32 : i32
  }
  func.func @transform_1(%arg0: i32) -> (i32, i32, i32) {
    %c0_i32 = arith.constant 0 : i32
    %c0_i32_0 = arith.constant 0 : i32
    %c0_i32_1 = arith.constant 0 : i32
    return %arg0, %c0_i32, %c0_i32_0 : i32, i32, i32
  }
  func.func @transform_2(%arg0: i32) -> (i32, i32) {
    %c0_i32 = arith.constant 0 : i32
    %c0_i32_0 = arith.constant 0 : i32
    %c0_i32_1 = arith.constant 0 : i32
    return %c0_i32, %c0_i32_0 : i32, i32
  }
  func.func @transform_3(%arg0: i32) -> (i32, i32) {
    %c0_i32 = arith.constant 0 : i32
    %c0_i32_0 = arith.constant 0 : i32
    %c0_i32_1 = arith.constant 0 : i32
    return %c0_i32, %c0_i32_0 : i32, i32
  }
  func.func @transform_4(%arg0: i32) -> (i32, i32) {
    %c0_i32 = arith.constant 0 : i32
    %c0_i32_0 = arith.constant 0 : i32
    %c0_i32_1 = arith.constant 0 : i32
    return %c0_i32, %c0_i32_0 : i32, i32
  }
  func.func @transform_5(%arg0: i32) -> (i32, i32) {
    %c0_i32 = arith.constant 0 : i32
    %c0_i32_0 = arith.constant 0 : i32
    %c0_i32_1 = arith.constant 0 : i32
    return %c0_i32, %c0_i32_0 : i32, i32
  }
  func.func @transform_6(%arg0: i32) -> (i32, i32) {
    %c0_i32 = arith.constant 0 : i32
    %c0_i32_0 = arith.constant 0 : i32
    %c0_i32_1 = arith.constant 0 : i32
    return %c0_i32, %c0_i32_0 : i32, i32
  }
  func.func @transform_7(%arg0: i32) -> (i32, i32) {
    %c0_i32 = arith.constant 0 : i32
    %c0_i32_0 = arith.constant 0 : i32
    %c0_i32_1 = arith.constant 0 : i32
    return %c0_i32, %c0_i32_0 : i32, i32
  }
  func.func @transform_8(%arg0: i32) -> (i32, i32) {
    %c0_i32 = arith.constant 0 : i32
    %c0_i32_0 = arith.constant 0 : i32
    %c0_i32_1 = arith.constant 0 : i32
    return %c0_i32, %c0_i32_0 : i32, i32
  }
  func.func @transform_9(%arg0: i32) -> (i32, i32, i32) {
    %c0_i32 = arith.constant 0 : i32
    %c0_i32_0 = arith.constant 0 : i32
    %c0_i32_1 = arith.constant 0 : i32
    return %arg0, %c0_i32, %c0_i32_0 : i32, i32, i32
  }
}

</mosaic_0001>

<llo_original>
// kernel: swin_gan_forward.1
$region0: #{swin_gan_forward.1}
  #allocation0 [shape = 'u32[]', space=smem, size = 0x4, offset = 0x4, fixed_abs, tag = 'smem constant byte address 0x4 - core index']
  #allocation1 [shape = 'u32[72,128]{1,0:T(1,128)}', space=vmem, size = 0x9000, scoped, tag = 'internal scratch']
  #allocation2 [shape = 'f32[1,1]{1,0:T(1,128)S(1)}', space=vmem, size = 0x200, scoped, tag = 'scoped memory for swin_gan_forward.1']
  #allocation3 [shape = 'f32[1,1]{1,0:T(1,128)S(1)}', space=vmem, size = 0x200, scoped, tag = 'scoped memory for swin_gan_forward.1']
  %s0 = inlined_call_operand.vmem [shape: f32[2], index: 0, kind: input, shape index: {}]
  %s1 = inlined_call_operand.vmem [shape: f32[2,1,2048], index: 1, kind: input, shape index: {}]
  %s2 = inlined_call_operand.vmem [shape: f32[8,2048], index: 2, kind: input, shape index: {}]
  %s3 = inlined_call_operand.vmem [shape: f32[8,1], index: 3, kind: input, shape index: {}]
  %s4 = inlined_call_operand.vmem [shape: f32[27,8], index: 4, kind: input, shape index: {}]
  %s5 = inlined_call_operand.<no memory space> [shape: f32[1,1], index: 5, kind: input, shape index: {}]
  %s6 = inlined_call_operand.vmem [shape: f32[27,2048], index: 6, kind: input, shape index: {}]
  %s7 = inlined_call_operand.vmem [shape: f32[1,2], index: 7, kind: input, shape index: {}]
  %s8 = inlined_call_operand.<no memory space> [shape: f32[1,1], index: 8, kind: input, shape index: {}]
  %s9 = inlined_call_operand.vmem [shape: f32[2,1,2048], index: 9, kind: output, shape index: {}]
  %s10 = sld [smem:[#allocation0]]
  $region73: #{swin_gan_forward.1} parent=0
    _
  %s12 = ssub.s32 1, %s10
  %s13 = scalar_select 0, %s12, %s10
  %v14 = vstv %s5
  %15 = vst [vmem:[#allocation2] sm:$0x1] %v14
  %v16 = vstv %s8
  %17 = vst [vmem:[#allocation3] sm:$0x1] %v16
  $region1: #{swin_gan_forward.1} parent=0
    #allocation4 [shape = 'u8[512]{0}', space=smem, size = 0x200, scoped, tag = 'input window, operand 0, single buffered']
    #allocation5 [shape = 's32[2]{0}', space=sflag, size = 0x8, scoped, tag = 'scoped memory for swin_gan_forward.1']
    %18 = vsyncpa [#allocation5], 0
    loop: start=0, step=1, limit=4
    $region2: #{swin_gan_forward.1} parent=1 // loop_pre_header
      _
    $region3: #{swin_gan_forward.1} parent=1 // loop_header
      %s20 = sphi 0, %s24
      %p21 = scmp.ge.s32.totalorder %s20, 4
      %s28 = sphi 0, %s28
      %s30 = sphi 0, %s28
      %s31 = sphi 0, %s30
      %s45 = sphi 0, %s31
      %s51 = sphi 0, %s53
      %s54 = sphi 0, %s51
      %s55 = sphi 0, %s54
      %s71 = sphi 0, %s55
      %s75 = sphi 0, %s75
      %s77 = sphi 0, %s75
      %s78 = sphi 0, %s77
      %s92 = sphi 0, %s78
      %s96 = sphi 0, %s96
      %s98 = sphi 0, %s96
      %s99 = sphi 0, %s98
      %s113 = sphi 0, %s99
      %s117 = sphi 0, %s117
      %s119 = sphi 0, %s117
      %s120 = sphi 0, %s119
      %s134 = sphi 0, %s120
      %s138 = sphi 0, %s138
      %s140 = sphi 0, %s138
      %s141 = sphi 0, %s140
      %s155 = sphi 0, %s141
      %s159 = sphi 0, %s159
      %s161 = sphi 0, %s159
      %s162 = sphi 0, %s161
      %s176 = sphi 0, %s162
      %s180 = sphi 0, %s180
      %s182 = sphi 0, %s180
      %s183 = sphi 0, %s182
      %s197 = sphi 0, %s183
      %s201 = sphi 0, %s201
      %s203 = sphi 0, %s201
      %s204 = sphi 0, %s203
      %s218 = sphi 0, %s204
      %s224 = sphi 0, %s226
      %s227 = sphi 0, %s224
      %s228 = sphi 0, %s227
      %s244 = sphi 0, %s228
    $region4: #{swin_gan_forward.1} parent=1 // loop_header_branch
      %23 = sbr.rel (%p21) target = $region8
    $region5: #{swin_gan_forward.1} parent=1 // loop_body
      %s25 = ssub.s32 %s20, 1
      %s26 = ssub.s32 %s20, 2
      %s27 = sadd.s32 %s20, 1
      %s29 = sadd.s32 %s28, 1
      %p32 = scmp.eq.s32.totalorder %s20, 1
      %p33 = scmp.ne.s32.totalorder %s28, %s30
      %p34 = scmp.eq.s32.totalorder %s20, 0
      %p35 = por %p33, %p34
      %p36 = scmp.ne.s32.totalorder %s28, %s30
      %p37 = scmp.eq.s32.totalorder %s25, 1
      %p38 = por %p36, %p37
      %p39 = scmp.ne.s32.totalorder %s30, %s31
      %p40 = scmp.eq.s32.totalorder %s25, 0
      %p41 = por %p39, %p40
      %p42 = scmp.ne.s32.totalorder %s30, %s31
      %p43 = scmp.eq.s32.totalorder %s26, 1
      %p44 = por %p42, %p43
      %p46 = scmp.ne.s32.totalorder %s31, %s45
      %p47 = scmp.eq.s32.totalorder %s26, 0
      %p48 = por %p46, %p47
      %s49 = ssub.s32 %s20, %s27
      %p50 = scmp.eq.s32.totalorder %s49, 0
      %s52 = sadd.s32 %s51, 1
      %s53 = scalar_select %p50, %s51, %s52
      %p56 = pneg %p50
      %p57 = scmp.eq.s32.totalorder %s20, 1
      %p58 = por %p56, %p57
      %p59 = scmp.ne.s32.totalorder %s51, %s54
      %p60 = scmp.eq.s32.totalorder %s20, 0
      %p61 = por %p59, %p60
      %p62 = scmp.ne.s32.totalorder %s51, %s54
      %p63 = scmp.eq.s32.totalorder %s25, 1
      %p64 = por %p62, %p63
      %p65 = scmp.ne.s32.totalorder %s54, %s55
      %p66 = scmp.eq.s32.totalorder %s25, 0
      %p67 = por %p65, %p66
      %p68 = scmp.ne.s32.totalorder %s54, %s55
      %p69 = scmp.eq.s32.totalorder %s26, 1
      %p70 = por %p68, %p69
      %p72 = scmp.ne.s32.totalorder %s55, %s71
      %p73 = scmp.eq.s32.totalorder %s26, 0
      %p74 = por %p72, %p73
      %s76 = sadd.s32 %s75, 1
      %p79 = scmp.eq.s32.totalorder %s20, 1
      %p80 = scmp.ne.s32.totalorder %s75, %s77
      %p81 = scmp.eq.s32.totalorder %s20, 0
      %p82 = por %p80, %p81
      %p83 = scmp.ne.s32.totalorder %s75, %s77
      %p84 = scmp.eq.s32.totalorder %s25, 1
      %p85 = por %p83, %p84
      %p86 = scmp.ne.s32.totalorder %s77, %s78
      %p87 = scmp.eq.s32.totalorder %s25, 0
      %p88 = por %p86, %p87
      %p89 = scmp.ne.s32.totalorder %s77, %s78
      %p90 = scmp.eq.s32.totalorder %s26, 1
      %p91 = por %p89, %p90
      %p93 = scmp.ne.s32.totalorder %s78, %s92
      %p94 = scmp.eq.s32.totalorder %s26, 0
      %p95 = por %p93, %p94
      %s97 = sadd.s32 %s96, 1
      %p100 = scmp.eq.s32.totalorder %s20, 1
      %p101 = scmp.ne.s32.totalorder %s96, %s98
      %p102 = scmp.eq.s32.totalorder %s20, 0
      %p103 = por %p101, %p102
      %p104 = scmp.ne.s32.totalorder %s96, %s98
      %p105 = scmp.eq.s32.totalorder %s25, 1
      %p106 = por %p104, %p105
      %p107 = scmp.ne.s32.totalorder %s98, %s99
      %p108 = scmp.eq.s32.totalorder %s25, 0
      %p109 = por %p107, %p108
      %p110 = scmp.ne.s32.totalorder %s98, %s99
      %p111 = scmp.eq.s32.totalorder %s26, 1
      %p112 = por %p110, %p111
      %p114 = scmp.ne.s32.totalorder %s99, %s113
      %p115 = scmp.eq.s32.totalorder %s26, 0
      %p116 = por %p114, %p115
      %s118 = sadd.s32 %s117, 1
      %p121 = scmp.eq.s32.totalorder %s20, 1
      %p122 = scmp.ne.s32.totalorder %s117, %s119
      %p123 = scmp.eq.s32.totalorder %s20, 0
      %p124 = por %p122, %p123
      %p125 = scmp.ne.s32.totalorder %s117, %s119
      %p126 = scmp.eq.s32.totalorder %s25, 1
      %p127 = por %p125, %p126
      %p128 = scmp.ne.s32.totalorder %s119, %s120
      %p129 = scmp.eq.s32.totalorder %s25, 0
      %p130 = por %p128, %p129
      %p131 = scmp.ne.s32.totalorder %s119, %s120
      %p132 = scmp.eq.s32.totalorder %s26, 1
      %p133 = por %p131, %p132
      %p135 = scmp.ne.s32.totalorder %s120, %s134
      %p136 = scmp.eq.s32.totalorder %s26, 0
      %p137 = por %p135, %p136
      %s139 = sadd.s32 %s138, 1
      %p142 = scmp.eq.s32.totalorder %s20, 1
      %p143 = scmp.ne.s32.totalorder %s138, %s140
      %p144 = scmp.eq.s32.totalorder %s20, 0
      %p145 = por %p143, %p144
      %p146 = scmp.ne.s32.totalorder %s138, %s140
      %p147 = scmp.eq.s32.totalorder %s25, 1
      %p148 = por %p146, %p147
      %p149 = scmp.ne.s32.totalorder %s140, %s141
      %p150 = scmp.eq.s32.totalorder %s25, 0
      %p151 = por %p149, %p150
      %p152 = scmp.ne.s32.totalorder %s140, %s141
      %p153 = scmp.eq.s32.totalorder %s26, 1
      %p154 = por %p152, %p153
      %p156 = scmp.ne.s32.totalorder %s141, %s155
      %p157 = scmp.eq.s32.totalorder %s26, 0
      %p158 = por %p156, %p157
      %s160 = sadd.s32 %s159, 1
      %p163 = scmp.eq.s32.totalorder %s20, 1
      %p164 = scmp.ne.s32.totalorder %s159, %s161
      %p165 = scmp.eq.s32.totalorder %s20, 0
      %p166 = por %p164, %p165
      %p167 = scmp.ne.s32.totalorder %s159, %s161
      %p168 = scmp.eq.s32.totalorder %s25, 1
      %p169 = por %p167, %p168
      %p170 = scmp.ne.s32.totalorder %s161, %s162
      %p171 = scmp.eq.s32.totalorder %s25, 0
      %p172 = por %p170, %p171
      %p173 = scmp.ne.s32.totalorder %s161, %s162
      %p174 = scmp.eq.s32.totalorder %s26, 1
      %p175 = por %p173, %p174
      %p177 = scmp.ne.s32.totalorder %s162, %s176
      %p178 = scmp.eq.s32.totalorder %s26, 0
      %p179 = por %p177, %p178
      %s181 = sadd.s32 %s180, 1
      %p184 = scmp.eq.s32.totalorder %s20, 1
      %p185 = scmp.ne.s32.totalorder %s180, %s182
      %p186 = scmp.eq.s32.totalorder %s20, 0
      %p187 = por %p185, %p186
      %p188 = scmp.ne.s32.totalorder %s180, %s182
      %p189 = scmp.eq.s32.totalorder %s25, 1
      %p190 = por %p188, %p189
      %p191 = scmp.ne.s32.totalorder %s182, %s183
      %p192 = scmp.eq.s32.totalorder %s25, 0
      %p193 = por %p191, %p192
      %p194 = scmp.ne.s32.totalorder %s182, %s183
      %p195 = scmp.eq.s32.totalorder %s26, 1
      %p196 = por %p194, %p195
      %p198 = scmp.ne.s32.totalorder %s183, %s197
      %p199 = scmp.eq.s32.totalorder %s26, 0
      %p200 = por %p198, %p199
      %s202 = sadd.s32 %s201, 1
      %p205 = scmp.eq.s32.totalorder %s20, 1
      %p206 = scmp.ne.s32.totalorder %s201, %s203
      %p207 = scmp.eq.s32.totalorder %s20, 0
      %p208 = por %p206, %p207
      %p209 = scmp.ne.s32.totalorder %s201, %s203
      %p210 = scmp.eq.s32.totalorder %s25, 1
      %p211 = por %p209, %p210
      %p212 = scmp.ne.s32.totalorder %s203, %s204
      %p213 = scmp.eq.s32.totalorder %s25, 0
      %p214 = por %p212, %p213
      %p215 = scmp.ne.s32.totalorder %s203, %s204
      %p216 = scmp.eq.s32.totalorder %s26, 1
      %p217 = por %p215, %p216
      %p219 = scmp.ne.s32.totalorder %s204, %s218
      %p220 = scmp.eq.s32.totalorder %s26, 0
      %p221 = por %p219, %p220
      %s222 = ssub.s32 %s20, %s27
      %p223 = scmp.eq.s32.totalorder %s222, 0
      %s225 = sadd.s32 %s224, 1
      %s226 = scalar_select %p223, %s224, %s225
      %p229 = pneg %p223
      %p230 = scmp.eq.s32.totalorder %s20, 1
      %p231 = por %p229, %p230
      %p232 = scmp.ne.s32.totalorder %s224, %s227
      %p233 = scmp.eq.s32.totalorder %s20, 0
      %p234 = por %p232, %p233
      %p235 = scmp.ne.s32.totalorder %s224, %s227
      %p236 = scmp.eq.s32.totalorder %s25, 1
      %p237 = por %p235, %p236
      %p238 = scmp.ne.s32.totalorder %s227, %s228
      %p239 = scmp.eq.s32.totalorder %s25, 0
      %p240 = por %p238, %p239
      %p241 = scmp.ne.s32.totalorder %s227, %s228
      %p242 = scmp.eq.s32.totalorder %s26, 1
      %p243 = por %p241, %p242
      %p245 = scmp.ne.s32.totalorder %s228, %s244
      %p246 = scmp.eq.s32.totalorder %s26, 0
      %p247 = por %p245, %p246
      %p248 = scmp.le.s32.totalorder 1, %s20
      %p249 = scmp.lt.s32.totalorder %s20, 3
      %p250 = pnand %p248, %p249
      %p251 = pneg %p250
      // Predicated region
      $region9: #{swin_gan_forward.1} parent=5 // pred_check
        _
      $region10: #{swin_gan_forward.1} parent=5 // pred_check_branch
        %253 = sbr.rel (%p250) target = $region12
      $region11: #{swin_gan_forward.1} parent=5 // pred_region
        %s254 = ssub.s32 %s20, 1
        // Predicated region
        $region13: #{swin_gan_forward.1} parent=11 // pred_check
          %p255 = pneg %p41
        $region14: #{swin_gan_forward.1} parent=11 // pred_check_branch
          %257 = sbr.rel (%p255) target = $region16
        $region15: #{swin_gan_forward.1} parent=11 // pred_region
          %259 = vsyncadd [#allocation5], 0
          %s261 = sshll.u32 %s0, 4
          %s262 = int_to_ptr.vmem [resolvable:$true] %s261
          %264 = dma.vmem_to_smem %s262, 16, [#allocation4], [#allocation5]
        $region16: #{swin_gan_forward.1} parent=11 // pred_fallthru
          _
        // Predicated region
        $region17: #{swin_gan_forward.1} parent=11 // pred_check
          %p265 = pneg %p88
        $region18: #{swin_gan_forward.1} parent=11 // pred_check_branch
          %267 = sbr.rel (%p265) target = $region20
        $region19: #{swin_gan_forward.1} parent=11 // pred_region
          _
        $region20: #{swin_gan_forward.1} parent=11 // pred_fallthru
          _
        // Predicated region
        $region21: #{swin_gan_forward.1} parent=11 // pred_check
          %p268 = pneg %p109
        $region22: #{swin_gan_forward.1} parent=11 // pred_check_branch
          %270 = sbr.rel (%p268) target = $region24
        $region23: #{swin_gan_forward.1} parent=11 // pred_region
          _
        $region24: #{swin_gan_forward.1} parent=11 // pred_fallthru
          _
        // Predicated region
        $region25: #{swin_gan_forward.1} parent=11 // pred_check
          %p271 = pneg %p130
        $region26: #{swin_gan_forward.1} parent=11 // pred_check_branch
          %273 = sbr.rel (%p271) target = $region28
        $region27: #{swin_gan_forward.1} parent=11 // pred_region
          _
        $region28: #{swin_gan_forward.1} parent=11 // pred_fallthru
          _
        // Predicated region
        $region29: #{swin_gan_forward.1} parent=11 // pred_check
          %p274 = pneg %p151
        $region30: #{swin_gan_forward.1} parent=11 // pred_check_branch
          %276 = sbr.rel (%p274) target = $region32
        $region31: #{swin_gan_forward.1} parent=11 // pred_region
          _
        $region32: #{swin_gan_forward.1} parent=11 // pred_fallthru
          _
        // Predicated region
        $region33: #{swin_gan_forward.1} parent=11 // pred_check
          %p277 = pneg %p172
        $region34: #{swin_gan_forward.1} parent=11 // pred_check_branch
          %279 = sbr.rel (%p277) target = $region36
        $region35: #{swin_gan_forward.1} parent=11 // pred_region
          _
        $region36: #{swin_gan_forward.1} parent=11 // pred_fallthru
          _
        // Predicated region
        $region37: #{swin_gan_forward.1} parent=11 // pred_check
          %p280 = pneg %p193
        $region38: #{swin_gan_forward.1} parent=11 // pred_check_branch
          %282 = sbr.rel (%p280) target = $region40
        $region39: #{swin_gan_forward.1} parent=11 // pred_region
          _
        $region40: #{swin_gan_forward.1} parent=11 // pred_fallthru
          _
        // Predicated region
        $region41: #{swin_gan_forward.1} parent=11 // pred_check
          %p283 = pneg %p214
        $region42: #{swin_gan_forward.1} parent=11 // pred_check_branch
          %285 = sbr.rel (%p283) target = $region44
        $region43: #{swin_gan_forward.1} parent=11 // pred_region
          _
        $region44: #{swin_gan_forward.1} parent=11 // pred_fallthru
          _
      $region12: #{swin_gan_forward.1} parent=5 // pred_fallthru
        _
      %p286 = scmp.lt.s32.totalorder %s20, 2
      // Predicated region
      $region45: #{swin_gan_forward.1} parent=5 // pred_check
        %p287 = pneg %p286
      $region46: #{swin_gan_forward.1} parent=5 // pred_check_branch
        %289 = sbr.rel (%p287) target = $region48
      $region47: #{swin_gan_forward.1} parent=5 // pred_region
        // Predicated region
        $region49: #{swin_gan_forward.1} parent=47 // pred_check
          %p290 = pneg %p61
        $region50: #{swin_gan_forward.1} parent=47 // pred_check_branch
          %292 = sbr.rel (%p290) target = $region52
        $region51: #{swin_gan_forward.1} parent=47 // pred_region
          %p293 = scmp.lt.s32.totalorder %s20, 1
          %s294 = scalar_select %p293, %s20, 1
          %s295 = smul.addr %s294, 16
          %s296 = scalar_lea.vmem %s1, %s295
        $region52: #{swin_gan_forward.1} parent=47 // pred_fallthru
          _
      $region48: #{swin_gan_forward.1} parent=5 // pred_fallthru
        _
      %p297 = scmp.le.s32.totalorder 1, %s20
      %p298 = scmp.lt.s32.totalorder %s20, 3
      %p299 = pnand %p297, %p298
      %p300 = pneg %p299
      // Predicated region
      $region53: #{swin_gan_forward.1} parent=5 // pred_check
        _
      $region54: #{swin_gan_forward.1} parent=5 // pred_check_branch
        %302 = sbr.rel (%p299) target = $region56
      $region55: #{swin_gan_forward.1} parent=5 // pred_region
        %s303 = ssub.s32 %s20, 1
        // Predicated region
        $region57: #{swin_gan_forward.1} parent=55 // pred_check
          %p304 = pneg %p41
        $region58: #{swin_gan_forward.1} parent=55 // pred_check_branch
          %306 = sbr.rel (%p304) target = $region60
        $region59: #{swin_gan_forward.1} parent=55 // pred_region
          %308 = dma.done [#allocation5], 16
        $region60: #{swin_gan_forward.1} parent=55 // pred_fallthru
          _
        %309 = sfence
        %p310 = pneg %p41
        %p311 = pneg %p38
        %p312 = scmp.lt.s32.totalorder %s25, 1
        %s313 = scalar_select %p312, %s25, 1
        %s314 = smul.addr %s313, 16
        %s315 = scalar_lea.vmem %s1, %s314
        %p316 = pneg %p67
        %p317 = pneg %p64
        %p318 = pneg %p88
        %p319 = pneg %p85
        %p320 = pneg %p109
        %p321 = pneg %p106
        %p322 = pneg %p130
        %p323 = pneg %p127
        %p324 = pneg %p151
        %p325 = pneg %p148
        %p326 = pneg %p172
        %p327 = pneg %p169
        %p328 = pneg %p193
        %p329 = pneg %p190
        %p330 = pneg %p214
        %p331 = pneg %p211
        %p332 = pneg %p240
        %p333 = pneg %p237
        %p334 = scmp.lt.s32.totalorder %s25, 1
        %s335 = scalar_select %p334, %s25, 1
        %s336 = smul.addr %s335, 16
        %s337 = scalar_lea.vmem %s9, %s336
        %p338 = scmp.lt.s32.totalorder %s25, 1
        %s339 = scalar_select %p338, %s25, 1
        %s340 = smul.addr %s339, 16
        %s341 = scalar_lea.vmem %s1, %s340
        %p342 = scmp.lt.s32.totalorder %s25, 1
        %s343 = scalar_select %p342, %s25, 1
        %s344 = smul.addr %s343, 16
        %s345 = scalar_lea.vmem %s9, %s344
        %s346 = sld [smem:[#allocation4 + %s25]]
        %v347 = vld [vmem:[%s2] sm:$0xff]
        %v348 = vld [vmem:[%s2 + $0x8] sm:$0xff]
        %v349 = vld [vmem:[%s2 + $0x10] sm:$0xff]
        %v350 = vld [vmem:[%s2 + $0x18] sm:$0xff]
        %v351 = vld [vmem:[%s2 + $0x20] sm:$0xff]
        %v352 = vld [vmem:[%s2 + $0x28] sm:$0xff]
        %v353 = vld [vmem:[%s2 + $0x30] sm:$0xff]
        %v354 = vld [vmem:[%s2 + $0x38] sm:$0xff]
        %v355 = vld [vmem:[%s2 + $0x40] sm:$0xff]
        %v356 = vld [vmem:[%s2 + $0x48] sm:$0xff]
        %v357 = vld [vmem:[%s2 + $0x50] sm:$0xff]
        %v358 = vld [vmem:[%s2 + $0x58] sm:$0xff]
        %v359 = vld [vmem:[%s2 + $0x60] sm:$0xff]
        %v360 = vld [vmem:[%s2 + $0x68] sm:$0xff]
        %v361 = vld [vmem:[%s2 + $0x70] sm:$0xff]
        %v362 = vld [vmem:[%s2 + $0x78] sm:$0xff]
        %v363 = vstv %s346
        %v364 = vmul.f32 %v363, %v347
        %v365 = vmul.f32 %v363, %v348
        %v366 = vmul.f32 %v363, %v349
        %v367 = vmul.f32 %v363, %v350
        %v368 = vmul.f32 %v363, %v351
        %v369 = vmul.f32 %v363, %v352
        %v370 = vmul.f32 %v363, %v353
        %v371 = vmul.f32 %v363, %v354
        %v372 = vmul.f32 %v363, %v355
        %v373 = vmul.f32 %v363, %v356
        %v374 = vmul.f32 %v363, %v357
        %v375 = vmul.f32 %v363, %v358
        %v376 = vmul.f32 %v363, %v359
        %v377 = vmul.f32 %v363, %v360
        %v378 = vmul.f32 %v363, %v361
        %v379 = vmul.f32 %v363, %v362
        %v380 = vld [vmem:[%s3] sm:$0xff]
        %382 = vset.pattern.permute.xlu0 0
        %383 = vperm.xlu0 %382, %v380
        %v384 = vpop.permute.xlu0 %383
        %v386 = vadd.f32 %v364, %v384
        %v387 = vadd.f32 %v365, %v384
        %v388 = vadd.f32 %v366, %v384
        %v389 = vadd.f32 %v367, %v384
        %v390 = vadd.f32 %v368, %v384
        %v391 = vadd.f32 %v369, %v384
        %v392 = vadd.f32 %v370, %v384
        %v393 = vadd.f32 %v371, %v384
        %v394 = vadd.f32 %v372, %v384
        %v395 = vadd.f32 %v373, %v384
        %v396 = vadd.f32 %v374, %v384
        %v397 = vadd.f32 %v375, %v384
        %v398 = vadd.f32 %v376, %v384
        %v399 = vadd.f32 %v377, %v384
        %v400 = vadd.f32 %v378, %v384
        %v401 = vadd.f32 %v379, %v384
        %vm402 = vcmp.gt.f32.partialorder %v386, 0.0
        %vm403 = vcmp.gt.f32.partialorder %v387, 0.0
        %vm404 = vcmp.gt.f32.partialorder %v388, 0.0
        %vm405 = vcmp.gt.f32.partialorder %v389, 0.0
        %vm406 = vcmp.gt.f32.partialorder %v390, 0.0
        %vm407 = vcmp.gt.f32.partialorder %v391, 0.0
        %vm408 = vcmp.gt.f32.partialorder %v392, 0.0
        %vm409 = vcmp.gt.f32.partialorder %v393, 0.0
        %vm410 = vcmp.gt.f32.partialorder %v394, 0.0
        %vm411 = vcmp.gt.f32.partialorder %v395, 0.0
        %vm412 = vcmp.gt.f32.partialorder %v396, 0.0
        %vm413 = vcmp.gt.f32.partialorder %v397, 0.0
        %vm414 = vcmp.gt.f32.partialorder %v398, 0.0
        %vm415 = vcmp.gt.f32.partialorder %v399, 0.0
        %vm416 = vcmp.gt.f32.partialorder %v400, 0.0
        %vm417 = vcmp.gt.f32.partialorder %v401, 0.0
        %v418 = vmul.f32 %v386, 0.2
        %v419 = vmul.f32 %v387, 0.2
        %v420 = vmul.f32 %v388, 0.2
        %v421 = vmul.f32 %v389, 0.2
        %v422 = vmul.f32 %v390, 0.2
        %v423 = vmul.f32 %v391, 0.2
        %v424 = vmul.f32 %v392, 0.2
        %v425 = vmul.f32 %v393, 0.2
        %v426 = vmul.f32 %v394, 0.2
        %v427 = vmul.f32 %v395, 0.2
        %v428 = vmul.f32 %v396, 0.2
        %v429 = vmul.f32 %v397, 0.2
        %v430 = vmul.f32 %v398, 0.2
        %v431 = vmul.f32 %v399, 0.2
        %v432 = vmul.f32 %v400, 0.2
        %v433 = vmul.f32 %v401, 0.2
        %v434 = vsel %vm402, %v386, %v418
        %v435 = vsel %vm403, %v387, %v419
        %v436 = vsel %vm404, %v388, %v420
        %v437 = vsel %vm405, %v389, %v421
        %v438 = vsel %vm406, %v390, %v422
        %v439 = vsel %vm407, %v391, %v423
        %v440 = vsel %vm408, %v392, %v424
        %v441 = vsel %vm409, %v393, %v425
        %v442 = vsel %vm410, %v394, %v426
        %v443 = vsel %vm411, %v395, %v427
        %v444 = vsel %vm412, %v396, %v428
        %v445 = vsel %vm413, %v397, %v429
        %v446 = vsel %vm414, %v398, %v430
        %v447 = vsel %vm415, %v399, %v431
        %v448 = vsel %vm416, %v400, %v432
        %v449 = vsel %vm417, %v401, %v433
        %v450 = vld [vmem:[%s4] sm:$0xff]
        %v451 = vld [vmem:[%s4 + $0x8] sm:$0xff]
        %v452 = vld [vmem:[%s4 + $0x10] sm:$0xff]
        %v453 = vld [vmem:[%s4 + $0x18] sm:$0x7]
        %vm454 = vcmask 64512
        %v456 = vsel %vm454, %v450, 0
        %v459 = vsel %vm454, %v451, 0
        %v462 = vsel %vm454, %v452, 0
        %v465 = vsel %vm454, %v453, 0
        %467 = vmatpush.msra.mxu0 0.0
        %468 = vmatpush.msra.mxu0 0.0
        %469 = vmatpush.msra.mxu0 0.0
        %470 = vmatpush.msra.mxu0 0.0
        %471 = vmatpush.msra.mxu0 0.0
        %472 = vmatpush.msra.mxu0 0.0
        %473 = vmatpush.msra.mxu0 0.0
        %474 = vmatpush.msra.mxu0 0.0
        %475 = vmatpush.msra.mxu0 0.0
        %476 = vmatpush.msra.mxu0 0.0
        %477 = vmatpush.msra.mxu0 0.0
        %478 = vmatpush.msra.mxu0 0.0
        %479 = vmatpush.msra.mxu0 0.0
        %480 = vmatpush.msra.mxu0 0.0
        %481 = vmatpush.msra.mxu0 0.0
        %482 = vmatpush.msra.mxu0 %v434
        %483 = vmatmul.f32.gmra.mxu0 %v456
        %v484 = vpop.f32.mrf.mxu0
        %v485 = vadd.f32 0.0, %v484
        %486 = vmatmul.f32.gmra.mxu0 %v459
        %v487 = vpop.f32.mrf.mxu0
        %v488 = vadd.f32 0.0, %v487
        %489 = vmatmul.f32.gmra.mxu0 %v462
        %v490 = vpop.f32.mrf.mxu0
        %v491 = vadd.f32 0.0, %v490
        %492 = vmatmul.f32.gmra.mxu0 %v465
        %v493 = vpop.f32.mrf.mxu0
        %v494 = vadd.f32 0.0, %v493
        %495 = vdwg.mxu0
        %496 = vmatpush.msra.mxu0 0.0
        %497 = vmatpush.msra.mxu0 0.0
        %498 = vmatpush.msra.mxu0 0.0
        %499 = vmatpush.msra.mxu0 0.0
        %500 = vmatpush.msra.mxu0 0.0
        %501 = vmatpush.msra.mxu0 0.0
        %502 = vmatpush.msra.mxu0 0.0
        %503 = vmatpush.msra.mxu0 0.0
        %504 = vmatpush.msra.mxu0 0.0
        %505 = vmatpush.msra.mxu0 0.0
        %506 = vmatpush.msra.mxu0 0.0
        %507 = vmatpush.msra.mxu0 0.0
        %508 = vmatpush.msra.mxu0 0.0
        %509 = vmatpush.msra.mxu0 0.0
        %510 = vmatpush.msra.mxu0 0.0
        %511 = vmatpush.msra.mxu0 %v435
        %512 = vmatmul.f32.gmra.mxu0 %v456
        %v513 = vpop.f32.mrf.mxu0
        %v514 = vadd.f32 0.0, %v513
        %515 = vmatmul.f32.gmra.mxu0 %v459
        %v516 = vpop.f32.mrf.mxu0
        %v517 = vadd.f32 0.0, %v516
        %518 = vmatmul.f32.gmra.mxu0 %v462
        %v519 = vpop.f32.mrf.mxu0
        %v520 = vadd.f32 0.0, %v519
        %521 = vmatmul.f32.gmra.mxu0 %v465
        %v522 = vpop.f32.mrf.mxu0
        %v523 = vadd.f32 0.0, %v522
        %524 = vdwg.mxu0
        %525 = vmatpush.msra.mxu0 0.0
        %526 = vmatpush.msra.mxu0 0.0
        %527 = vmatpush.msra.mxu0 0.0
        %528 = vmatpush.msra.mxu0 0.0
        %529 = vmatpush.msra.mxu0 0.0
        %530 = vmatpush.msra.mxu0 0.0
        %531 = vmatpush.msra.mxu0 0.0
        %532 = vmatpush.msra.mxu0 0.0
        %533 = vmatpush.msra.mxu0 0.0
        %534 = vmatpush.msra.mxu0 0.0
        %535 = vmatpush.msra.mxu0 0.0
        %536 = vmatpush.msra.mxu0 0.0
        %537 = vmatpush.msra.mxu0 0.0
        %538 = vmatpush.msra.mxu0 0.0
        %539 = vmatpush.msra.mxu0 0.0
        %540 = vmatpush.msra.mxu0 %v436
        %541 = vmatmul.f32.gmra.mxu0 %v456
        %v542 = vpop.f32.mrf.mxu0
        %v543 = vadd.f32 0.0, %v542
        %544 = vmatmul.f32.gmra.mxu0 %v459
        %v545 = vpop.f32.mrf.mxu0
        %v546 = vadd.f32 0.0, %v545
        %547 = vmatmul.f32.gmra.mxu0 %v462
        %v548 = vpop.f32.mrf.mxu0
        %v549 = vadd.f32 0.0, %v548
        %550 = vmatmul.f32.gmra.mxu0 %v465
        %v551 = vpop.f32.mrf.mxu0
        %v552 = vadd.f32 0.0, %v551
        %553 = vdwg.mxu0
        %554 = vmatpush.msra.mxu0 0.0
        %555 = vmatpush.msra.mxu0 0.0
        %556 = vmatpush.msra.mxu0 0.0
        %557 = vmatpush.msra.mxu0 0.0
        %558 = vmatpush.msra.mxu0 0.0
        %559 = vmatpush.msra.mxu0 0.0
        %560 = vmatpush.msra.mxu0 0.0
        %561 = vmatpush.msra.mxu0 0.0
        %562 = vmatpush.msra.mxu0 0.0
        %563 = vmatpush.msra.mxu0 0.0
        %564 = vmatpush.msra.mxu0 0.0
        %565 = vmatpush.msra.mxu0 0.0
        %566 = vmatpush.msra.mxu0 0.0
        %567 = vmatpush.msra.mxu0 0.0
        %568 = vmatpush.msra.mxu0 0.0
        %569 = vmatpush.msra.mxu0 %v437
        %570 = vmatmul.f32.gmra.mxu0 %v456
        %v571 = vpop.f32.mrf.mxu0
        %v572 = vadd.f32 0.0, %v571
        %573 = vmatmul.f32.gmra.mxu0 %v459
        %v574 = vpop.f32.mrf.mxu0
        %v575 = vadd.f32 0.0, %v574
        %576 = vmatmul.f32.gmra.mxu0 %v462
        %v577 = vpop.f32.mrf.mxu0
        %v578 = vadd.f32 0.0, %v577
        %579 = vmatmul.f32.gmra.mxu0 %v465
        %v580 = vpop.f32.mrf.mxu0
        %v581 = vadd.f32 0.0, %v580
        %582 = vdwg.mxu0
        %583 = vmatpush.msra.mxu0 0.0
        %584 = vmatpush.msra.mxu0 0.0
        %585 = vmatpush.msra.mxu0 0.0
        %586 = vmatpush.msra.mxu0 0.0
        %587 = vmatpush.msra.mxu0 0.0
        %588 = vmatpush.msra.mxu0 0.0
        %589 = vmatpush.msra.mxu0 0.0
        %590 = vmatpush.msra.mxu0 0.0
        %591 = vmatpush.msra.mxu0 0.0
        %592 = vmatpush.msra.mxu0 0.0
        %593 = vmatpush.msra.mxu0 0.0
        %594 = vmatpush.msra.mxu0 0.0
        %595 = vmatpush.msra.mxu0 0.0
        %596 = vmatpush.msra.mxu0 0.0
        %597 = vmatpush.msra.mxu0 0.0
        %598 = vmatpush.msra.mxu0 %v438
        %599 = vmatmul.f32.gmra.mxu0 %v456
        %v600 = vpop.f32.mrf.mxu0
        %v601 = vadd.f32 0.0, %v600
        %602 = vmatmul.f32.gmra.mxu0 %v459
        %v603 = vpop.f32.mrf.mxu0
        %v604 = vadd.f32 0.0, %v603
        %605 = vmatmul.f32.gmra.mxu0 %v462
        %v606 = vpop.f32.mrf.mxu0
        %v607 = vadd.f32 0.0, %v606
        %608 = vmatmul.f32.gmra.mxu0 %v465
        %v609 = vpop.f32.mrf.mxu0
        %v610 = vadd.f32 0.0, %v609
        %611 = vdwg.mxu0
        %612 = vmatpush.msra.mxu0 0.0
        %613 = vmatpush.msra.mxu0 0.0
        %614 = vmatpush.msra.mxu0 0.0
        %615 = vmatpush.msra.mxu0 0.0
        %616 = vmatpush.msra.mxu0 0.0
        %617 = vmatpush.msra.mxu0 0.0
        %618 = vmatpush.msra.mxu0 0.0
        %619 = vmatpush.msra.mxu0 0.0
        %620 = vmatpush.msra.mxu0 0.0
        %621 = vmatpush.msra.mxu0 0.0
        %622 = vmatpush.msra.mxu0 0.0
        %623 = vmatpush.msra.mxu0 0.0
        %624 = vmatpush.msra.mxu0 0.0
        %625 = vmatpush.msra.mxu0 0.0
        %626 = vmatpush.msra.mxu0 0.0
        %627 = vmatpush.msra.mxu0 %v439
        %628 = vmatmul.f32.gmra.mxu0 %v456
        %v629 = vpop.f32.mrf.mxu0
        %v630 = vadd.f32 0.0, %v629
        %631 = vmatmul.f32.gmra.mxu0 %v459
        %v632 = vpop.f32.mrf.mxu0
        %v633 = vadd.f32 0.0, %v632
        %634 = vmatmul.f32.gmra.mxu0 %v462
        %v635 = vpop.f32.mrf.mxu0
        %v636 = vadd.f32 0.0, %v635
        %637 = vmatmul.f32.gmra.mxu0 %v465
        %v638 = vpop.f32.mrf.mxu0
        %v639 = vadd.f32 0.0, %v638
        %640 = vdwg.mxu0
        %641 = vmatpush.msra.mxu0 0.0
        %642 = vmatpush.msra.mxu0 0.0
        %643 = vmatpush.msra.mxu0 0.0
        %644 = vmatpush.msra.mxu0 0.0
        %645 = vmatpush.msra.mxu0 0.0
        %646 = vmatpush.msra.mxu0 0.0
        %647 = vmatpush.msra.mxu0 0.0
        %648 = vmatpush.msra.mxu0 0.0
        %649 = vmatpush.msra.mxu0 0.0
        %650 = vmatpush.msra.mxu0 0.0
        %651 = vmatpush.msra.mxu0 0.0
        %652 = vmatpush.msra.mxu0 0.0
        %653 = vmatpush.msra.mxu0 0.0
        %654 = vmatpush.msra.mxu0 0.0
        %655 = vmatpush.msra.mxu0 0.0
        %656 = vmatpush.msra.mxu0 %v440
        %657 = vmatmul.f32.gmra.mxu0 %v456
        %v658 = vpop.f32.mrf.mxu0
        %v659 = vadd.f32 0.0, %v658
        %660 = vmatmul.f32.gmra.mxu0 %v459
        %v661 = vpop.f32.mrf.mxu0
        %v662 = vadd.f32 0.0, %v661
        %663 = vmatmul.f32.gmra.mxu0 %v462
        %v664 = vpop.f32.mrf.mxu0
        %v665 = vadd.f32 0.0, %v664
        %666 = vmatmul.f32.gmra.mxu0 %v465
        %v667 = vpop.f32.mrf.mxu0
        %v668 = vadd.f32 0.0, %v667
        %669 = vdwg.mxu0
        %670 = vmatpush.msra.mxu0 0.0
        %671 = vmatpush.msra.mxu0 0.0
        %672 = vmatpush.msra.mxu0 0.0
        %673 = vmatpush.msra.mxu0 0.0
        %674 = vmatpush.msra.mxu0 0.0
        %675 = vmatpush.msra.mxu0 0.0
        %676 = vmatpush.msra.mxu0 0.0
        %677 = vmatpush.msra.mxu0 0.0
        %678 = vmatpush.msra.mxu0 0.0
        %679 = vmatpush.msra.mxu0 0.0
        %680 = vmatpush.msra.mxu0 0.0
        %681 = vmatpush.msra.mxu0 0.0
        %682 = vmatpush.msra.mxu0 0.0
        %683 = vmatpush.msra.mxu0 0.0
        %684 = vmatpush.msra.mxu0 0.0
        %685 = vmatpush.msra.mxu0 %v441
        %686 = vmatmul.f32.gmra.mxu0 %v456
        %v687 = vpop.f32.mrf.mxu0
        %v688 = vadd.f32 0.0, %v687
        %689 = vmatmul.f32.gmra.mxu0 %v459
        %v690 = vpop.f32.mrf.mxu0
        %v691 = vadd.f32 0.0, %v690
        %692 = vmatmul.f32.gmra.mxu0 %v462
        %v693 = vpop.f32.mrf.mxu0
        %v694 = vadd.f32 0.0, %v693
        %695 = vmatmul.f32.gmra.mxu0 %v465
        %v696 = vpop.f32.mrf.mxu0
        %v697 = vadd.f32 0.0, %v696
        %698 = vdwg.mxu0
        %699 = vmatpush.msra.mxu0 0.0
        %700 = vmatpush.msra.mxu0 0.0
        %701 = vmatpush.msra.mxu0 0.0
        %702 = vmatpush.msra.mxu0 0.0
        %703 = vmatpush.msra.mxu0 0.0
        %704 = vmatpush.msra.mxu0 0.0
        %705 = vmatpush.msra.mxu0 0.0
        %706 = vmatpush.msra.mxu0 0.0
        %707 = vmatpush.msra.mxu0 0.0
        %708 = vmatpush.msra.mxu0 0.0
        %709 = vmatpush.msra.mxu0 0.0
        %710 = vmatpush.msra.mxu0 0.0
        %711 = vmatpush.msra.mxu0 0.0
        %712 = vmatpush.msra.mxu0 0.0
        %713 = vmatpush.msra.mxu0 0.0
        %714 = vmatpush.msra.mxu0 %v442
        %715 = vmatmul.f32.gmra.mxu0 %v456
        %v716 = vpop.f32.mrf.mxu0
        %v717 = vadd.f32 0.0, %v716
        %718 = vmatmul.f32.gmra.mxu0 %v459
        %v719 = vpop.f32.mrf.mxu0
        %v720 = vadd.f32 0.0, %v719
        %721 = vmatmul.f32.gmra.mxu0 %v462
        %v722 = vpop.f32.mrf.mxu0
        %v723 = vadd.f32 0.0, %v722
        %724 = vmatmul.f32.gmra.mxu0 %v465
        %v725 = vpop.f32.mrf.mxu0
        %v726 = vadd.f32 0.0, %v725
        %727 = vdwg.mxu0
        %728 = vmatpush.msra.mxu0 0.0
        %729 = vmatpush.msra.mxu0 0.0
        %730 = vmatpush.msra.mxu0 0.0
        %731 = vmatpush.msra.mxu0 0.0
        %732 = vmatpush.msra.mxu0 0.0
        %733 = vmatpush.msra.mxu0 0.0
        %734 = vmatpush.msra.mxu0 0.0
        %735 = vmatpush.msra.mxu0 0.0
        %736 = vmatpush.msra.mxu0 0.0
        %737 = vmatpush.msra.mxu0 0.0
        %738 = vmatpush.msra.mxu0 0.0
        %739 = vmatpush.msra.mxu0 0.0
        %740 = vmatpush.msra.mxu0 0.0
        %741 = vmatpush.msra.mxu0 0.0
        %742 = vmatpush.msra.mxu0 0.0
        %743 = vmatpush.msra.mxu0 %v443
        %744 = vmatmul.f32.gmra.mxu0 %v456
        %v745 = vpop.f32.mrf.mxu0
        %v746 = vadd.f32 0.0, %v745
        %747 = vmatmul.f32.gmra.mxu0 %v459
        %v748 = vpop.f32.mrf.mxu0
        %v749 = vadd.f32 0.0, %v748
        %750 = vmatmul.f32.gmra.mxu0 %v462
        %v751 = vpop.f32.mrf.mxu0
        %v752 = vadd.f32 0.0, %v751
        %753 = vmatmul.f32.gmra.mxu0 %v465
        %v754 = vpop.f32.mrf.mxu0
        %v755 = vadd.f32 0.0, %v754
        %756 = vdwg.mxu0
        %757 = vmatpush.msra.mxu0 0.0
        %758 = vmatpush.msra.mxu0 0.0
        %759 = vmatpush.msra.mxu0 0.0
        %760 = vmatpush.msra.mxu0 0.0
        %761 = vmatpush.msra.mxu0 0.0
        %762 = vmatpush.msra.mxu0 0.0
        %763 = vmatpush.msra.mxu0 0.0
        %764 = vmatpush.msra.mxu0 0.0
        %765 = vmatpush.msra.mxu0 0.0
        %766 = vmatpush.msra.mxu0 0.0
        %767 = vmatpush.msra.mxu0 0.0
        %768 = vmatpush.msra.mxu0 0.0
        %769 = vmatpush.msra.mxu0 0.0
        %770 = vmatpush.msra.mxu0 0.0
        %771 = vmatpush.msra.mxu0 0.0
        %772 = vmatpush.msra.mxu0 %v444
        %773 = vmatmul.f32.gmra.mxu0 %v456
        %v774 = vpop.f32.mrf.mxu0
        %v775 = vadd.f32 0.0, %v774
        %776 = vmatmul.f32.gmra.mxu0 %v459
        %v777 = vpop.f32.mrf.mxu0
        %v778 = vadd.f32 0.0, %v777
        %779 = vmatmul.f32.gmra.mxu0 %v462
        %v780 = vpop.f32.mrf.mxu0
        %v781 = vadd.f32 0.0, %v780
        %782 = vmatmul.f32.gmra.mxu0 %v465
        %v783 = vpop.f32.mrf.mxu0
        %v784 = vadd.f32 0.0, %v783
        %785 = vdwg.mxu0
        %786 = vmatpush.msra.mxu0 0.0
        %787 = vmatpush.msra.mxu0 0.0
        %788 = vmatpush.msra.mxu0 0.0
        %789 = vmatpush.msra.mxu0 0.0
        %790 = vmatpush.msra.mxu0 0.0
        %791 = vmatpush.msra.mxu0 0.0
        %792 = vmatpush.msra.mxu0 0.0
        %793 = vmatpush.msra.mxu0 0.0
        %794 = vmatpush.msra.mxu0 0.0
        %795 = vmatpush.msra.mxu0 0.0
        %796 = vmatpush.msra.mxu0 0.0
        %797 = vmatpush.msra.mxu0 0.0
        %798 = vmatpush.msra.mxu0 0.0
        %799 = vmatpush.msra.mxu0 0.0
        %800 = vmatpush.msra.mxu0 0.0
        %801 = vmatpush.msra.mxu0 %v445
        %802 = vmatmul.f32.gmra.mxu0 %v456
        %v803 = vpop.f32.mrf.mxu0
        %v804 = vadd.f32 0.0, %v803
        %805 = vmatmul.f32.gmra.mxu0 %v459
        %v806 = vpop.f32.mrf.mxu0
        %v807 = vadd.f32 0.0, %v806
        %808 = vmatmul.f32.gmra.mxu0 %v462
        %v809 = vpop.f32.mrf.mxu0
        %v810 = vadd.f32 0.0, %v809
        %811 = vmatmul.f32.gmra.mxu0 %v465
        %v812 = vpop.f32.mrf.mxu0
        %v813 = vadd.f32 0.0, %v812
        %814 = vdwg.mxu0
        %815 = vmatpush.msra.mxu0 0.0
        %816 = vmatpush.msra.mxu0 0.0
        %817 = vmatpush.msra.mxu0 0.0
        %818 = vmatpush.msra.mxu0 0.0
        %819 = vmatpush.msra.mxu0 0.0
        %820 = vmatpush.msra.mxu0 0.0
        %821 = vmatpush.msra.mxu0 0.0
        %822 = vmatpush.msra.mxu0 0.0
        %823 = vmatpush.msra.mxu0 0.0
        %824 = vmatpush.msra.mxu0 0.0
        %825 = vmatpush.msra.mxu0 0.0
        %826 = vmatpush.msra.mxu0 0.0
        %827 = vmatpush.msra.mxu0 0.0
        %828 = vmatpush.msra.mxu0 0.0
        %829 = vmatpush.msra.mxu0 0.0
        %830 = vmatpush.msra.mxu0 %v446
        %831 = vmatmul.f32.gmra.mxu0 %v456
        %v832 = vpop.f32.mrf.mxu0
        %v833 = vadd.f32 0.0, %v832
        %834 = vmatmul.f32.gmra.mxu0 %v459
        %v835 = vpop.f32.mrf.mxu0
        %v836 = vadd.f32 0.0, %v835
        %837 = vmatmul.f32.gmra.mxu0 %v462
        %v838 = vpop.f32.mrf.mxu0
        %v839 = vadd.f32 0.0, %v838
        %840 = vmatmul.f32.gmra.mxu0 %v465
        %v841 = vpop.f32.mrf.mxu0
        %v842 = vadd.f32 0.0, %v841
        %843 = vdwg.mxu0
        %844 = vmatpush.msra.mxu0 0.0
        %845 = vmatpush.msra.mxu0 0.0
        %846 = vmatpush.msra.mxu0 0.0
        %847 = vmatpush.msra.mxu0 0.0
        %848 = vmatpush.msra.mxu0 0.0
        %849 = vmatpush.msra.mxu0 0.0
        %850 = vmatpush.msra.mxu0 0.0
        %851 = vmatpush.msra.mxu0 0.0
        %852 = vmatpush.msra.mxu0 0.0
        %853 = vmatpush.msra.mxu0 0.0
        %854 = vmatpush.msra.mxu0 0.0
        %855 = vmatpush.msra.mxu0 0.0
        %856 = vmatpush.msra.mxu0 0.0
        %857 = vmatpush.msra.mxu0 0.0
        %858 = vmatpush.msra.mxu0 0.0
        %859 = vmatpush.msra.mxu0 %v447
        %860 = vmatmul.f32.gmra.mxu0 %v456
        %v861 = vpop.f32.mrf.mxu0
        %v862 = vadd.f32 0.0, %v861
        %863 = vmatmul.f32.gmra.mxu0 %v459
        %v864 = vpop.f32.mrf.mxu0
        %v865 = vadd.f32 0.0, %v864
        %866 = vmatmul.f32.gmra.mxu0 %v462
        %v867 = vpop.f32.mrf.mxu0
        %v868 = vadd.f32 0.0, %v867
        %869 = vmatmul.f32.gmra.mxu0 %v465
        %v870 = vpop.f32.mrf.mxu0
        %v871 = vadd.f32 0.0, %v870
        %872 = vdwg.mxu0
        %873 = vmatpush.msra.mxu0 0.0
        %874 = vmatpush.msra.mxu0 0.0
        %875 = vmatpush.msra.mxu0 0.0
        %876 = vmatpush.msra.mxu0 0.0
        %877 = vmatpush.msra.mxu0 0.0
        %878 = vmatpush.msra.mxu0 0.0
        %879 = vmatpush.msra.mxu0 0.0
        %880 = vmatpush.msra.mxu0 0.0
        %881 = vmatpush.msra.mxu0 0.0
        %882 = vmatpush.msra.mxu0 0.0
        %883 = vmatpush.msra.mxu0 0.0
        %884 = vmatpush.msra.mxu0 0.0
        %885 = vmatpush.msra.mxu0 0.0
        %886 = vmatpush.msra.mxu0 0.0
        %887 = vmatpush.msra.mxu0 0.0
        %888 = vmatpush.msra.mxu0 %v448
        %889 = vmatmul.f32.gmra.mxu0 %v456
        %v890 = vpop.f32.mrf.mxu0
        %v891 = vadd.f32 0.0, %v890
        %892 = vmatmul.f32.gmra.mxu0 %v459
        %v893 = vpop.f32.mrf.mxu0
        %v894 = vadd.f32 0.0, %v893
        %895 = vmatmul.f32.gmra.mxu0 %v462
        %v896 = vpop.f32.mrf.mxu0
        %v897 = vadd.f32 0.0, %v896
        %898 = vmatmul.f32.gmra.mxu0 %v465
        %v899 = vpop.f32.mrf.mxu0
        %v900 = vadd.f32 0.0, %v899
        %901 = vdwg.mxu0
        %902 = vmatpush.msra.mxu0 0.0
        %903 = vmatpush.msra.mxu0 0.0
        %904 = vmatpush.msra.mxu0 0.0
        %905 = vmatpush.msra.mxu0 0.0
        %906 = vmatpush.msra.mxu0 0.0
        %907 = vmatpush.msra.mxu0 0.0
        %908 = vmatpush.msra.mxu0 0.0
        %909 = vmatpush.msra.mxu0 0.0
        %910 = vmatpush.msra.mxu0 0.0
        %911 = vmatpush.msra.mxu0 0.0
        %912 = vmatpush.msra.mxu0 0.0
        %913 = vmatpush.msra.mxu0 0.0
        %914 = vmatpush.msra.mxu0 0.0
        %915 = vmatpush.msra.mxu0 0.0
        %916 = vmatpush.msra.mxu0 0.0
        %917 = vmatpush.msra.mxu0 %v449
        %918 = vmatmul.f32.gmra.mxu0 %v456
        %v919 = vpop.f32.mrf.mxu0
        %v920 = vadd.f32 0.0, %v919
        %921 = vmatmul.f32.gmra.mxu0 %v459
        %v922 = vpop.f32.mrf.mxu0
        %v923 = vadd.f32 0.0, %v922
        %924 = vmatmul.f32.gmra.mxu0 %v462
        %v925 = vpop.f32.mrf.mxu0
        %v926 = vadd.f32 0.0, %v925
        %927 = vmatmul.f32.gmra.mxu0 %v465
        %v928 = vpop.f32.mrf.mxu0
        %v929 = vadd.f32 0.0, %v928
        %930 = vdwg.mxu0
        %931 = vrot.lane.b32.xlu0 %v485, 17
        %v932 = vpop.permute.xlu0 %931
        %933 = vrot.lane.b32.xlu0 %v514, 17
        %v934 = vpop.permute.xlu0 %933
        %935 = vrot.lane.b32.xlu0 %v543, 17
        %v936 = vpop.permute.xlu0 %935
        %937 = vrot.lane.b32.xlu0 %v572, 17
        %v938 = vpop.permute.xlu0 %937
        %939 = vrot.lane.b32.xlu0 %v601, 17
        %v940 = vpop.permute.xlu0 %939
        %941 = vrot.lane.b32.xlu0 %v630, 17
        %v942 = vpop.permute.xlu0 %941
        %943 = vrot.lane.b32.xlu0 %v659, 17
        %v944 = vpop.permute.xlu0 %943
        %945 = vrot.lane.b32.xlu0 %v688, 17
        %v946 = vpop.permute.xlu0 %945
        %947 = vrot.lane.b32.xlu0 %v717, 17
        %v948 = vpop.permute.xlu0 %947
        %949 = vrot.lane.b32.xlu0 %v746, 17
        %v950 = vpop.permute.xlu0 %949
        %951 = vrot.lane.b32.xlu0 %v775, 17
        %v952 = vpop.permute.xlu0 %951
        %953 = vrot.lane.b32.xlu0 %v804, 17
        %v954 = vpop.permute.xlu0 %953
        %955 = vrot.lane.b32.xlu0 %v833, 17
        %v956 = vpop.permute.xlu0 %955
        %957 = vrot.lane.b32.xlu0 %v862, 17
        %v958 = vpop.permute.xlu0 %957
        %959 = vrot.lane.b32.xlu0 %v891, 17
        %v960 = vpop.permute.xlu0 %959
        %961 = vrot.lane.b32.xlu0 %v920, 17
        %v962 = vpop.permute.xlu0 %961
        %v963 = vlaneseq
        %v964 = vand.u32 %v963, 127
        %vm965 = vcmp.lt.s32.totalorder %v964, 17
        %v966 = vsel %vm965, %v960, %v962
        %v967 = vsel %vm965, %v958, %v960
        %v968 = vsel %vm965, %v956, %v958
        %v969 = vsel %vm965, %v954, %v956
        %v970 = vsel %vm965, %v952, %v954
        %v971 = vsel %vm965, %v950, %v952
        %v972 = vsel %vm965, %v948, %v950
        %v973 = vsel %vm965, %v946, %v948
        %v974 = vsel %vm965, %v944, %v946
        %v975 = vsel %vm965, %v942, %v944
        %v976 = vsel %vm965, %v940, %v942
        %v977 = vsel %vm965, %v938, %v940
        %v978 = vsel %vm965, %v936, %v938
        %v979 = vsel %vm965, %v934, %v936
        %v980 = vsel %vm965, %v932, %v934
        %v981 = vsel %vm965, %v962, %v932
        %v982 = vld [vmem:[%s6] ss:$8 sm:$0xf]
        %v983 = vld [vmem:[%s6] ss:$8 sm:$0xf0]
        %v984 = vor.u32 %v982, %v983
        %s985 = scalar_lea.vmem %s6, 64
        %v986 = vld [vmem:[%s985] ss:$8 sm:$0xf]
        %v987 = vld [vmem:[%s985] ss:$8 sm:$0xf0]
        %v988 = vor.u32 %v986, %v987
        %v1005 = vrot.slane %v966, 7
        %v1006 = vrot.slane %v981, 6
        %v1007 = vrot.slane %v980, 5
        %v1008 = vrot.slane %v979, 4
        %v1009 = vrot.slane %v978, 3
        %v1010 = vrot.slane %v977, 2
        %v1011 = vrot.slane %v976, 1
        %v1012 = vrot.slane %v974, 7
        %v1013 = vrot.slane %v973, 6
        %v1014 = vrot.slane %v972, 5
        %v1015 = vrot.slane %v971, 4
        %v1016 = vrot.slane %v970, 3
        %v1017 = vrot.slane %v969, 2
        %v1018 = vrot.slane %v968, 1
        %vm1019 = vcmask 1040384
        %v1020 = vsel %vm1019, %v967, %v1005
        %vm1021 = vcmask 1042434
        %v1022 = vsel %vm1021, %v1006, %v1007
        %vm1023 = vcmask 1041408
        %v1024 = vsel %vm1023, %v1020, %v1022
        %vm1025 = vcmask 1044484
        %v1026 = vsel %vm1025, %v1008, %v1009
        %vm1027 = vcmask 1046534
        %v1028 = vsel %vm1027, %v1010, %v1011
        %vm1029 = vcmask 1045508
        %v1030 = vsel %vm1029, %v1026, %v1028
        %vm1031 = vcmask 1043456
        %v1032 = vsel %vm1031, %v1024, %v1030
        %v1033 = vsel %vm1019, %v975, %v1012
        %v1034 = vsel %vm1021, %v1013, %v1014
        %v1035 = vsel %vm1023, %v1033, %v1034
        %v1036 = vsel %vm1025, %v1015, %v1016
        %v1037 = vsel %vm1027, %v1017, %v1018
        %v1038 = vsel %vm1029, %v1036, %v1037
        %v1039 = vsel %vm1031, %v1035, %v1038
        %v1042 = vmul.f32 %v984, %v1032
        %v1043 = vmul.f32 %v988, %v1039
        %v1044 = vadd.f32 %v1042, 0.0
        %v1045 = vadd.f32 %v1043, 0.0
        %v1062 = vrot.slane %v485, 1
        %v1063 = vrot.slane %v514, 1
        %v1064 = vrot.slane %v543, 1
        %v1065 = vrot.slane %v572, 1
        %v1066 = vrot.slane %v601, 1
        %v1067 = vrot.slane %v630, 1
        %v1068 = vrot.slane %v659, 1
        %v1069 = vrot.slane %v688, 1
        %v1070 = vrot.slane %v717, 1
        %v1071 = vrot.slane %v746, 1
        %v1072 = vrot.slane %v775, 1
        %v1073 = vrot.slane %v804, 1
        %v1074 = vrot.slane %v833, 1
        %v1075 = vrot.slane %v862, 1
        %v1076 = vrot.slane %v891, 1
        %v1077 = vrot.slane %v920, 1
        %1094 = vrot.lane.b32.xlu0 %v1062, 16
        %v1095 = vpop.permute.xlu0 %1094
        %1096 = vrot.lane.b32.xlu0 %v1063, 16
        %v1097 = vpop.permute.xlu0 %1096
        %1098 = vrot.lane.b32.xlu0 %v1064, 16
        %v1099 = vpop.permute.xlu0 %1098
        %1100 = vrot.lane.b32.xlu0 %v1065, 16
        %v1101 = vpop.permute.xlu0 %1100
        %1102 = vrot.lane.b32.xlu0 %v1066, 16
        %v1103 = vpop.permute.xlu0 %1102
        %1104 = vrot.lane.b32.xlu0 %v1067, 16
        %v1105 = vpop.permute.xlu0 %1104
        %1106 = vrot.lane.b32.xlu0 %v1068, 16
        %v1107 = vpop.permute.xlu0 %1106
        %1108 = vrot.lane.b32.xlu0 %v1069, 16
        %v1109 = vpop.permute.xlu0 %1108
        %1110 = vrot.lane.b32.xlu0 %v1070, 16
        %v1111 = vpop.permute.xlu0 %1110
        %1112 = vrot.lane.b32.xlu0 %v1071, 16
        %v1113 = vpop.permute.xlu0 %1112
        %1114 = vrot.lane.b32.xlu0 %v1072, 16
        %v1115 = vpop.permute.xlu0 %1114
        %1116 = vrot.lane.b32.xlu0 %v1073, 16
        %v1117 = vpop.permute.xlu0 %1116
        %1118 = vrot.lane.b32.xlu0 %v1074, 16
        %v1119 = vpop.permute.xlu0 %1118
        %1120 = vrot.lane.b32.xlu0 %v1075, 16
        %v1121 = vpop.permute.xlu0 %1120
        %1122 = vrot.lane.b32.xlu0 %v1076, 16
        %v1123 = vpop.permute.xlu0 %1122
        %1124 = vrot.lane.b32.xlu0 %v1077, 16
        %v1125 = vpop.permute.xlu0 %1124
        %vm1126 = vcmp.lt.s32.totalorder %v964, 16
        %v1127 = vsel %vm1126, %v1123, %v1125
        %v1128 = vsel %vm1126, %v1121, %v1123
        %v1129 = vsel %vm1126, %v1119, %v1121
        %v1130 = vsel %vm1126, %v1117, %v1119
        %v1131 = vsel %vm1126, %v1115, %v1117
        %v1132 = vsel %vm1126, %v1113, %v1115
        %v1133 = vsel %vm1126, %v1111, %v1113
        %v1134 = vsel %vm1126, %v1109, %v1111
        %v1135 = vsel %vm1126, %v1107, %v1109
        %v1136 = vsel %vm1126, %v1105, %v1107
        %v1137 = vsel %vm1126, %v1103, %v1105
        %v1138 = vsel %vm1126, %v1101, %v1103
        %v1139 = vsel %vm1126, %v1099, %v1101
        %v1140 = vsel %vm1126, %v1097, %v1099
        %v1141 = vsel %vm1126, %v1095, %v1097
        %v1142 = vsel %vm1126, %v1125, %v1095
        %s1143 = scalar_lea.vmem %s6, 1
        %v1144 = vld [vmem:[%s1143] ss:$8 sm:$0xf]
        %v1145 = vld [vmem:[%s1143] ss:$8 sm:$0xf0]
        %v1146 = vor.u32 %v1144, %v1145
        %s1147 = scalar_lea.vmem %s6, 65
        %v1148 = vld [vmem:[%s1147] ss:$8 sm:$0xf]
        %v1149 = vld [vmem:[%s1147] ss:$8 sm:$0xf0]
        %v1150 = vor.u32 %v1148, %v1149
        %v1167 = vrot.slane %v1127, 7
        %v1168 = vrot.slane %v1142, 6
        %v1169 = vrot.slane %v1141, 5
        %v1170 = vrot.slane %v1140, 4
        %v1171 = vrot.slane %v1139, 3
        %v1172 = vrot.slane %v1138, 2
        %v1173 = vrot.slane %v1137, 1
        %v1174 = vrot.slane %v1135, 7
        %v1175 = vrot.slane %v1134, 6
        %v1176 = vrot.slane %v1133, 5
        %v1177 = vrot.slane %v1132, 4
        %v1178 = vrot.slane %v1131, 3
        %v1179 = vrot.slane %v1130, 2
        %v1180 = vrot.slane %v1129, 1
        %v1181 = vsel %vm1019, %v1128, %v1167
        %v1182 = vsel %vm1021, %v1168, %v1169
        %v1183 = vsel %vm1023, %v1181, %v1182
        %v1184 = vsel %vm1025, %v1170, %v1171
        %v1185 = vsel %vm1027, %v1172, %v1173
        %v1186 = vsel %vm1029, %v1184, %v1185
        %v1187 = vsel %vm1031, %v1183, %v1186
        %v1188 = vsel %vm1019, %v1136, %v1174
        %v1189 = vsel %vm1021, %v1175, %v1176
        %v1190 = vsel %vm1023, %v1188, %v1189
        %v1191 = vsel %vm1025, %v1177, %v1178
        %v1192 = vsel %vm1027, %v1179, %v1180
        %v1193 = vsel %vm1029, %v1191, %v1192
        %v1194 = vsel %vm1031, %v1190, %v1193
        %v1197 = vmul.f32 %v1146, %v1187
        %v1198 = vmul.f32 %v1150, %v1194
        %v1199 = vadd.f32 %v1044, %v1197
        %v1200 = vadd.f32 %v1045, %v1198
        %v1201 = vrot.slane %v485, 2
        %v1202 = vrot.slane %v514, 2
        %v1203 = vrot.slane %v543, 2
        %v1204 = vrot.slane %v572, 2
        %v1205 = vrot.slane %v601, 2
        %v1206 = vrot.slane %v630, 2
        %v1207 = vrot.slane %v659, 2
        %v1208 = vrot.slane %v688, 2
        %v1209 = vrot.slane %v717, 2
        %v1210 = vrot.slane %v746, 2
        %v1211 = vrot.slane %v775, 2
        %v1212 = vrot.slane %v804, 2
        %v1213 = vrot.slane %v833, 2
        %v1214 = vrot.slane %v862, 2
        %v1215 = vrot.slane %v891, 2
        %v1216 = vrot.slane %v920, 2
        %1233 = vrot.lane.b32.xlu0 %v1201, 15
        %v1234 = vpop.permute.xlu0 %1233
        %1235 = vrot.lane.b32.xlu0 %v1202, 15
        %v1236 = vpop.permute.xlu0 %1235
        %1237 = vrot.lane.b32.xlu0 %v1203, 15
        %v1238 = vpop.permute.xlu0 %1237
        %1239 = vrot.lane.b32.xlu0 %v1204, 15
        %v1240 = vpop.permute.xlu0 %1239
        %1241 = vrot.lane.b32.xlu0 %v1205, 15
        %v1242 = vpop.permute.xlu0 %1241
        %1243 = vrot.lane.b32.xlu0 %v1206, 15
        %v1244 = vpop.permute.xlu0 %1243
        %1245 = vrot.lane.b32.xlu0 %v1207, 15
        %v1246 = vpop.permute.xlu0 %1245
        %1247 = vrot.lane.b32.xlu0 %v1208, 15
        %v1248 = vpop.permute.xlu0 %1247
        %1249 = vrot.lane.b32.xlu0 %v1209, 15
        %v1250 = vpop.permute.xlu0 %1249
        %1251 = vrot.lane.b32.xlu0 %v1210, 15
        %v1252 = vpop.permute.xlu0 %1251
        %1253 = vrot.lane.b32.xlu0 %v1211, 15
        %v1254 = vpop.permute.xlu0 %1253
        %1255 = vrot.lane.b32.xlu0 %v1212, 15
        %v1256 = vpop.permute.xlu0 %1255
        %1257 = vrot.lane.b32.xlu0 %v1213, 15
        %v1258 = vpop.permute.xlu0 %1257
        %1259 = vrot.lane.b32.xlu0 %v1214, 15
        %v1260 = vpop.permute.xlu0 %1259
        %1261 = vrot.lane.b32.xlu0 %v1215, 15
        %v1262 = vpop.permute.xlu0 %1261
        %1263 = vrot.lane.b32.xlu0 %v1216, 15
        %v1264 = vpop.permute.xlu0 %1263
        %vm1265 = vcmp.lt.s32.totalorder %v964, 15
        %v1266 = vsel %vm1265, %v1262, %v1264
        %v1267 = vsel %vm1265, %v1260, %v1262
        %v1268 = vsel %vm1265, %v1258, %v1260
        %v1269 = vsel %vm1265, %v1256, %v1258
        %v1270 = vsel %vm1265, %v1254, %v1256
        %v1271 = vsel %vm1265, %v1252, %v1254
        %v1272 = vsel %vm1265, %v1250, %v1252
        %v1273 = vsel %vm1265, %v1248, %v1250
        %v1274 = vsel %vm1265, %v1246, %v1248
        %v1275 = vsel %vm1265, %v1244, %v1246
        %v1276 = vsel %vm1265, %v1242, %v1244
        %v1277 = vsel %vm1265, %v1240, %v1242
        %v1278 = vsel %vm1265, %v1238, %v1240
        %v1279 = vsel %vm1265, %v1236, %v1238
        %v1280 = vsel %vm1265, %v1234, %v1236
        %v1281 = vsel %vm1265, %v1264, %v1234
        %s1282 = scalar_lea.vmem %s6, 2
        %v1283 = vld [vmem:[%s1282] ss:$8 sm:$0xf]
        %v1284 = vld [vmem:[%s1282] ss:$8 sm:$0xf0]
        %v1285 = vor.u32 %v1283, %v1284
        %s1286 = scalar_lea.vmem %s6, 66
        %v1287 = vld [vmem:[%s1286] ss:$8 sm:$0xf]
        %v1288 = vld [vmem:[%s1286] ss:$8 sm:$0xf0]
        %v1289 = vor.u32 %v1287, %v1288
        %v1306 = vrot.slane %v1266, 7
        %v1307 = vrot.slane %v1281, 6
        %v1308 = vrot.slane %v1280, 5
        %v1309 = vrot.slane %v1279, 4
        %v1310 = vrot.slane %v1278, 3
        %v1311 = vrot.slane %v1277, 2
        %v1312 = vrot.slane %v1276, 1
        %v1313 = vrot.slane %v1274, 7
        %v1314 = vrot.slane %v1273, 6
        %v1315 = vrot.slane %v1272, 5
        %v1316 = vrot.slane %v1271, 4
        %v1317 = vrot.slane %v1270, 3
        %v1318 = vrot.slane %v1269, 2
        %v1319 = vrot.slane %v1268, 1
        %v1320 = vsel %vm1019, %v1267, %v1306
        %v1321 = vsel %vm1021, %v1307, %v1308
        %v1322 = vsel %vm1023, %v1320, %v1321
        %v1323 = vsel %vm1025, %v1309, %v1310
        %v1324 = vsel %vm1027, %v1311, %v1312
        %v1325 = vsel %vm1029, %v1323, %v1324
        %v1326 = vsel %vm1031, %v1322, %v1325
        %v1327 = vsel %vm1019, %v1275, %v1313
        %v1328 = vsel %vm1021, %v1314, %v1315
        %v1329 = vsel %vm1023, %v1327, %v1328
        %v1330 = vsel %vm1025, %v1316, %v1317
        %v1331 = vsel %vm1027, %v1318, %v1319
        %v1332 = vsel %vm1029, %v1330, %v1331
        %v1333 = vsel %vm1031, %v1329, %v1332
        %v1336 = vmul.f32 %v1285, %v1326
        %v1337 = vmul.f32 %v1289, %v1333
        %v1338 = vadd.f32 %v1199, %v1336
        %v1339 = vadd.f32 %v1200, %v1337
        %v1340 = vrot.slane %v485, 3
        %v1341 = vrot.slane %v514, 3
        %v1342 = vrot.slane %v543, 3
        %v1343 = vrot.slane %v572, 3
        %v1344 = vrot.slane %v601, 3
        %v1345 = vrot.slane %v630, 3
        %v1346 = vrot.slane %v659, 3
        %v1347 = vrot.slane %v688, 3
        %v1348 = vrot.slane %v717, 3
        %v1349 = vrot.slane %v746, 3
        %v1350 = vrot.slane %v775, 3
        %v1351 = vrot.slane %v804, 3
        %v1352 = vrot.slane %v833, 3
        %v1353 = vrot.slane %v862, 3
        %v1354 = vrot.slane %v891, 3
        %v1355 = vrot.slane %v920, 3
        %1372 = vrot.lane.b32.xlu0 %v1340, 1
        %v1373 = vpop.permute.xlu0 %1372
        %1374 = vrot.lane.b32.xlu0 %v1341, 1
        %v1375 = vpop.permute.xlu0 %1374
        %1376 = vrot.lane.b32.xlu0 %v1342, 1
        %v1377 = vpop.permute.xlu0 %1376
        %1378 = vrot.lane.b32.xlu0 %v1343, 1
        %v1379 = vpop.permute.xlu0 %1378
        %1380 = vrot.lane.b32.xlu0 %v1344, 1
        %v1381 = vpop.permute.xlu0 %1380
        %1382 = vrot.lane.b32.xlu0 %v1345, 1
        %v1383 = vpop.permute.xlu0 %1382
        %1384 = vrot.lane.b32.xlu0 %v1346, 1
        %v1385 = vpop.permute.xlu0 %1384
        %1386 = vrot.lane.b32.xlu0 %v1347, 1
        %v1387 = vpop.permute.xlu0 %1386
        %1388 = vrot.lane.b32.xlu0 %v1348, 1
        %v1389 = vpop.permute.xlu0 %1388
        %1390 = vrot.lane.b32.xlu0 %v1349, 1
        %v1391 = vpop.permute.xlu0 %1390
        %1392 = vrot.lane.b32.xlu0 %v1350, 1
        %v1393 = vpop.permute.xlu0 %1392
        %1394 = vrot.lane.b32.xlu0 %v1351, 1
        %v1395 = vpop.permute.xlu0 %1394
        %1396 = vrot.lane.b32.xlu0 %v1352, 1
        %v1397 = vpop.permute.xlu0 %1396
        %1398 = vrot.lane.b32.xlu0 %v1353, 1
        %v1399 = vpop.permute.xlu0 %1398
        %1400 = vrot.lane.b32.xlu0 %v1354, 1
        %v1401 = vpop.permute.xlu0 %1400
        %1402 = vrot.lane.b32.xlu0 %v1355, 1
        %v1403 = vpop.permute.xlu0 %1402
        %vm1404 = vcmp.lt.s32.totalorder %v964, 1
        %v1405 = vsel %vm1404, %v1401, %v1403
        %v1406 = vsel %vm1404, %v1399, %v1401
        %v1407 = vsel %vm1404, %v1397, %v1399
        %v1408 = vsel %vm1404, %v1395, %v1397
        %v1409 = vsel %vm1404, %v1393, %v1395
        %v1410 = vsel %vm1404, %v1391, %v1393
        %v1411 = vsel %vm1404, %v1389, %v1391
        %v1412 = vsel %vm1404, %v1387, %v1389
        %v1413 = vsel %vm1404, %v1385, %v1387
        %v1414 = vsel %vm1404, %v1383, %v1385
        %v1415 = vsel %vm1404, %v1381, %v1383
        %v1416 = vsel %vm1404, %v1379, %v1381
        %v1417 = vsel %vm1404, %v1377, %v1379
        %v1418 = vsel %vm1404, %v1375, %v1377
        %v1419 = vsel %vm1404, %v1373, %v1375
        %v1420 = vsel %vm1404, %v1403, %v1373
        %s1421 = scalar_lea.vmem %s6, 3
        %v1422 = vld [vmem:[%s1421] ss:$8 sm:$0xf]
        %v1423 = vld [vmem:[%s1421] ss:$8 sm:$0xf0]
        %v1424 = vor.u32 %v1422, %v1423
        %s1425 = scalar_lea.vmem %s6, 67
        %v1426 = vld [vmem:[%s1425] ss:$8 sm:$0xf]
        %v1427 = vld [vmem:[%s1425] ss:$8 sm:$0xf0]
        %v1428 = vor.u32 %v1426, %v1427
        %v1445 = vrot.slane %v1405, 7
        %v1446 = vrot.slane %v1420, 6
        %v1447 = vrot.slane %v1419, 5
        %v1448 = vrot.slane %v1418, 4
        %v1449 = vrot.slane %v1417, 3
        %v1450 = vrot.slane %v1416, 2
        %v1451 = vrot.slane %v1415, 1
        %v1452 = vrot.slane %v1413, 7
        %v1453 = vrot.slane %v1412, 6
        %v1454 = vrot.slane %v1411, 5
        %v1455 = vrot.slane %v1410, 4
        %v1456 = vrot.slane %v1409, 3
        %v1457 = vrot.slane %v1408, 2
        %v1458 = vrot.slane %v1407, 1
        %v1459 = vsel %vm1019, %v1406, %v1445
        %v1460 = vsel %vm1021, %v1446, %v1447
        %v1461 = vsel %vm1023, %v1459, %v1460
        %v1462 = vsel %vm1025, %v1448, %v1449
        %v1463 = vsel %vm1027, %v1450, %v1451
        %v1464 = vsel %vm1029, %v1462, %v1463
        %v1465 = vsel %vm1031, %v1461, %v1464
        %v1466 = vsel %vm1019, %v1414, %v1452
        %v1467 = vsel %vm1021, %v1453, %v1454
        %v1468 = vsel %vm1023, %v1466, %v1467
        %v1469 = vsel %vm1025, %v1455, %v1456
        %v1470 = vsel %vm1027, %v1457, %v1458
        %v1471 = vsel %vm1029, %v1469, %v1470
        %v1472 = vsel %vm1031, %v1468, %v1471
        %v1475 = vmul.f32 %v1424, %v1465
        %v1476 = vmul.f32 %v1428, %v1472
        %v1477 = vadd.f32 %v1338, %v1475
        %v1478 = vadd.f32 %v1339, %v1476
        %v1479 = vrot.slane %v485, 4
        %v1480 = vrot.slane %v514, 4
        %v1481 = vrot.slane %v543, 4
        %v1482 = vrot.slane %v572, 4
        %v1483 = vrot.slane %v601, 4
        %v1484 = vrot.slane %v630, 4
        %v1485 = vrot.slane %v659, 4
        %v1486 = vrot.slane %v688, 4
        %v1487 = vrot.slane %v717, 4
        %v1488 = vrot.slane %v746, 4
        %v1489 = vrot.slane %v775, 4
        %v1490 = vrot.slane %v804, 4
        %v1491 = vrot.slane %v833, 4
        %v1492 = vrot.slane %v862, 4
        %v1493 = vrot.slane %v891, 4
        %v1494 = vrot.slane %v920, 4
        %s1495 = scalar_lea.vmem %s6, 4
        %v1496 = vld [vmem:[%s1495] ss:$8 sm:$0xf]
        %v1497 = vld [vmem:[%s1495] ss:$8 sm:$0xf0]
        %v1498 = vor.u32 %v1496, %v1497
        %s1499 = scalar_lea.vmem %s6, 68
        %v1500 = vld [vmem:[%s1499] ss:$8 sm:$0xf]
        %v1501 = vld [vmem:[%s1499] ss:$8 sm:$0xf0]
        %v1502 = vor.u32 %v1500, %v1501
        %v1503 = vrot.slane %v1494, 7
        %v1504 = vrot.slane %v1479, 6
        %v1505 = vrot.slane %v1480, 5
        %v1506 = vrot.slane %v1481, 4
        %v1507 = vrot.slane %v1482, 3
        %v1508 = vrot.slane %v1483, 2
        %v1509 = vrot.slane %v1484, 1
        %v1510 = vrot.slane %v1486, 7
        %v1511 = vrot.slane %v1487, 6
        %v1512 = vrot.slane %v1488, 5
        %v1513 = vrot.slane %v1489, 4
        %v1514 = vrot.slane %v1490, 3
        %v1515 = vrot.slane %v1491, 2
        %v1516 = vrot.slane %v1492, 1
        %v1517 = vsel %vm1019, %v1493, %v1503
        %v1518 = vsel %vm1021, %v1504, %v1505
        %v1519 = vsel %vm1023, %v1517, %v1518
        %v1520 = vsel %vm1025, %v1506, %v1507
        %v1521 = vsel %vm1027, %v1508, %v1509
        %v1522 = vsel %vm1029, %v1520, %v1521
        %v1523 = vsel %vm1031, %v1519, %v1522
        %v1524 = vsel %vm1019, %v1485, %v1510
        %v1525 = vsel %vm1021, %v1511, %v1512
        %v1526 = vsel %vm1023, %v1524, %v1525
        %v1527 = vsel %vm1025, %v1513, %v1514
        %v1528 = vsel %vm1027, %v1515, %v1516
        %v1529 = vsel %vm1029, %v1527, %v1528
        %v1530 = vsel %vm1031, %v1526, %v1529
        %v1533 = vmul.f32 %v1498, %v1523
        %v1534 = vmul.f32 %v1502, %v1530
        %v1535 = vadd.f32 %v1477, %v1533
        %v1536 = vadd.f32 %v1478, %v1534
        %v1537 = vrot.slane %v485, 5
        %v1538 = vrot.slane %v514, 5
        %v1539 = vrot.slane %v543, 5
        %v1540 = vrot.slane %v572, 5
        %v1541 = vrot.slane %v601, 5
        %v1542 = vrot.slane %v630, 5
        %v1543 = vrot.slane %v659, 5
        %v1544 = vrot.slane %v688, 5
        %v1545 = vrot.slane %v717, 5
        %v1546 = vrot.slane %v746, 5
        %v1547 = vrot.slane %v775, 5
        %v1548 = vrot.slane %v804, 5
        %v1549 = vrot.slane %v833, 5
        %v1550 = vrot.slane %v862, 5
        %v1551 = vrot.slane %v891, 5
        %v1552 = vrot.slane %v920, 5
        %1569 = vrot.lane.b32.xlu0 %v1537, 127
        %v1570 = vpop.permute.xlu0 %1569
        %1571 = vrot.lane.b32.xlu0 %v1538, 127
        %v1572 = vpop.permute.xlu0 %1571
        %1573 = vrot.lane.b32.xlu0 %v1539, 127
        %v1574 = vpop.permute.xlu0 %1573
        %1575 = vrot.lane.b32.xlu0 %v1540, 127
        %v1576 = vpop.permute.xlu0 %1575
        %1577 = vrot.lane.b32.xlu0 %v1541, 127
        %v1578 = vpop.permute.xlu0 %1577
        %1579 = vrot.lane.b32.xlu0 %v1542, 127
        %v1580 = vpop.permute.xlu0 %1579
        %1581 = vrot.lane.b32.xlu0 %v1543, 127
        %v1582 = vpop.permute.xlu0 %1581
        %1583 = vrot.lane.b32.xlu0 %v1544, 127
        %v1584 = vpop.permute.xlu0 %1583
        %1585 = vrot.lane.b32.xlu0 %v1545, 127
        %v1586 = vpop.permute.xlu0 %1585
        %1587 = vrot.lane.b32.xlu0 %v1546, 127
        %v1588 = vpop.permute.xlu0 %1587
        %1589 = vrot.lane.b32.xlu0 %v1547, 127
        %v1590 = vpop.permute.xlu0 %1589
        %1591 = vrot.lane.b32.xlu0 %v1548, 127
        %v1592 = vpop.permute.xlu0 %1591
        %1593 = vrot.lane.b32.xlu0 %v1549, 127
        %v1594 = vpop.permute.xlu0 %1593
        %1595 = vrot.lane.b32.xlu0 %v1550, 127
        %v1596 = vpop.permute.xlu0 %1595
        %1597 = vrot.lane.b32.xlu0 %v1551, 127
        %v1598 = vpop.permute.xlu0 %1597
        %1599 = vrot.lane.b32.xlu0 %v1552, 127
        %v1600 = vpop.permute.xlu0 %1599
        %vm1601 = vcmp.lt.s32.totalorder %v964, 127
        %v1602 = vsel %vm1601, %v1598, %v1600
        %v1603 = vsel %vm1601, %v1596, %v1598
        %v1604 = vsel %vm1601, %v1594, %v1596
        %v1605 = vsel %vm1601, %v1592, %v1594
        %v1606 = vsel %vm1601, %v1590, %v1592
        %v1607 = vsel %vm1601, %v1588, %v1590
        %v1608 = vsel %vm1601, %v1586, %v1588
        %v1609 = vsel %vm1601, %v1584, %v1586
        %v1610 = vsel %vm1601, %v1582, %v1584
        %v1611 = vsel %vm1601, %v1580, %v1582
        %v1612 = vsel %vm1601, %v1578, %v1580
        %v1613 = vsel %vm1601, %v1576, %v1578
        %v1614 = vsel %vm1601, %v1574, %v1576
        %v1615 = vsel %vm1601, %v1572, %v1574
        %v1616 = vsel %vm1601, %v1570, %v1572
        %v1617 = vsel %vm1601, %v1600, %v1570
        %s1618 = scalar_lea.vmem %s6, 5
        %v1619 = vld [vmem:[%s1618] ss:$8 sm:$0xf]
        %v1620 = vld [vmem:[%s1618] ss:$8 sm:$0xf0]
        %v1621 = vor.u32 %v1619, %v1620
        %s1622 = scalar_lea.vmem %s6, 69
        %v1623 = vld [vmem:[%s1622] ss:$8 sm:$0xf]
        %v1624 = vld [vmem:[%s1622] ss:$8 sm:$0xf0]
        %v1625 = vor.u32 %v1623, %v1624
        %v1642 = vrot.slane %v1617, 7
        %v1643 = vrot.slane %v1616, 6
        %v1644 = vrot.slane %v1615, 5
        %v1645 = vrot.slane %v1614, 4
        %v1646 = vrot.slane %v1613, 3
        %v1647 = vrot.slane %v1612, 2
        %v1648 = vrot.slane %v1611, 1
        %v1649 = vrot.slane %v1609, 7
        %v1650 = vrot.slane %v1608, 6
        %v1651 = vrot.slane %v1607, 5
        %v1652 = vrot.slane %v1606, 4
        %v1653 = vrot.slane %v1605, 3
        %v1654 = vrot.slane %v1604, 2
        %v1655 = vrot.slane %v1603, 1
        %v1656 = vsel %vm1019, %v1602, %v1642
        %v1657 = vsel %vm1021, %v1643, %v1644
        %v1658 = vsel %vm1023, %v1656, %v1657
        %v1659 = vsel %vm1025, %v1645, %v1646
        %v1660 = vsel %vm1027, %v1647, %v1648
        %v1661 = vsel %vm1029, %v1659, %v1660
        %v1662 = vsel %vm1031, %v1658, %v1661
        %v1663 = vsel %vm1019, %v1610, %v1649
        %v1664 = vsel %vm1021, %v1650, %v1651
        %v1665 = vsel %vm1023, %v1663, %v1664
        %v1666 = vsel %vm1025, %v1652, %v1653
        %v1667 = vsel %vm1027, %v1654, %v1655
        %v1668 = vsel %vm1029, %v1666, %v1667
        %v1669 = vsel %vm1031, %v1665, %v1668
        %v1672 = vmul.f32 %v1621, %v1662
        %v1673 = vmul.f32 %v1625, %v1669
        %v1674 = vadd.f32 %v1535, %v1672
        %v1675 = vadd.f32 %v1536, %v1673
        %v1676 = vrot.slane %v485, 6
        %v1677 = vrot.slane %v514, 6
        %v1678 = vrot.slane %v543, 6
        %v1679 = vrot.slane %v572, 6
        %v1680 = vrot.slane %v601, 6
        %v1681 = vrot.slane %v630, 6
        %v1682 = vrot.slane %v659, 6
        %v1683 = vrot.slane %v688, 6
        %v1684 = vrot.slane %v717, 6
        %v1685 = vrot.slane %v746, 6
        %v1686 = vrot.slane %v775, 6
        %v1687 = vrot.slane %v804, 6
        %v1688 = vrot.slane %v833, 6
        %v1689 = vrot.slane %v862, 6
        %v1690 = vrot.slane %v891, 6
        %v1691 = vrot.slane %v920, 6
        %1708 = vrot.lane.b32.xlu0 %v1676, 113
        %v1709 = vpop.permute.xlu0 %1708
        %1710 = vrot.lane.b32.xlu0 %v1677, 113
        %v1711 = vpop.permute.xlu0 %1710
        %1712 = vrot.lane.b32.xlu0 %v1678, 113
        %v1713 = vpop.permute.xlu0 %1712
        %1714 = vrot.lane.b32.xlu0 %v1679, 113
        %v1715 = vpop.permute.xlu0 %1714
        %1716 = vrot.lane.b32.xlu0 %v1680, 113
        %v1717 = vpop.permute.xlu0 %1716
        %1718 = vrot.lane.b32.xlu0 %v1681, 113
        %v1719 = vpop.permute.xlu0 %1718
        %1720 = vrot.lane.b32.xlu0 %v1682, 113
        %v1721 = vpop.permute.xlu0 %1720
        %1722 = vrot.lane.b32.xlu0 %v1683, 113
        %v1723 = vpop.permute.xlu0 %1722
        %1724 = vrot.lane.b32.xlu0 %v1684, 113
        %v1725 = vpop.permute.xlu0 %1724
        %1726 = vrot.lane.b32.xlu0 %v1685, 113
        %v1727 = vpop.permute.xlu0 %1726
        %1728 = vrot.lane.b32.xlu0 %v1686, 113
        %v1729 = vpop.permute.xlu0 %1728
        %1730 = vrot.lane.b32.xlu0 %v1687, 113
        %v1731 = vpop.permute.xlu0 %1730
        %1732 = vrot.lane.b32.xlu0 %v1688, 113
        %v1733 = vpop.permute.xlu0 %1732
        %1734 = vrot.lane.b32.xlu0 %v1689, 113
        %v1735 = vpop.permute.xlu0 %1734
        %1736 = vrot.lane.b32.xlu0 %v1690, 113
        %v1737 = vpop.permute.xlu0 %1736
        %1738 = vrot.lane.b32.xlu0 %v1691, 113
        %v1739 = vpop.permute.xlu0 %1738
        %vm1740 = vcmp.lt.s32.totalorder %v964, 113
        %v1741 = vsel %vm1740, %v1737, %v1739
        %v1742 = vsel %vm1740, %v1735, %v1737
        %v1743 = vsel %vm1740, %v1733, %v1735
        %v1744 = vsel %vm1740, %v1731, %v1733
        %v1745 = vsel %vm1740, %v1729, %v1731
        %v1746 = vsel %vm1740, %v1727, %v1729
        %v1747 = vsel %vm1740, %v1725, %v1727
        %v1748 = vsel %vm1740, %v1723, %v1725
        %v1749 = vsel %vm1740, %v1721, %v1723
        %v1750 = vsel %vm1740, %v1719, %v1721
        %v1751 = vsel %vm1740, %v1717, %v1719
        %v1752 = vsel %vm1740, %v1715, %v1717
        %v1753 = vsel %vm1740, %v1713, %v1715
        %v1754 = vsel %vm1740, %v1711, %v1713
        %v1755 = vsel %vm1740, %v1709, %v1711
        %v1756 = vsel %vm1740, %v1739, %v1709
        %s1757 = scalar_lea.vmem %s6, 6
        %v1758 = vld [vmem:[%s1757] ss:$8 sm:$0xf]
        %v1759 = vld [vmem:[%s1757] ss:$8 sm:$0xf0]
        %v1760 = vor.u32 %v1758, %v1759
        %s1761 = scalar_lea.vmem %s6, 70
        %v1762 = vld [vmem:[%s1761] ss:$8 sm:$0xf]
        %v1763 = vld [vmem:[%s1761] ss:$8 sm:$0xf0]
        %v1764 = vor.u32 %v1762, %v1763
        %v1781 = vrot.slane %v1756, 7
        %v1782 = vrot.slane %v1755, 6
        %v1783 = vrot.slane %v1754, 5
        %v1784 = vrot.slane %v1753, 4
        %v1785 = vrot.slane %v1752, 3
        %v1786 = vrot.slane %v1751, 2
        %v1787 = vrot.slane %v1750, 1
        %v1788 = vrot.slane %v1748, 7
        %v1789 = vrot.slane %v1747, 6
        %v1790 = vrot.slane %v1746, 5
        %v1791 = vrot.slane %v1745, 4
        %v1792 = vrot.slane %v1744, 3
        %v1793 = vrot.slane %v1743, 2
        %v1794 = vrot.slane %v1742, 1
        %v1795 = vsel %vm1019, %v1741, %v1781
        %v1796 = vsel %vm1021, %v1782, %v1783
        %v1797 = vsel %vm1023, %v1795, %v1796
        %v1798 = vsel %vm1025, %v1784, %v1785
        %v1799 = vsel %vm1027, %v1786, %v1787
        %v1800 = vsel %vm1029, %v1798, %v1799
        %v1801 = vsel %vm1031, %v1797, %v1800
        %v1802 = vsel %vm1019, %v1749, %v1788
        %v1803 = vsel %vm1021, %v1789, %v1790
        %v1804 = vsel %vm1023, %v1802, %v1803
        %v1805 = vsel %vm1025, %v1791, %v1792
        %v1806 = vsel %vm1027, %v1793, %v1794
        %v1807 = vsel %vm1029, %v1805, %v1806
        %v1808 = vsel %vm1031, %v1804, %v1807
        %v1811 = vmul.f32 %v1760, %v1801
        %v1812 = vmul.f32 %v1764, %v1808
        %v1813 = vadd.f32 %v1674, %v1811
        %v1814 = vadd.f32 %v1675, %v1812
        %v1815 = vrot.slane %v485, 7
        %v1816 = vrot.slane %v514, 7
        %v1817 = vrot.slane %v543, 7
        %v1818 = vrot.slane %v572, 7
        %v1819 = vrot.slane %v601, 7
        %v1820 = vrot.slane %v630, 7
        %v1821 = vrot.slane %v659, 7
        %v1822 = vrot.slane %v688, 7
        %v1823 = vrot.slane %v717, 7
        %v1824 = vrot.slane %v746, 7
        %v1825 = vrot.slane %v775, 7
        %v1826 = vrot.slane %v804, 7
        %v1827 = vrot.slane %v833, 7
        %v1828 = vrot.slane %v862, 7
        %v1829 = vrot.slane %v891, 7
        %v1830 = vrot.slane %v920, 7
        %1847 = vrot.lane.b32.xlu0 %v1815, 112
        %v1848 = vpop.permute.xlu0 %1847
        %1849 = vrot.lane.b32.xlu0 %v1816, 112
        %v1850 = vpop.permute.xlu0 %1849
        %1851 = vrot.lane.b32.xlu0 %v1817, 112
        %v1852 = vpop.permute.xlu0 %1851
        %1853 = vrot.lane.b32.xlu0 %v1818, 112
        %v1854 = vpop.permute.xlu0 %1853
        %1855 = vrot.lane.b32.xlu0 %v1819, 112
        %v1856 = vpop.permute.xlu0 %1855
        %1857 = vrot.lane.b32.xlu0 %v1820, 112
        %v1858 = vpop.permute.xlu0 %1857
        %1859 = vrot.lane.b32.xlu0 %v1821, 112
        %v1860 = vpop.permute.xlu0 %1859
        %1861 = vrot.lane.b32.xlu0 %v1822, 112
        %v1862 = vpop.permute.xlu0 %1861
        %1863 = vrot.lane.b32.xlu0 %v1823, 112
        %v1864 = vpop.permute.xlu0 %1863
        %1865 = vrot.lane.b32.xlu0 %v1824, 112
        %v1866 = vpop.permute.xlu0 %1865
        %1867 = vrot.lane.b32.xlu0 %v1825, 112
        %v1868 = vpop.permute.xlu0 %1867
        %1869 = vrot.lane.b32.xlu0 %v1826, 112
        %v1870 = vpop.permute.xlu0 %1869
        %1871 = vrot.lane.b32.xlu0 %v1827, 112
        %v1872 = vpop.permute.xlu0 %1871
        %1873 = vrot.lane.b32.xlu0 %v1828, 112
        %v1874 = vpop.permute.xlu0 %1873
        %1875 = vrot.lane.b32.xlu0 %v1829, 112
        %v1876 = vpop.permute.xlu0 %1875
        %1877 = vrot.lane.b32.xlu0 %v1830, 112
        %v1878 = vpop.permute.xlu0 %1877
        %vm1879 = vcmp.lt.s32.totalorder %v964, 112
        %v1880 = vsel %vm1879, %v1876, %v1878
        %v1881 = vsel %vm1879, %v1874, %v1876
        %v1882 = vsel %vm1879, %v1872, %v1874
        %v1883 = vsel %vm1879, %v1870, %v1872
        %v1884 = vsel %vm1879, %v1868, %v1870
        %v1885 = vsel %vm1879, %v1866, %v1868
        %v1886 = vsel %vm1879, %v1864, %v1866
        %v1887 = vsel %vm1879, %v1862, %v1864
        %v1888 = vsel %vm1879, %v1860, %v1862
        %v1889 = vsel %vm1879, %v1858, %v1860
        %v1890 = vsel %vm1879, %v1856, %v1858
        %v1891 = vsel %vm1879, %v1854, %v1856
        %v1892 = vsel %vm1879, %v1852, %v1854
        %v1893 = vsel %vm1879, %v1850, %v1852
        %v1894 = vsel %vm1879, %v1848, %v1850
        %v1895 = vsel %vm1879, %v1878, %v1848
        %s1896 = scalar_lea.vmem %s6, 7
        %v1897 = vld [vmem:[%s1896] ss:$8 sm:$0xf]
        %v1898 = vld [vmem:[%s1896] ss:$8 sm:$0xf0]
        %v1899 = vor.u32 %v1897, %v1898
        %s1900 = scalar_lea.vmem %s6, 71
        %v1901 = vld [vmem:[%s1900] ss:$8 sm:$0xf]
        %v1902 = vld [vmem:[%s1900] ss:$8 sm:$0xf0]
        %v1903 = vor.u32 %v1901, %v1902
        %v1920 = vrot.slane %v1895, 7
        %v1921 = vrot.slane %v1894, 6
        %v1922 = vrot.slane %v1893, 5
        %v1923 = vrot.slane %v1892, 4
        %v1924 = vrot.slane %v1891, 3
        %v1925 = vrot.slane %v1890, 2
        %v1926 = vrot.slane %v1889, 1
        %v1927 = vrot.slane %v1887, 7
        %v1928 = vrot.slane %v1886, 6
        %v1929 = vrot.slane %v1885, 5
        %v1930 = vrot.slane %v1884, 4
        %v1931 = vrot.slane %v1883, 3
        %v1932 = vrot.slane %v1882, 2
        %v1933 = vrot.slane %v1881, 1
        %v1934 = vsel %vm1019, %v1880, %v1920
        %v1935 = vsel %vm1021, %v1921, %v1922
        %v1936 = vsel %vm1023, %v1934, %v1935
        %v1937 = vsel %vm1025, %v1923, %v1924
        %v1938 = vsel %vm1027, %v1925, %v1926
        %v1939 = vsel %vm1029, %v1937, %v1938
        %v1940 = vsel %vm1031, %v1936, %v1939
        %v1941 = vsel %vm1019, %v1888, %v1927
        %v1942 = vsel %vm1021, %v1928, %v1929
        %v1943 = vsel %vm1023, %v1941, %v1942
        %v1944 = vsel %vm1025, %v1930, %v1931
        %v1945 = vsel %vm1027, %v1932, %v1933
        %v1946 = vsel %vm1029, %v1944, %v1945
        %v1947 = vsel %vm1031, %v1943, %v1946
        %v1950 = vmul.f32 %v1899, %v1940
        %v1951 = vmul.f32 %v1903, %v1947
        %v1952 = vadd.f32 %v1813, %v1950
        %v1953 = vadd.f32 %v1814, %v1951
        %1954 = vrot.lane.b32.xlu0 %v488, 111
        %v1955 = vpop.permute.xlu0 %1954
        %1956 = vrot.lane.b32.xlu0 %v517, 111
        %v1957 = vpop.permute.xlu0 %1956
        %1958 = vrot.lane.b32.xlu0 %v546, 111
        %v1959 = vpop.permute.xlu0 %1958
        %1960 = vrot.lane.b32.xlu0 %v575, 111
        %v1961 = vpop.permute.xlu0 %1960
        %1962 = vrot.lane.b32.xlu0 %v604, 111
        %v1963 = vpop.permute.xlu0 %1962
        %1964 = vrot.lane.b32.xlu0 %v633, 111
        %v1965 = vpop.permute.xlu0 %1964
        %1966 = vrot.lane.b32.xlu0 %v662, 111
        %v1967 = vpop.permute.xlu0 %1966
        %1968 = vrot.lane.b32.xlu0 %v691, 111
        %v1969 = vpop.permute.xlu0 %1968
        %1970 = vrot.lane.b32.xlu0 %v720, 111
        %v1971 = vpop.permute.xlu0 %1970
        %1972 = vrot.lane.b32.xlu0 %v749, 111
        %v1973 = vpop.permute.xlu0 %1972
        %1974 = vrot.lane.b32.xlu0 %v778, 111
        %v1975 = vpop.permute.xlu0 %1974
        %1976 = vrot.lane.b32.xlu0 %v807, 111
        %v1977 = vpop.permute.xlu0 %1976
        %1978 = vrot.lane.b32.xlu0 %v836, 111
        %v1979 = vpop.permute.xlu0 %1978
        %1980 = vrot.lane.b32.xlu0 %v865, 111
        %v1981 = vpop.permute.xlu0 %1980
        %1982 = vrot.lane.b32.xlu0 %v894, 111
        %v1983 = vpop.permute.xlu0 %1982
        %1984 = vrot.lane.b32.xlu0 %v923, 111
        %v1985 = vpop.permute.xlu0 %1984
        %vm1986 = vcmp.lt.s32.totalorder %v964, 111
        %v1987 = vsel %vm1986, %v1983, %v1985
        %v1988 = vsel %vm1986, %v1981, %v1983
        %v1989 = vsel %vm1986, %v1979, %v1981
        %v1990 = vsel %vm1986, %v1977, %v1979
        %v1991 = vsel %vm1986, %v1975, %v1977
        %v1992 = vsel %vm1986, %v1973, %v1975
        %v1993 = vsel %vm1986, %v1971, %v1973
        %v1994 = vsel %vm1986, %v1969, %v1971
        %v1995 = vsel %vm1986, %v1967, %v1969
        %v1996 = vsel %vm1986, %v1965, %v1967
        %v1997 = vsel %vm1986, %v1963, %v1965
        %v1998 = vsel %vm1986, %v1961, %v1963
        %v1999 = vsel %vm1986, %v1959, %v1961
        %v2000 = vsel %vm1986, %v1957, %v1959
        %v2001 = vsel %vm1986, %v1955, %v1957
        %v2002 = vsel %vm1986, %v1985, %v1955
        %s2003 = scalar_lea.vmem %s6, 128
        %v2004 = vld [vmem:[%s2003] ss:$8 sm:$0xf]
        %v2005 = vld [vmem:[%s2003] ss:$8 sm:$0xf0]
        %v2006 = vor.u32 %v2004, %v2005
        %s2007 = scalar_lea.vmem %s6, 192
        %v2008 = vld [vmem:[%s2007] ss:$8 sm:$0xf]
        %v2009 = vld [vmem:[%s2007] ss:$8 sm:$0xf0]
        %v2010 = vor.u32 %v2008, %v2009
        %v2027 = vrot.slane %v2002, 7
        %v2028 = vrot.slane %v2001, 6
        %v2029 = vrot.slane %v2000, 5
        %v2030 = vrot.slane %v1999, 4
        %v2031 = vrot.slane %v1998, 3
        %v2032 = vrot.slane %v1997, 2
        %v2033 = vrot.slane %v1996, 1
        %v2034 = vrot.slane %v1994, 7
        %v2035 = vrot.slane %v1993, 6
        %v2036 = vrot.slane %v1992, 5
        %v2037 = vrot.slane %v1991, 4
        %v2038 = vrot.slane %v1990, 3
        %v2039 = vrot.slane %v1989, 2
        %v2040 = vrot.slane %v1988, 1
        %v2041 = vsel %vm1019, %v1987, %v2027
        %v2042 = vsel %vm1021, %v2028, %v2029
        %v2043 = vsel %vm1023, %v2041, %v2042
        %v2044 = vsel %vm1025, %v2030, %v2031
        %v2045 = vsel %vm1027, %v2032, %v2033
        %v2046 = vsel %vm1029, %v2044, %v2045
        %v2047 = vsel %vm1031, %v2043, %v2046
        %v2048 = vsel %vm1019, %v1995, %v2034
        %v2049 = vsel %vm1021, %v2035, %v2036
        %v2050 = vsel %vm1023, %v2048, %v2049
        %v2051 = vsel %vm1025, %v2037, %v2038
        %v2052 = vsel %vm1027, %v2039, %v2040
        %v2053 = vsel %vm1029, %v2051, %v2052
        %v2054 = vsel %vm1031, %v2050, %v2053
        %v2057 = vmul.f32 %v2006, %v2047
        %v2058 = vmul.f32 %v2010, %v2054
        %v2059 = vadd.f32 %v1952, %v2057
        %v2060 = vadd.f32 %v1953, %v2058
        %v2077 = vrot.slane %v488, 1
        %v2078 = vrot.slane %v517, 1
        %v2079 = vrot.slane %v546, 1
        %v2080 = vrot.slane %v575, 1
        %v2081 = vrot.slane %v604, 1
        %v2082 = vrot.slane %v633, 1
        %v2083 = vrot.slane %v662, 1
        %v2084 = vrot.slane %v691, 1
        %v2085 = vrot.slane %v720, 1
        %v2086 = vrot.slane %v749, 1
        %v2087 = vrot.slane %v778, 1
        %v2088 = vrot.slane %v807, 1
        %v2089 = vrot.slane %v836, 1
        %v2090 = vrot.slane %v865, 1
        %v2091 = vrot.slane %v894, 1
        %v2092 = vrot.slane %v923, 1
        %2109 = vrot.lane.b32.xlu0 %v2077, 17
        %v2110 = vpop.permute.xlu0 %2109
        %2111 = vrot.lane.b32.xlu0 %v2078, 17
        %v2112 = vpop.permute.xlu0 %2111
        %2113 = vrot.lane.b32.xlu0 %v2079, 17
        %v2114 = vpop.permute.xlu0 %2113
        %2115 = vrot.lane.b32.xlu0 %v2080, 17
        %v2116 = vpop.permute.xlu0 %2115
        %2117 = vrot.lane.b32.xlu0 %v2081, 17
        %v2118 = vpop.permute.xlu0 %2117
        %2119 = vrot.lane.b32.xlu0 %v2082, 17
        %v2120 = vpop.permute.xlu0 %2119
        %2121 = vrot.lane.b32.xlu0 %v2083, 17
        %v2122 = vpop.permute.xlu0 %2121
        %2123 = vrot.lane.b32.xlu0 %v2084, 17
        %v2124 = vpop.permute.xlu0 %2123
        %2125 = vrot.lane.b32.xlu0 %v2085, 17
        %v2126 = vpop.permute.xlu0 %2125
        %2127 = vrot.lane.b32.xlu0 %v2086, 17
        %v2128 = vpop.permute.xlu0 %2127
        %2129 = vrot.lane.b32.xlu0 %v2087, 17
        %v2130 = vpop.permute.xlu0 %2129
        %2131 = vrot.lane.b32.xlu0 %v2088, 17
        %v2132 = vpop.permute.xlu0 %2131
        %2133 = vrot.lane.b32.xlu0 %v2089, 17
        %v2134 = vpop.permute.xlu0 %2133
        %2135 = vrot.lane.b32.xlu0 %v2090, 17
        %v2136 = vpop.permute.xlu0 %2135
        %2137 = vrot.lane.b32.xlu0 %v2091, 17
        %v2138 = vpop.permute.xlu0 %2137
        %2139 = vrot.lane.b32.xlu0 %v2092, 17
        %v2140 = vpop.permute.xlu0 %2139
        %v2141 = vsel %vm965, %v2138, %v2140
        %v2142 = vsel %vm965, %v2136, %v2138
        %v2143 = vsel %vm965, %v2134, %v2136
        %v2144 = vsel %vm965, %v2132, %v2134
        %v2145 = vsel %vm965, %v2130, %v2132
        %v2146 = vsel %vm965, %v2128, %v2130
        %v2147 = vsel %vm965, %v2126, %v2128
        %v2148 = vsel %vm965, %v2124, %v2126
        %v2149 = vsel %vm965, %v2122, %v2124
        %v2150 = vsel %vm965, %v2120, %v2122
        %v2151 = vsel %vm965, %v2118, %v2120
        %v2152 = vsel %vm965, %v2116, %v2118
        %v2153 = vsel %vm965, %v2114, %v2116
        %v2154 = vsel %vm965, %v2112, %v2114
        %v2155 = vsel %vm965, %v2110, %v2112
        %v2156 = vsel %vm965, %v2140, %v2110
        %s2157 = scalar_lea.vmem %s6, 129
        %v2158 = vld [vmem:[%s2157] ss:$8 sm:$0xf]
        %v2159 = vld [vmem:[%s2157] ss:$8 sm:$0xf0]
        %v2160 = vor.u32 %v2158, %v2159
        %s2161 = scalar_lea.vmem %s6, 193
        %v2162 = vld [vmem:[%s2161] ss:$8 sm:$0xf]
        %v2163 = vld [vmem:[%s2161] ss:$8 sm:$0xf0]
        %v2164 = vor.u32 %v2162, %v2163
        %v2181 = vrot.slane %v2155, 7
        %v2182 = vrot.slane %v2154, 6
        %v2183 = vrot.slane %v2153, 5
        %v2184 = vrot.slane %v2152, 4
        %v2185 = vrot.slane %v2151, 3
        %v2186 = vrot.slane %v2150, 2
        %v2187 = vrot.slane %v2149, 1
        %v2188 = vrot.slane %v2147, 7
        %v2189 = vrot.slane %v2146, 6
        %v2190 = vrot.slane %v2145, 5
        %v2191 = vrot.slane %v2144, 4
        %v2192 = vrot.slane %v2143, 3
        %v2193 = vrot.slane %v2142, 2
        %v2194 = vrot.slane %v2141, 1
        %v2195 = vsel %vm1019, %v2156, %v2181
        %v2196 = vsel %vm1021, %v2182, %v2183
        %v2197 = vsel %vm1023, %v2195, %v2196
        %v2198 = vsel %vm1025, %v2184, %v2185
        %v2199 = vsel %vm1027, %v2186, %v2187
        %v2200 = vsel %vm1029, %v2198, %v2199
        %v2201 = vsel %vm1031, %v2197, %v2200
        %v2202 = vsel %vm1019, %v2148, %v2188
        %v2203 = vsel %vm1021, %v2189, %v2190
        %v2204 = vsel %vm1023, %v2202, %v2203
        %v2205 = vsel %vm1025, %v2191, %v2192
        %v2206 = vsel %vm1027, %v2193, %v2194
        %v2207 = vsel %vm1029, %v2205, %v2206
        %v2208 = vsel %vm1031, %v2204, %v2207
        %v2211 = vmul.f32 %v2160, %v2201
        %v2212 = vmul.f32 %v2164, %v2208
        %v2213 = vadd.f32 %v2059, %v2211
        %v2214 = vadd.f32 %v2060, %v2212
        %v2215 = vrot.slane %v488, 2
        %v2216 = vrot.slane %v517, 2
        %v2217 = vrot.slane %v546, 2
        %v2218 = vrot.slane %v575, 2
        %v2219 = vrot.slane %v604, 2
        %v2220 = vrot.slane %v633, 2
        %v2221 = vrot.slane %v662, 2
        %v2222 = vrot.slane %v691, 2
        %v2223 = vrot.slane %v720, 2
        %v2224 = vrot.slane %v749, 2
        %v2225 = vrot.slane %v778, 2
        %v2226 = vrot.slane %v807, 2
        %v2227 = vrot.slane %v836, 2
        %v2228 = vrot.slane %v865, 2
        %v2229 = vrot.slane %v894, 2
        %v2230 = vrot.slane %v923, 2
        %2247 = vrot.lane.b32.xlu0 %v2215, 16
        %v2248 = vpop.permute.xlu0 %2247
        %2249 = vrot.lane.b32.xlu0 %v2216, 16
        %v2250 = vpop.permute.xlu0 %2249
        %2251 = vrot.lane.b32.xlu0 %v2217, 16
        %v2252 = vpop.permute.xlu0 %2251
        %2253 = vrot.lane.b32.xlu0 %v2218, 16
        %v2254 = vpop.permute.xlu0 %2253
        %2255 = vrot.lane.b32.xlu0 %v2219, 16
        %v2256 = vpop.permute.xlu0 %2255
        %2257 = vrot.lane.b32.xlu0 %v2220, 16
        %v2258 = vpop.permute.xlu0 %2257
        %2259 = vrot.lane.b32.xlu0 %v2221, 16
        %v2260 = vpop.permute.xlu0 %2259
        %2261 = vrot.lane.b32.xlu0 %v2222, 16
        %v2262 = vpop.permute.xlu0 %2261
        %2263 = vrot.lane.b32.xlu0 %v2223, 16
        %v2264 = vpop.permute.xlu0 %2263
        %2265 = vrot.lane.b32.xlu0 %v2224, 16
        %v2266 = vpop.permute.xlu0 %2265
        %2267 = vrot.lane.b32.xlu0 %v2225, 16
        %v2268 = vpop.permute.xlu0 %2267
        %2269 = vrot.lane.b32.xlu0 %v2226, 16
        %v2270 = vpop.permute.xlu0 %2269
        %2271 = vrot.lane.b32.xlu0 %v2227, 16
        %v2272 = vpop.permute.xlu0 %2271
        %2273 = vrot.lane.b32.xlu0 %v2228, 16
        %v2274 = vpop.permute.xlu0 %2273
        %2275 = vrot.lane.b32.xlu0 %v2229, 16
        %v2276 = vpop.permute.xlu0 %2275
        %2277 = vrot.lane.b32.xlu0 %v2230, 16
        %v2278 = vpop.permute.xlu0 %2277
        %v2279 = vsel %vm1126, %v2276, %v2278
        %v2280 = vsel %vm1126, %v2274, %v2276
        %v2281 = vsel %vm1126, %v2272, %v2274
        %v2282 = vsel %vm1126, %v2270, %v2272
        %v2283 = vsel %vm1126, %v2268, %v2270
        %v2284 = vsel %vm1126, %v2266, %v2268
        %v2285 = vsel %vm1126, %v2264, %v2266
        %v2286 = vsel %vm1126, %v2262, %v2264
        %v2287 = vsel %vm1126, %v2260, %v2262
        %v2288 = vsel %vm1126, %v2258, %v2260
        %v2289 = vsel %vm1126, %v2256, %v2258
        %v2290 = vsel %vm1126, %v2254, %v2256
        %v2291 = vsel %vm1126, %v2252, %v2254
        %v2292 = vsel %vm1126, %v2250, %v2252
        %v2293 = vsel %vm1126, %v2248, %v2250
        %v2294 = vsel %vm1126, %v2278, %v2248
        %s2295 = scalar_lea.vmem %s6, 130
        %v2296 = vld [vmem:[%s2295] ss:$8 sm:$0xf]
        %v2297 = vld [vmem:[%s2295] ss:$8 sm:$0xf0]
        %v2298 = vor.u32 %v2296, %v2297
        %s2299 = scalar_lea.vmem %s6, 194
        %v2300 = vld [vmem:[%s2299] ss:$8 sm:$0xf]
        %v2301 = vld [vmem:[%s2299] ss:$8 sm:$0xf0]
        %v2302 = vor.u32 %v2300, %v2301
        %v2319 = vrot.slane %v2293, 7
        %v2320 = vrot.slane %v2292, 6
        %v2321 = vrot.slane %v2291, 5
        %v2322 = vrot.slane %v2290, 4
        %v2323 = vrot.slane %v2289, 3
        %v2324 = vrot.slane %v2288, 2
        %v2325 = vrot.slane %v2287, 1
        %v2326 = vrot.slane %v2285, 7
        %v2327 = vrot.slane %v2284, 6
        %v2328 = vrot.slane %v2283, 5
        %v2329 = vrot.slane %v2282, 4
        %v2330 = vrot.slane %v2281, 3
        %v2331 = vrot.slane %v2280, 2
        %v2332 = vrot.slane %v2279, 1
        %v2333 = vsel %vm1019, %v2294, %v2319
        %v2334 = vsel %vm1021, %v2320, %v2321
        %v2335 = vsel %vm1023, %v2333, %v2334
        %v2336 = vsel %vm1025, %v2322, %v2323
        %v2337 = vsel %vm1027, %v2324, %v2325
        %v2338 = vsel %vm1029, %v2336, %v2337
        %v2339 = vsel %vm1031, %v2335, %v2338
        %v2340 = vsel %vm1019, %v2286, %v2326
        %v2341 = vsel %vm1021, %v2327, %v2328
        %v2342 = vsel %vm1023, %v2340, %v2341
        %v2343 = vsel %vm1025, %v2329, %v2330
        %v2344 = vsel %vm1027, %v2331, %v2332
        %v2345 = vsel %vm1029, %v2343, %v2344
        %v2346 = vsel %vm1031, %v2342, %v2345
        %v2349 = vmul.f32 %v2298, %v2339
        %v2350 = vmul.f32 %v2302, %v2346
        %v2351 = vadd.f32 %v2213, %v2349
        %v2352 = vadd.f32 %v2214, %v2350
        %v2353 = vrot.slane %v488, 3
        %v2354 = vrot.slane %v517, 3
        %v2355 = vrot.slane %v546, 3
        %v2356 = vrot.slane %v575, 3
        %v2357 = vrot.slane %v604, 3
        %v2358 = vrot.slane %v633, 3
        %v2359 = vrot.slane %v662, 3
        %v2360 = vrot.slane %v691, 3
        %v2361 = vrot.slane %v720, 3
        %v2362 = vrot.slane %v749, 3
        %v2363 = vrot.slane %v778, 3
        %v2364 = vrot.slane %v807, 3
        %v2365 = vrot.slane %v836, 3
        %v2366 = vrot.slane %v865, 3
        %v2367 = vrot.slane %v894, 3
        %v2368 = vrot.slane %v923, 3
        %2385 = vrot.lane.b32.xlu0 %v2353, 15
        %v2386 = vpop.permute.xlu0 %2385
        %2387 = vrot.lane.b32.xlu0 %v2354, 15
        %v2388 = vpop.permute.xlu0 %2387
        %2389 = vrot.lane.b32.xlu0 %v2355, 15
        %v2390 = vpop.permute.xlu0 %2389
        %2391 = vrot.lane.b32.xlu0 %v2356, 15
        %v2392 = vpop.permute.xlu0 %2391
        %2393 = vrot.lane.b32.xlu0 %v2357, 15
        %v2394 = vpop.permute.xlu0 %2393
        %2395 = vrot.lane.b32.xlu0 %v2358, 15
        %v2396 = vpop.permute.xlu0 %2395
        %2397 = vrot.lane.b32.xlu0 %v2359, 15
        %v2398 = vpop.permute.xlu0 %2397
        %2399 = vrot.lane.b32.xlu0 %v2360, 15
        %v2400 = vpop.permute.xlu0 %2399
        %2401 = vrot.lane.b32.xlu0 %v2361, 15
        %v2402 = vpop.permute.xlu0 %2401
        %2403 = vrot.lane.b32.xlu0 %v2362, 15
        %v2404 = vpop.permute.xlu0 %2403
        %2405 = vrot.lane.b32.xlu0 %v2363, 15
        %v2406 = vpop.permute.xlu0 %2405
        %2407 = vrot.lane.b32.xlu0 %v2364, 15
        %v2408 = vpop.permute.xlu0 %2407
        %2409 = vrot.lane.b32.xlu0 %v2365, 15
        %v2410 = vpop.permute.xlu0 %2409
        %2411 = vrot.lane.b32.xlu0 %v2366, 15
        %v2412 = vpop.permute.xlu0 %2411
        %2413 = vrot.lane.b32.xlu0 %v2367, 15
        %v2414 = vpop.permute.xlu0 %2413
        %2415 = vrot.lane.b32.xlu0 %v2368, 15
        %v2416 = vpop.permute.xlu0 %2415
        %v2417 = vsel %vm1265, %v2414, %v2416
        %v2418 = vsel %vm1265, %v2412, %v2414
        %v2419 = vsel %vm1265, %v2410, %v2412
        %v2420 = vsel %vm1265, %v2408, %v2410
        %v2421 = vsel %vm1265, %v2406, %v2408
        %v2422 = vsel %vm1265, %v2404, %v2406
        %v2423 = vsel %vm1265, %v2402, %v2404
        %v2424 = vsel %vm1265, %v2400, %v2402
        %v2425 = vsel %vm1265, %v2398, %v2400
        %v2426 = vsel %vm1265, %v2396, %v2398
        %v2427 = vsel %vm1265, %v2394, %v2396
        %v2428 = vsel %vm1265, %v2392, %v2394
        %v2429 = vsel %vm1265, %v2390, %v2392
        %v2430 = vsel %vm1265, %v2388, %v2390
        %v2431 = vsel %vm1265, %v2386, %v2388
        %v2432 = vsel %vm1265, %v2416, %v2386
        %s2433 = scalar_lea.vmem %s6, 131
        %v2434 = vld [vmem:[%s2433] ss:$8 sm:$0xf]
        %v2435 = vld [vmem:[%s2433] ss:$8 sm:$0xf0]
        %v2436 = vor.u32 %v2434, %v2435
        %s2437 = scalar_lea.vmem %s6, 195
        %v2438 = vld [vmem:[%s2437] ss:$8 sm:$0xf]
        %v2439 = vld [vmem:[%s2437] ss:$8 sm:$0xf0]
        %v2440 = vor.u32 %v2438, %v2439
        %v2457 = vrot.slane %v2431, 7
        %v2458 = vrot.slane %v2430, 6
        %v2459 = vrot.slane %v2429, 5
        %v2460 = vrot.slane %v2428, 4
        %v2461 = vrot.slane %v2427, 3
        %v2462 = vrot.slane %v2426, 2
        %v2463 = vrot.slane %v2425, 1
        %v2464 = vrot.slane %v2423, 7
        %v2465 = vrot.slane %v2422, 6
        %v2466 = vrot.slane %v2421, 5
        %v2467 = vrot.slane %v2420, 4
        %v2468 = vrot.slane %v2419, 3
        %v2469 = vrot.slane %v2418, 2
        %v2470 = vrot.slane %v2417, 1
        %v2471 = vsel %vm1019, %v2432, %v2457
        %v2472 = vsel %vm1021, %v2458, %v2459
        %v2473 = vsel %vm1023, %v2471, %v2472
        %v2474 = vsel %vm1025, %v2460, %v2461
        %v2475 = vsel %vm1027, %v2462, %v2463
        %v2476 = vsel %vm1029, %v2474, %v2475
        %v2477 = vsel %vm1031, %v2473, %v2476
        %v2478 = vsel %vm1019, %v2424, %v2464
        %v2479 = vsel %vm1021, %v2465, %v2466
        %v2480 = vsel %vm1023, %v2478, %v2479
        %v2481 = vsel %vm1025, %v2467, %v2468
        %v2482 = vsel %vm1027, %v2469, %v2470
        %v2483 = vsel %vm1029, %v2481, %v2482
        %v2484 = vsel %vm1031, %v2480, %v2483
        %v2487 = vmul.f32 %v2436, %v2477
        %v2488 = vmul.f32 %v2440, %v2484
        %v2489 = vadd.f32 %v2351, %v2487
        %v2490 = vadd.f32 %v2352, %v2488
        %v2491 = vrot.slane %v488, 4
        %v2492 = vrot.slane %v517, 4
        %v2493 = vrot.slane %v546, 4
        %v2494 = vrot.slane %v575, 4
        %v2495 = vrot.slane %v604, 4
        %v2496 = vrot.slane %v633, 4
        %v2497 = vrot.slane %v662, 4
        %v2498 = vrot.slane %v691, 4
        %v2499 = vrot.slane %v720, 4
        %v2500 = vrot.slane %v749, 4
        %v2501 = vrot.slane %v778, 4
        %v2502 = vrot.slane %v807, 4
        %v2503 = vrot.slane %v836, 4
        %v2504 = vrot.slane %v865, 4
        %v2505 = vrot.slane %v894, 4
        %v2506 = vrot.slane %v923, 4
        %2523 = vrot.lane.b32.xlu0 %v2491, 1
        %v2524 = vpop.permute.xlu0 %2523
        %2525 = vrot.lane.b32.xlu0 %v2492, 1
        %v2526 = vpop.permute.xlu0 %2525
        %2527 = vrot.lane.b32.xlu0 %v2493, 1
        %v2528 = vpop.permute.xlu0 %2527
        %2529 = vrot.lane.b32.xlu0 %v2494, 1
        %v2530 = vpop.permute.xlu0 %2529
        %2531 = vrot.lane.b32.xlu0 %v2495, 1
        %v2532 = vpop.permute.xlu0 %2531
        %2533 = vrot.lane.b32.xlu0 %v2496, 1
        %v2534 = vpop.permute.xlu0 %2533
        %2535 = vrot.lane.b32.xlu0 %v2497, 1
        %v2536 = vpop.permute.xlu0 %2535
        %2537 = vrot.lane.b32.xlu0 %v2498, 1
        %v2538 = vpop.permute.xlu0 %2537
        %2539 = vrot.lane.b32.xlu0 %v2499, 1
        %v2540 = vpop.permute.xlu0 %2539
        %2541 = vrot.lane.b32.xlu0 %v2500, 1
        %v2542 = vpop.permute.xlu0 %2541
        %2543 = vrot.lane.b32.xlu0 %v2501, 1
        %v2544 = vpop.permute.xlu0 %2543
        %2545 = vrot.lane.b32.xlu0 %v2502, 1
        %v2546 = vpop.permute.xlu0 %2545
        %2547 = vrot.lane.b32.xlu0 %v2503, 1
        %v2548 = vpop.permute.xlu0 %2547
        %2549 = vrot.lane.b32.xlu0 %v2504, 1
        %v2550 = vpop.permute.xlu0 %2549
        %2551 = vrot.lane.b32.xlu0 %v2505, 1
        %v2552 = vpop.permute.xlu0 %2551
        %2553 = vrot.lane.b32.xlu0 %v2506, 1
        %v2554 = vpop.permute.xlu0 %2553
        %v2555 = vsel %vm1404, %v2552, %v2554
        %v2556 = vsel %vm1404, %v2550, %v2552
        %v2557 = vsel %vm1404, %v2548, %v2550
        %v2558 = vsel %vm1404, %v2546, %v2548
        %v2559 = vsel %vm1404, %v2544, %v2546
        %v2560 = vsel %vm1404, %v2542, %v2544
        %v2561 = vsel %vm1404, %v2540, %v2542
        %v2562 = vsel %vm1404, %v2538, %v2540
        %v2563 = vsel %vm1404, %v2536, %v2538
        %v2564 = vsel %vm1404, %v2534, %v2536
        %v2565 = vsel %vm1404, %v2532, %v2534
        %v2566 = vsel %vm1404, %v2530, %v2532
        %v2567 = vsel %vm1404, %v2528, %v2530
        %v2568 = vsel %vm1404, %v2526, %v2528
        %v2569 = vsel %vm1404, %v2524, %v2526
        %v2570 = vsel %vm1404, %v2554, %v2524
        %s2571 = scalar_lea.vmem %s6, 132
        %v2572 = vld [vmem:[%s2571] ss:$8 sm:$0xf]
        %v2573 = vld [vmem:[%s2571] ss:$8 sm:$0xf0]
        %v2574 = vor.u32 %v2572, %v2573
        %s2575 = scalar_lea.vmem %s6, 196
        %v2576 = vld [vmem:[%s2575] ss:$8 sm:$0xf]
        %v2577 = vld [vmem:[%s2575] ss:$8 sm:$0xf0]
        %v2578 = vor.u32 %v2576, %v2577
        %v2595 = vrot.slane %v2569, 7
        %v2596 = vrot.slane %v2568, 6
        %v2597 = vrot.slane %v2567, 5
        %v2598 = vrot.slane %v2566, 4
        %v2599 = vrot.slane %v2565, 3
        %v2600 = vrot.slane %v2564, 2
        %v2601 = vrot.slane %v2563, 1
        %v2602 = vrot.slane %v2561, 7
        %v2603 = vrot.slane %v2560, 6
        %v2604 = vrot.slane %v2559, 5
        %v2605 = vrot.slane %v2558, 4
        %v2606 = vrot.slane %v2557, 3
        %v2607 = vrot.slane %v2556, 2
        %v2608 = vrot.slane %v2555, 1
        %v2609 = vsel %vm1019, %v2570, %v2595
        %v2610 = vsel %vm1021, %v2596, %v2597
        %v2611 = vsel %vm1023, %v2609, %v2610
        %v2612 = vsel %vm1025, %v2598, %v2599
        %v2613 = vsel %vm1027, %v2600, %v2601
        %v2614 = vsel %vm1029, %v2612, %v2613
        %v2615 = vsel %vm1031, %v2611, %v2614
        %v2616 = vsel %vm1019, %v2562, %v2602
        %v2617 = vsel %vm1021, %v2603, %v2604
        %v2618 = vsel %vm1023, %v2616, %v2617
        %v2619 = vsel %vm1025, %v2605, %v2606
        %v2620 = vsel %vm1027, %v2607, %v2608
        %v2621 = vsel %vm1029, %v2619, %v2620
        %v2622 = vsel %vm1031, %v2618, %v2621
        %v2625 = vmul.f32 %v2574, %v2615
        %v2626 = vmul.f32 %v2578, %v2622
        %v2627 = vadd.f32 %v2489, %v2625
        %v2628 = vadd.f32 %v2490, %v2626
        %v2629 = vrot.slane %v488, 5
        %v2630 = vrot.slane %v517, 5
        %v2631 = vrot.slane %v546, 5
        %v2632 = vrot.slane %v575, 5
        %v2633 = vrot.slane %v604, 5
        %v2634 = vrot.slane %v633, 5
        %v2635 = vrot.slane %v662, 5
        %v2636 = vrot.slane %v691, 5
        %v2637 = vrot.slane %v720, 5
        %v2638 = vrot.slane %v749, 5
        %v2639 = vrot.slane %v778, 5
        %v2640 = vrot.slane %v807, 5
        %v2641 = vrot.slane %v836, 5
        %v2642 = vrot.slane %v865, 5
        %v2643 = vrot.slane %v894, 5
        %v2644 = vrot.slane %v923, 5
        %s2645 = scalar_lea.vmem %s6, 133
        %v2646 = vld [vmem:[%s2645] ss:$8 sm:$0xf]
        %v2647 = vld [vmem:[%s2645] ss:$8 sm:$0xf0]
        %v2648 = vor.u32 %v2646, %v2647
        %s2649 = scalar_lea.vmem %s6, 197
        %v2650 = vld [vmem:[%s2649] ss:$8 sm:$0xf]
        %v2651 = vld [vmem:[%s2649] ss:$8 sm:$0xf0]
        %v2652 = vor.u32 %v2650, %v2651
        %v2653 = vrot.slane %v2630, 7
        %v2654 = vrot.slane %v2631, 6
        %v2655 = vrot.slane %v2632, 5
        %v2656 = vrot.slane %v2633, 4
        %v2657 = vrot.slane %v2634, 3
        %v2658 = vrot.slane %v2635, 2
        %v2659 = vrot.slane %v2636, 1
        %v2660 = vrot.slane %v2638, 7
        %v2661 = vrot.slane %v2639, 6
        %v2662 = vrot.slane %v2640, 5
        %v2663 = vrot.slane %v2641, 4
        %v2664 = vrot.slane %v2642, 3
        %v2665 = vrot.slane %v2643, 2
        %v2666 = vrot.slane %v2644, 1
        %v2667 = vsel %vm1019, %v2629, %v2653
        %v2668 = vsel %vm1021, %v2654, %v2655
        %v2669 = vsel %vm1023, %v2667, %v2668
        %v2670 = vsel %vm1025, %v2656, %v2657
        %v2671 = vsel %vm1027, %v2658, %v2659
        %v2672 = vsel %vm1029, %v2670, %v2671
        %v2673 = vsel %vm1031, %v2669, %v2672
        %v2674 = vsel %vm1019, %v2637, %v2660
        %v2675 = vsel %vm1021, %v2661, %v2662
        %v2676 = vsel %vm1023, %v2674, %v2675
        %v2677 = vsel %vm1025, %v2663, %v2664
        %v2678 = vsel %vm1027, %v2665, %v2666
        %v2679 = vsel %vm1029, %v2677, %v2678
        %v2680 = vsel %vm1031, %v2676, %v2679
        %v2683 = vmul.f32 %v2648, %v2673
        %v2684 = vmul.f32 %v2652, %v2680
        %v2685 = vadd.f32 %v2627, %v2683
        %v2686 = vadd.f32 %v2628, %v2684
        %v2687 = vrot.slane %v488, 6
        %v2688 = vrot.slane %v517, 6
        %v2689 = vrot.slane %v546, 6
        %v2690 = vrot.slane %v575, 6
        %v2691 = vrot.slane %v604, 6
        %v2692 = vrot.slane %v633, 6
        %v2693 = vrot.slane %v662, 6
        %v2694 = vrot.slane %v691, 6
        %v2695 = vrot.slane %v720, 6
        %v2696 = vrot.slane %v749, 6
        %v2697 = vrot.slane %v778, 6
        %v2698 = vrot.slane %v807, 6
        %v2699 = vrot.slane %v836, 6
        %v2700 = vrot.slane %v865, 6
        %v2701 = vrot.slane %v894, 6
        %v2702 = vrot.slane %v923, 6
        %2719 = vrot.lane.b32.xlu0 %v2687, 127
        %v2720 = vpop.permute.xlu0 %2719
        %2721 = vrot.lane.b32.xlu0 %v2688, 127
        %v2722 = vpop.permute.xlu0 %2721
        %2723 = vrot.lane.b32.xlu0 %v2689, 127
        %v2724 = vpop.permute.xlu0 %2723
        %2725 = vrot.lane.b32.xlu0 %v2690, 127
        %v2726 = vpop.permute.xlu0 %2725
        %2727 = vrot.lane.b32.xlu0 %v2691, 127
        %v2728 = vpop.permute.xlu0 %2727
        %2729 = vrot.lane.b32.xlu0 %v2692, 127
        %v2730 = vpop.permute.xlu0 %2729
        %2731 = vrot.lane.b32.xlu0 %v2693, 127
        %v2732 = vpop.permute.xlu0 %2731
        %2733 = vrot.lane.b32.xlu0 %v2694, 127
        %v2734 = vpop.permute.xlu0 %2733
        %2735 = vrot.lane.b32.xlu0 %v2695, 127
        %v2736 = vpop.permute.xlu0 %2735
        %2737 = vrot.lane.b32.xlu0 %v2696, 127
        %v2738 = vpop.permute.xlu0 %2737
        %2739 = vrot.lane.b32.xlu0 %v2697, 127
        %v2740 = vpop.permute.xlu0 %2739
        %2741 = vrot.lane.b32.xlu0 %v2698, 127
        %v2742 = vpop.permute.xlu0 %2741
        %2743 = vrot.lane.b32.xlu0 %v2699, 127
        %v2744 = vpop.permute.xlu0 %2743
        %2745 = vrot.lane.b32.xlu0 %v2700, 127
        %v2746 = vpop.permute.xlu0 %2745
        %2747 = vrot.lane.b32.xlu0 %v2701, 127
        %v2748 = vpop.permute.xlu0 %2747
        %2749 = vrot.lane.b32.xlu0 %v2702, 127
        %v2750 = vpop.permute.xlu0 %2749
        %v2751 = vsel %vm1601, %v2748, %v2750
        %v2752 = vsel %vm1601, %v2746, %v2748
        %v2753 = vsel %vm1601, %v2744, %v2746
        %v2754 = vsel %vm1601, %v2742, %v2744
        %v2755 = vsel %vm1601, %v2740, %v2742
        %v2756 = vsel %vm1601, %v2738, %v2740
        %v2757 = vsel %vm1601, %v2736, %v2738
        %v2758 = vsel %vm1601, %v2734, %v2736
        %v2759 = vsel %vm1601, %v2732, %v2734
        %v2760 = vsel %vm1601, %v2730, %v2732
        %v2761 = vsel %vm1601, %v2728, %v2730
        %v2762 = vsel %vm1601, %v2726, %v2728
        %v2763 = vsel %vm1601, %v2724, %v2726
        %v2764 = vsel %vm1601, %v2722, %v2724
        %v2765 = vsel %vm1601, %v2720, %v2722
        %v2766 = vsel %vm1601, %v2750, %v2720
        %s2767 = scalar_lea.vmem %s6, 134
        %v2768 = vld [vmem:[%s2767] ss:$8 sm:$0xf]
        %v2769 = vld [vmem:[%s2767] ss:$8 sm:$0xf0]
        %v2770 = vor.u32 %v2768, %v2769
        %s2771 = scalar_lea.vmem %s6, 198
        %v2772 = vld [vmem:[%s2771] ss:$8 sm:$0xf]
        %v2773 = vld [vmem:[%s2771] ss:$8 sm:$0xf0]
        %v2774 = vor.u32 %v2772, %v2773
        %v2791 = vrot.slane %v2764, 7
        %v2792 = vrot.slane %v2763, 6
        %v2793 = vrot.slane %v2762, 5
        %v2794 = vrot.slane %v2761, 4
        %v2795 = vrot.slane %v2760, 3
        %v2796 = vrot.slane %v2759, 2
        %v2797 = vrot.slane %v2758, 1
        %v2798 = vrot.slane %v2756, 7
        %v2799 = vrot.slane %v2755, 6
        %v2800 = vrot.slane %v2754, 5
        %v2801 = vrot.slane %v2753, 4
        %v2802 = vrot.slane %v2752, 3
        %v2803 = vrot.slane %v2751, 2
        %v2804 = vrot.slane %v2766, 1
        %v2805 = vsel %vm1019, %v2765, %v2791
        %v2806 = vsel %vm1021, %v2792, %v2793
        %v2807 = vsel %vm1023, %v2805, %v2806
        %v2808 = vsel %vm1025, %v2794, %v2795
        %v2809 = vsel %vm1027, %v2796, %v2797
        %v2810 = vsel %vm1029, %v2808, %v2809
        %v2811 = vsel %vm1031, %v2807, %v2810
        %v2812 = vsel %vm1019, %v2757, %v2798
        %v2813 = vsel %vm1021, %v2799, %v2800
        %v2814 = vsel %vm1023, %v2812, %v2813
        %v2815 = vsel %vm1025, %v2801, %v2802
        %v2816 = vsel %vm1027, %v2803, %v2804
        %v2817 = vsel %vm1029, %v2815, %v2816
        %v2818 = vsel %vm1031, %v2814, %v2817
        %v2821 = vmul.f32 %v2770, %v2811
        %v2822 = vmul.f32 %v2774, %v2818
        %v2823 = vadd.f32 %v2685, %v2821
        %v2824 = vadd.f32 %v2686, %v2822
        %v2825 = vrot.slane %v488, 7
        %v2826 = vrot.slane %v517, 7
        %v2827 = vrot.slane %v546, 7
        %v2828 = vrot.slane %v575, 7
        %v2829 = vrot.slane %v604, 7
        %v2830 = vrot.slane %v633, 7
        %v2831 = vrot.slane %v662, 7
        %v2832 = vrot.slane %v691, 7
        %v2833 = vrot.slane %v720, 7
        %v2834 = vrot.slane %v749, 7
        %v2835 = vrot.slane %v778, 7
        %v2836 = vrot.slane %v807, 7
        %v2837 = vrot.slane %v836, 7
        %v2838 = vrot.slane %v865, 7
        %v2839 = vrot.slane %v894, 7
        %v2840 = vrot.slane %v923, 7
        %2857 = vrot.lane.b32.xlu0 %v2825, 113
        %v2858 = vpop.permute.xlu0 %2857
        %2859 = vrot.lane.b32.xlu0 %v2826, 113
        %v2860 = vpop.permute.xlu0 %2859
        %2861 = vrot.lane.b32.xlu0 %v2827, 113
        %v2862 = vpop.permute.xlu0 %2861
        %2863 = vrot.lane.b32.xlu0 %v2828, 113
        %v2864 = vpop.permute.xlu0 %2863
        %2865 = vrot.lane.b32.xlu0 %v2829, 113
        %v2866 = vpop.permute.xlu0 %2865
        %2867 = vrot.lane.b32.xlu0 %v2830, 113
        %v2868 = vpop.permute.xlu0 %2867
        %2869 = vrot.lane.b32.xlu0 %v2831, 113
        %v2870 = vpop.permute.xlu0 %2869
        %2871 = vrot.lane.b32.xlu0 %v2832, 113
        %v2872 = vpop.permute.xlu0 %2871
        %2873 = vrot.lane.b32.xlu0 %v2833, 113
        %v2874 = vpop.permute.xlu0 %2873
        %2875 = vrot.lane.b32.xlu0 %v2834, 113
        %v2876 = vpop.permute.xlu0 %2875
        %2877 = vrot.lane.b32.xlu0 %v2835, 113
        %v2878 = vpop.permute.xlu0 %2877
        %2879 = vrot.lane.b32.xlu0 %v2836, 113
        %v2880 = vpop.permute.xlu0 %2879
        %2881 = vrot.lane.b32.xlu0 %v2837, 113
        %v2882 = vpop.permute.xlu0 %2881
        %2883 = vrot.lane.b32.xlu0 %v2838, 113
        %v2884 = vpop.permute.xlu0 %2883
        %2885 = vrot.lane.b32.xlu0 %v2839, 113
        %v2886 = vpop.permute.xlu0 %2885
        %2887 = vrot.lane.b32.xlu0 %v2840, 113
        %v2888 = vpop.permute.xlu0 %2887
        %v2889 = vsel %vm1740, %v2886, %v2888
        %v2890 = vsel %vm1740, %v2884, %v2886
        %v2891 = vsel %vm1740, %v2882, %v2884
        %v2892 = vsel %vm1740, %v2880, %v2882
        %v2893 = vsel %vm1740, %v2878, %v2880
        %v2894 = vsel %vm1740, %v2876, %v2878
        %v2895 = vsel %vm1740, %v2874, %v2876
        %v2896 = vsel %vm1740, %v2872, %v2874
        %v2897 = vsel %vm1740, %v2870, %v2872
        %v2898 = vsel %vm1740, %v2868, %v2870
        %v2899 = vsel %vm1740, %v2866, %v2868
        %v2900 = vsel %vm1740, %v2864, %v2866
        %v2901 = vsel %vm1740, %v2862, %v2864
        %v2902 = vsel %vm1740, %v2860, %v2862
        %v2903 = vsel %vm1740, %v2858, %v2860
        %v2904 = vsel %vm1740, %v2888, %v2858
        %s2905 = scalar_lea.vmem %s6, 135
        %v2906 = vld [vmem:[%s2905] ss:$8 sm:$0xf]
        %v2907 = vld [vmem:[%s2905] ss:$8 sm:$0xf0]
        %v2908 = vor.u32 %v2906, %v2907
        %s2909 = scalar_lea.vmem %s6, 199
        %v2910 = vld [vmem:[%s2909] ss:$8 sm:$0xf]
        %v2911 = vld [vmem:[%s2909] ss:$8 sm:$0xf0]
        %v2912 = vor.u32 %v2910, %v2911
        %v2929 = vrot.slane %v2902, 7
        %v2930 = vrot.slane %v2901, 6
        %v2931 = vrot.slane %v2900, 5
        %v2932 = vrot.slane %v2899, 4
        %v2933 = vrot.slane %v2898, 3
        %v2934 = vrot.slane %v2897, 2
        %v2935 = vrot.slane %v2896, 1
        %v2936 = vrot.slane %v2894, 7
        %v2937 = vrot.slane %v2893, 6
        %v2938 = vrot.slane %v2892, 5
        %v2939 = vrot.slane %v2891, 4
        %v2940 = vrot.slane %v2890, 3
        %v2941 = vrot.slane %v2889, 2
        %v2942 = vrot.slane %v2904, 1
        %v2943 = vsel %vm1019, %v2903, %v2929
        %v2944 = vsel %vm1021, %v2930, %v2931
        %v2945 = vsel %vm1023, %v2943, %v2944
        %v2946 = vsel %vm1025, %v2932, %v2933
        %v2947 = vsel %vm1027, %v2934, %v2935
        %v2948 = vsel %vm1029, %v2946, %v2947
        %v2949 = vsel %vm1031, %v2945, %v2948
        %v2950 = vsel %vm1019, %v2895, %v2936
        %v2951 = vsel %vm1021, %v2937, %v2938
        %v2952 = vsel %vm1023, %v2950, %v2951
        %v2953 = vsel %vm1025, %v2939, %v2940
        %v2954 = vsel %vm1027, %v2941, %v2942
        %v2955 = vsel %vm1029, %v2953, %v2954
        %v2956 = vsel %vm1031, %v2952, %v2955
        %v2959 = vmul.f32 %v2908, %v2949
        %v2960 = vmul.f32 %v2912, %v2956
        %v2961 = vadd.f32 %v2823, %v2959
        %v2962 = vadd.f32 %v2824, %v2960
        %2963 = vrot.lane.b32.xlu0 %v491, 112
        %v2964 = vpop.permute.xlu0 %2963
        %2965 = vrot.lane.b32.xlu0 %v520, 112
        %v2966 = vpop.permute.xlu0 %2965
        %2967 = vrot.lane.b32.xlu0 %v549, 112
        %v2968 = vpop.permute.xlu0 %2967
        %2969 = vrot.lane.b32.xlu0 %v578, 112
        %v2970 = vpop.permute.xlu0 %2969
        %2971 = vrot.lane.b32.xlu0 %v607, 112
        %v2972 = vpop.permute.xlu0 %2971
        %2973 = vrot.lane.b32.xlu0 %v636, 112
        %v2974 = vpop.permute.xlu0 %2973
        %2975 = vrot.lane.b32.xlu0 %v665, 112
        %v2976 = vpop.permute.xlu0 %2975
        %2977 = vrot.lane.b32.xlu0 %v694, 112
        %v2978 = vpop.permute.xlu0 %2977
        %2979 = vrot.lane.b32.xlu0 %v723, 112
        %v2980 = vpop.permute.xlu0 %2979
        %2981 = vrot.lane.b32.xlu0 %v752, 112
        %v2982 = vpop.permute.xlu0 %2981
        %2983 = vrot.lane.b32.xlu0 %v781, 112
        %v2984 = vpop.permute.xlu0 %2983
        %2985 = vrot.lane.b32.xlu0 %v810, 112
        %v2986 = vpop.permute.xlu0 %2985
        %2987 = vrot.lane.b32.xlu0 %v839, 112
        %v2988 = vpop.permute.xlu0 %2987
        %2989 = vrot.lane.b32.xlu0 %v868, 112
        %v2990 = vpop.permute.xlu0 %2989
        %2991 = vrot.lane.b32.xlu0 %v897, 112
        %v2992 = vpop.permute.xlu0 %2991
        %2993 = vrot.lane.b32.xlu0 %v926, 112
        %v2994 = vpop.permute.xlu0 %2993
        %v2995 = vsel %vm1879, %v2992, %v2994
        %v2996 = vsel %vm1879, %v2990, %v2992
        %v2997 = vsel %vm1879, %v2988, %v2990
        %v2998 = vsel %vm1879, %v2986, %v2988
        %v2999 = vsel %vm1879, %v2984, %v2986
        %v3000 = vsel %vm1879, %v2982, %v2984
        %v3001 = vsel %vm1879, %v2980, %v2982
        %v3002 = vsel %vm1879, %v2978, %v2980
        %v3003 = vsel %vm1879, %v2976, %v2978
        %v3004 = vsel %vm1879, %v2974, %v2976
        %v3005 = vsel %vm1879, %v2972, %v2974
        %v3006 = vsel %vm1879, %v2970, %v2972
        %v3007 = vsel %vm1879, %v2968, %v2970
        %v3008 = vsel %vm1879, %v2966, %v2968
        %v3009 = vsel %vm1879, %v2964, %v2966
        %v3010 = vsel %vm1879, %v2994, %v2964
        %s3011 = scalar_lea.vmem %s6, 256
        %v3012 = vld [vmem:[%s3011] ss:$8 sm:$0xf]
        %v3013 = vld [vmem:[%s3011] ss:$8 sm:$0xf0]
        %v3014 = vor.u32 %v3012, %v3013
        %s3015 = scalar_lea.vmem %s6, 320
        %v3016 = vld [vmem:[%s3015] ss:$8 sm:$0xf]
        %v3017 = vld [vmem:[%s3015] ss:$8 sm:$0xf0]
        %v3018 = vor.u32 %v3016, %v3017
        %v3035 = vrot.slane %v3008, 7
        %v3036 = vrot.slane %v3007, 6
        %v3037 = vrot.slane %v3006, 5
        %v3038 = vrot.slane %v3005, 4
        %v3039 = vrot.slane %v3004, 3
        %v3040 = vrot.slane %v3003, 2
        %v3041 = vrot.slane %v3002, 1
        %v3042 = vrot.slane %v3000, 7
        %v3043 = vrot.slane %v2999, 6
        %v3044 = vrot.slane %v2998, 5
        %v3045 = vrot.slane %v2997, 4
        %v3046 = vrot.slane %v2996, 3
        %v3047 = vrot.slane %v2995, 2
        %v3048 = vrot.slane %v3010, 1
        %v3049 = vsel %vm1019, %v3009, %v3035
        %v3050 = vsel %vm1021, %v3036, %v3037
        %v3051 = vsel %vm1023, %v3049, %v3050
        %v3052 = vsel %vm1025, %v3038, %v3039
        %v3053 = vsel %vm1027, %v3040, %v3041
        %v3054 = vsel %vm1029, %v3052, %v3053
        %v3055 = vsel %vm1031, %v3051, %v3054
        %v3056 = vsel %vm1019, %v3001, %v3042
        %v3057 = vsel %vm1021, %v3043, %v3044
        %v3058 = vsel %vm1023, %v3056, %v3057
        %v3059 = vsel %vm1025, %v3045, %v3046
        %v3060 = vsel %vm1027, %v3047, %v3048
        %v3061 = vsel %vm1029, %v3059, %v3060
        %v3062 = vsel %vm1031, %v3058, %v3061
        %v3065 = vmul.f32 %v3014, %v3055
        %v3066 = vmul.f32 %v3018, %v3062
        %v3067 = vadd.f32 %v2961, %v3065
        %v3068 = vadd.f32 %v2962, %v3066
        %v3085 = vrot.slane %v491, 1
        %v3086 = vrot.slane %v520, 1
        %v3087 = vrot.slane %v549, 1
        %v3088 = vrot.slane %v578, 1
        %v3089 = vrot.slane %v607, 1
        %v3090 = vrot.slane %v636, 1
        %v3091 = vrot.slane %v665, 1
        %v3092 = vrot.slane %v694, 1
        %v3093 = vrot.slane %v723, 1
        %v3094 = vrot.slane %v752, 1
        %v3095 = vrot.slane %v781, 1
        %v3096 = vrot.slane %v810, 1
        %v3097 = vrot.slane %v839, 1
        %v3098 = vrot.slane %v868, 1
        %v3099 = vrot.slane %v897, 1
        %v3100 = vrot.slane %v926, 1
        %3117 = vrot.lane.b32.xlu0 %v3085, 111
        %v3118 = vpop.permute.xlu0 %3117
        %3119 = vrot.lane.b32.xlu0 %v3086, 111
        %v3120 = vpop.permute.xlu0 %3119
        %3121 = vrot.lane.b32.xlu0 %v3087, 111
        %v3122 = vpop.permute.xlu0 %3121
        %3123 = vrot.lane.b32.xlu0 %v3088, 111
        %v3124 = vpop.permute.xlu0 %3123
        %3125 = vrot.lane.b32.xlu0 %v3089, 111
        %v3126 = vpop.permute.xlu0 %3125
        %3127 = vrot.lane.b32.xlu0 %v3090, 111
        %v3128 = vpop.permute.xlu0 %3127
        %3129 = vrot.lane.b32.xlu0 %v3091, 111
        %v3130 = vpop.permute.xlu0 %3129
        %3131 = vrot.lane.b32.xlu0 %v3092, 111
        %v3132 = vpop.permute.xlu0 %3131
        %3133 = vrot.lane.b32.xlu0 %v3093, 111
        %v3134 = vpop.permute.xlu0 %3133
        %3135 = vrot.lane.b32.xlu0 %v3094, 111
        %v3136 = vpop.permute.xlu0 %3135
        %3137 = vrot.lane.b32.xlu0 %v3095, 111
        %v3138 = vpop.permute.xlu0 %3137
        %3139 = vrot.lane.b32.xlu0 %v3096, 111
        %v3140 = vpop.permute.xlu0 %3139
        %3141 = vrot.lane.b32.xlu0 %v3097, 111
        %v3142 = vpop.permute.xlu0 %3141
        %3143 = vrot.lane.b32.xlu0 %v3098, 111
        %v3144 = vpop.permute.xlu0 %3143
        %3145 = vrot.lane.b32.xlu0 %v3099, 111
        %v3146 = vpop.permute.xlu0 %3145
        %3147 = vrot.lane.b32.xlu0 %v3100, 111
        %v3148 = vpop.permute.xlu0 %3147
        %v3149 = vsel %vm1986, %v3146, %v3148
        %v3150 = vsel %vm1986, %v3144, %v3146
        %v3151 = vsel %vm1986, %v3142, %v3144
        %v3152 = vsel %vm1986, %v3140, %v3142
        %v3153 = vsel %vm1986, %v3138, %v3140
        %v3154 = vsel %vm1986, %v3136, %v3138
        %v3155 = vsel %vm1986, %v3134, %v3136
        %v3156 = vsel %vm1986, %v3132, %v3134
        %v3157 = vsel %vm1986, %v3130, %v3132
        %v3158 = vsel %vm1986, %v3128, %v3130
        %v3159 = vsel %vm1986, %v3126, %v3128
        %v3160 = vsel %vm1986, %v3124, %v3126
        %v3161 = vsel %vm1986, %v3122, %v3124
        %v3162 = vsel %vm1986, %v3120, %v3122
        %v3163 = vsel %vm1986, %v3118, %v3120
        %v3164 = vsel %vm1986, %v3148, %v3118
        %s3165 = scalar_lea.vmem %s6, 257
        %v3166 = vld [vmem:[%s3165] ss:$8 sm:$0xf]
        %v3167 = vld [vmem:[%s3165] ss:$8 sm:$0xf0]
        %v3168 = vor.u32 %v3166, %v3167
        %s3169 = scalar_lea.vmem %s6, 321
        %v3170 = vld [vmem:[%s3169] ss:$8 sm:$0xf]
        %v3171 = vld [vmem:[%s3169] ss:$8 sm:$0xf0]
        %v3172 = vor.u32 %v3170, %v3171
        %v3189 = vrot.slane %v3162, 7
        %v3190 = vrot.slane %v3161, 6
        %v3191 = vrot.slane %v3160, 5
        %v3192 = vrot.slane %v3159, 4
        %v3193 = vrot.slane %v3158, 3
        %v3194 = vrot.slane %v3157, 2
        %v3195 = vrot.slane %v3156, 1
        %v3196 = vrot.slane %v3154, 7
        %v3197 = vrot.slane %v3153, 6
        %v3198 = vrot.slane %v3152, 5
        %v3199 = vrot.slane %v3151, 4
        %v3200 = vrot.slane %v3150, 3
        %v3201 = vrot.slane %v3149, 2
        %v3202 = vrot.slane %v3164, 1
        %v3203 = vsel %vm1019, %v3163, %v3189
        %v3204 = vsel %vm1021, %v3190, %v3191
        %v3205 = vsel %vm1023, %v3203, %v3204
        %v3206 = vsel %vm1025, %v3192, %v3193
        %v3207 = vsel %vm1027, %v3194, %v3195
        %v3208 = vsel %vm1029, %v3206, %v3207
        %v3209 = vsel %vm1031, %v3205, %v3208
        %v3210 = vsel %vm1019, %v3155, %v3196
        %v3211 = vsel %vm1021, %v3197, %v3198
        %v3212 = vsel %vm1023, %v3210, %v3211
        %v3213 = vsel %vm1025, %v3199, %v3200
        %v3214 = vsel %vm1027, %v3201, %v3202
        %v3215 = vsel %vm1029, %v3213, %v3214
        %v3216 = vsel %vm1031, %v3212, %v3215
        %v3219 = vmul.f32 %v3168, %v3209
        %v3220 = vmul.f32 %v3172, %v3216
        %v3221 = vadd.f32 %v3067, %v3219
        %v3222 = vadd.f32 %v3068, %v3220
        %v3223 = vrot.slane %v491, 2
        %v3224 = vrot.slane %v520, 2
        %v3225 = vrot.slane %v549, 2
        %v3226 = vrot.slane %v578, 2
        %v3227 = vrot.slane %v607, 2
        %v3228 = vrot.slane %v636, 2
        %v3229 = vrot.slane %v665, 2
        %v3230 = vrot.slane %v694, 2
        %v3231 = vrot.slane %v723, 2
        %v3232 = vrot.slane %v752, 2
        %v3233 = vrot.slane %v781, 2
        %v3234 = vrot.slane %v810, 2
        %v3235 = vrot.slane %v839, 2
        %v3236 = vrot.slane %v868, 2
        %v3237 = vrot.slane %v897, 2
        %v3238 = vrot.slane %v926, 2
        %3255 = vrot.lane.b32.xlu0 %v3223, 17
        %v3256 = vpop.permute.xlu0 %3255
        %3257 = vrot.lane.b32.xlu0 %v3224, 17
        %v3258 = vpop.permute.xlu0 %3257
        %3259 = vrot.lane.b32.xlu0 %v3225, 17
        %v3260 = vpop.permute.xlu0 %3259
        %3261 = vrot.lane.b32.xlu0 %v3226, 17
        %v3262 = vpop.permute.xlu0 %3261
        %3263 = vrot.lane.b32.xlu0 %v3227, 17
        %v3264 = vpop.permute.xlu0 %3263
        %3265 = vrot.lane.b32.xlu0 %v3228, 17
        %v3266 = vpop.permute.xlu0 %3265
        %3267 = vrot.lane.b32.xlu0 %v3229, 17
        %v3268 = vpop.permute.xlu0 %3267
        %3269 = vrot.lane.b32.xlu0 %v3230, 17
        %v3270 = vpop.permute.xlu0 %3269
        %3271 = vrot.lane.b32.xlu0 %v3231, 17
        %v3272 = vpop.permute.xlu0 %3271
        %3273 = vrot.lane.b32.xlu0 %v3232, 17
        %v3274 = vpop.permute.xlu0 %3273
        %3275 = vrot.lane.b32.xlu0 %v3233, 17
        %v3276 = vpop.permute.xlu0 %3275
        %3277 = vrot.lane.b32.xlu0 %v3234, 17
        %v3278 = vpop.permute.xlu0 %3277
        %3279 = vrot.lane.b32.xlu0 %v3235, 17
        %v3280 = vpop.permute.xlu0 %3279
        %3281 = vrot.lane.b32.xlu0 %v3236, 17
        %v3282 = vpop.permute.xlu0 %3281
        %3283 = vrot.lane.b32.xlu0 %v3237, 17
        %v3284 = vpop.permute.xlu0 %3283
        %3285 = vrot.lane.b32.xlu0 %v3238, 17
        %v3286 = vpop.permute.xlu0 %3285
        %v3287 = vsel %vm965, %v3284, %v3286
        %v3288 = vsel %vm965, %v3282, %v3284
        %v3289 = vsel %vm965, %v3280, %v3282
        %v3290 = vsel %vm965, %v3278, %v3280
        %v3291 = vsel %vm965, %v3276, %v3278
        %v3292 = vsel %vm965, %v3274, %v3276
        %v3293 = vsel %vm965, %v3272, %v3274
        %v3294 = vsel %vm965, %v3270, %v3272
        %v3295 = vsel %vm965, %v3268, %v3270
        %v3296 = vsel %vm965, %v3266, %v3268
        %v3297 = vsel %vm965, %v3264, %v3266
        %v3298 = vsel %vm965, %v3262, %v3264
        %v3299 = vsel %vm965, %v3260, %v3262
        %v3300 = vsel %vm965, %v3258, %v3260
        %v3301 = vsel %vm965, %v3256, %v3258
        %v3302 = vsel %vm965, %v3286, %v3256
        %s3303 = scalar_lea.vmem %s6, 258
        %v3304 = vld [vmem:[%s3303] ss:$8 sm:$0xf]
        %v3305 = vld [vmem:[%s3303] ss:$8 sm:$0xf0]
        %v3306 = vor.u32 %v3304, %v3305
        %s3307 = scalar_lea.vmem %s6, 322
        %v3308 = vld [vmem:[%s3307] ss:$8 sm:$0xf]
        %v3309 = vld [vmem:[%s3307] ss:$8 sm:$0xf0]
        %v3310 = vor.u32 %v3308, %v3309
        %v3327 = vrot.slane %v3299, 7
        %v3328 = vrot.slane %v3298, 6
        %v3329 = vrot.slane %v3297, 5
        %v3330 = vrot.slane %v3296, 4
        %v3331 = vrot.slane %v3295, 3
        %v3332 = vrot.slane %v3294, 2
        %v3333 = vrot.slane %v3293, 1
        %v3334 = vrot.slane %v3291, 7
        %v3335 = vrot.slane %v3290, 6
        %v3336 = vrot.slane %v3289, 5
        %v3337 = vrot.slane %v3288, 4
        %v3338 = vrot.slane %v3287, 3
        %v3339 = vrot.slane %v3302, 2
        %v3340 = vrot.slane %v3301, 1
        %v3341 = vsel %vm1019, %v3300, %v3327
        %v3342 = vsel %vm1021, %v3328, %v3329
        %v3343 = vsel %vm1023, %v3341, %v3342
        %v3344 = vsel %vm1025, %v3330, %v3331
        %v3345 = vsel %vm1027, %v3332, %v3333
        %v3346 = vsel %vm1029, %v3344, %v3345
        %v3347 = vsel %vm1031, %v3343, %v3346
        %v3348 = vsel %vm1019, %v3292, %v3334
        %v3349 = vsel %vm1021, %v3335, %v3336
        %v3350 = vsel %vm1023, %v3348, %v3349
        %v3351 = vsel %vm1025, %v3337, %v3338
        %v3352 = vsel %vm1027, %v3339, %v3340
        %v3353 = vsel %vm1029, %v3351, %v3352
        %v3354 = vsel %vm1031, %v3350, %v3353
        %v3357 = vmul.f32 %v3306, %v3347
        %v3358 = vmul.f32 %v3310, %v3354
        %v3359 = vadd.f32 %v3221, %v3357
        %v3360 = vadd.f32 %v3222, %v3358
        %v3361 = vrot.slane %v491, 3
        %v3362 = vrot.slane %v520, 3
        %v3363 = vrot.slane %v549, 3
        %v3364 = vrot.slane %v578, 3
        %v3365 = vrot.slane %v607, 3
        %v3366 = vrot.slane %v636, 3
        %v3367 = vrot.slane %v665, 3
        %v3368 = vrot.slane %v694, 3
        %v3369 = vrot.slane %v723, 3
        %v3370 = vrot.slane %v752, 3
        %v3371 = vrot.slane %v781, 3
        %v3372 = vrot.slane %v810, 3
        %v3373 = vrot.slane %v839, 3
        %v3374 = vrot.slane %v868, 3
        %v3375 = vrot.slane %v897, 3
        %v3376 = vrot.slane %v926, 3
        %3393 = vrot.lane.b32.xlu0 %v3361, 16
        %v3394 = vpop.permute.xlu0 %3393
        %3395 = vrot.lane.b32.xlu0 %v3362, 16
        %v3396 = vpop.permute.xlu0 %3395
        %3397 = vrot.lane.b32.xlu0 %v3363, 16
        %v3398 = vpop.permute.xlu0 %3397
        %3399 = vrot.lane.b32.xlu0 %v3364, 16
        %v3400 = vpop.permute.xlu0 %3399
        %3401 = vrot.lane.b32.xlu0 %v3365, 16
        %v3402 = vpop.permute.xlu0 %3401
        %3403 = vrot.lane.b32.xlu0 %v3366, 16
        %v3404 = vpop.permute.xlu0 %3403
        %3405 = vrot.lane.b32.xlu0 %v3367, 16
        %v3406 = vpop.permute.xlu0 %3405
        %3407 = vrot.lane.b32.xlu0 %v3368, 16
        %v3408 = vpop.permute.xlu0 %3407
        %3409 = vrot.lane.b32.xlu0 %v3369, 16
        %v3410 = vpop.permute.xlu0 %3409
        %3411 = vrot.lane.b32.xlu0 %v3370, 16
        %v3412 = vpop.permute.xlu0 %3411
        %3413 = vrot.lane.b32.xlu0 %v3371, 16
        %v3414 = vpop.permute.xlu0 %3413
        %3415 = vrot.lane.b32.xlu0 %v3372, 16
        %v3416 = vpop.permute.xlu0 %3415
        %3417 = vrot.lane.b32.xlu0 %v3373, 16
        %v3418 = vpop.permute.xlu0 %3417
        %3419 = vrot.lane.b32.xlu0 %v3374, 16
        %v3420 = vpop.permute.xlu0 %3419
        %3421 = vrot.lane.b32.xlu0 %v3375, 16
        %v3422 = vpop.permute.xlu0 %3421
        %3423 = vrot.lane.b32.xlu0 %v3376, 16
        %v3424 = vpop.permute.xlu0 %3423
        %v3425 = vsel %vm1126, %v3422, %v3424
        %v3426 = vsel %vm1126, %v3420, %v3422
        %v3427 = vsel %vm1126, %v3418, %v3420
        %v3428 = vsel %vm1126, %v3416, %v3418
        %v3429 = vsel %vm1126, %v3414, %v3416
        %v3430 = vsel %vm1126, %v3412, %v3414
        %v3431 = vsel %vm1126, %v3410, %v3412
        %v3432 = vsel %vm1126, %v3408, %v3410
        %v3433 = vsel %vm1126, %v3406, %v3408
        %v3434 = vsel %vm1126, %v3404, %v3406
        %v3435 = vsel %vm1126, %v3402, %v3404
        %v3436 = vsel %vm1126, %v3400, %v3402
        %v3437 = vsel %vm1126, %v3398, %v3400
        %v3438 = vsel %vm1126, %v3396, %v3398
        %v3439 = vsel %vm1126, %v3394, %v3396
        %v3440 = vsel %vm1126, %v3424, %v3394
        %s3441 = scalar_lea.vmem %s6, 259
        %v3442 = vld [vmem:[%s3441] ss:$8 sm:$0xf]
        %v3443 = vld [vmem:[%s3441] ss:$8 sm:$0xf0]
        %v3444 = vor.u32 %v3442, %v3443
        %s3445 = scalar_lea.vmem %s6, 323
        %v3446 = vld [vmem:[%s3445] ss:$8 sm:$0xf]
        %v3447 = vld [vmem:[%s3445] ss:$8 sm:$0xf0]
        %v3448 = vor.u32 %v3446, %v3447
        %v3465 = vrot.slane %v3437, 7
        %v3466 = vrot.slane %v3436, 6
        %v3467 = vrot.slane %v3435, 5
        %v3468 = vrot.slane %v3434, 4
        %v3469 = vrot.slane %v3433, 3
        %v3470 = vrot.slane %v3432, 2
        %v3471 = vrot.slane %v3431, 1
        %v3472 = vrot.slane %v3429, 7
        %v3473 = vrot.slane %v3428, 6
        %v3474 = vrot.slane %v3427, 5
        %v3475 = vrot.slane %v3426, 4
        %v3476 = vrot.slane %v3425, 3
        %v3477 = vrot.slane %v3440, 2
        %v3478 = vrot.slane %v3439, 1
        %v3479 = vsel %vm1019, %v3438, %v3465
        %v3480 = vsel %vm1021, %v3466, %v3467
        %v3481 = vsel %vm1023, %v3479, %v3480
        %v3482 = vsel %vm1025, %v3468, %v3469
        %v3483 = vsel %vm1027, %v3470, %v3471
        %v3484 = vsel %vm1029, %v3482, %v3483
        %v3485 = vsel %vm1031, %v3481, %v3484
        %v3486 = vsel %vm1019, %v3430, %v3472
        %v3487 = vsel %vm1021, %v3473, %v3474
        %v3488 = vsel %vm1023, %v3486, %v3487
        %v3489 = vsel %vm1025, %v3475, %v3476
        %v3490 = vsel %vm1027, %v3477, %v3478
        %v3491 = vsel %vm1029, %v3489, %v3490
        %v3492 = vsel %vm1031, %v3488, %v3491
        %v3495 = vmul.f32 %v3444, %v3485
        %v3496 = vmul.f32 %v3448, %v3492
        %v3497 = vadd.f32 %v3359, %v3495
        %v3498 = vadd.f32 %v3360, %v3496
        %v3499 = vrot.slane %v491, 4
        %v3500 = vrot.slane %v520, 4
        %v3501 = vrot.slane %v549, 4
        %v3502 = vrot.slane %v578, 4
        %v3503 = vrot.slane %v607, 4
        %v3504 = vrot.slane %v636, 4
        %v3505 = vrot.slane %v665, 4
        %v3506 = vrot.slane %v694, 4
        %v3507 = vrot.slane %v723, 4
        %v3508 = vrot.slane %v752, 4
        %v3509 = vrot.slane %v781, 4
        %v3510 = vrot.slane %v810, 4
        %v3511 = vrot.slane %v839, 4
        %v3512 = vrot.slane %v868, 4
        %v3513 = vrot.slane %v897, 4
        %v3514 = vrot.slane %v926, 4
        %3531 = vrot.lane.b32.xlu0 %v3499, 15
        %v3532 = vpop.permute.xlu0 %3531
        %3533 = vrot.lane.b32.xlu0 %v3500, 15
        %v3534 = vpop.permute.xlu0 %3533
        %3535 = vrot.lane.b32.xlu0 %v3501, 15
        %v3536 = vpop.permute.xlu0 %3535
        %3537 = vrot.lane.b32.xlu0 %v3502, 15
        %v3538 = vpop.permute.xlu0 %3537
        %3539 = vrot.lane.b32.xlu0 %v3503, 15
        %v3540 = vpop.permute.xlu0 %3539
        %3541 = vrot.lane.b32.xlu0 %v3504, 15
        %v3542 = vpop.permute.xlu0 %3541
        %3543 = vrot.lane.b32.xlu0 %v3505, 15
        %v3544 = vpop.permute.xlu0 %3543
        %3545 = vrot.lane.b32.xlu0 %v3506, 15
        %v3546 = vpop.permute.xlu0 %3545
        %3547 = vrot.lane.b32.xlu0 %v3507, 15
        %v3548 = vpop.permute.xlu0 %3547
        %3549 = vrot.lane.b32.xlu0 %v3508, 15
        %v3550 = vpop.permute.xlu0 %3549
        %3551 = vrot.lane.b32.xlu0 %v3509, 15
        %v3552 = vpop.permute.xlu0 %3551
        %3553 = vrot.lane.b32.xlu0 %v3510, 15
        %v3554 = vpop.permute.xlu0 %3553
        %3555 = vrot.lane.b32.xlu0 %v3511, 15
        %v3556 = vpop.permute.xlu0 %3555
        %3557 = vrot.lane.b32.xlu0 %v3512, 15
        %v3558 = vpop.permute.xlu0 %3557
        %3559 = vrot.lane.b32.xlu0 %v3513, 15
        %v3560 = vpop.permute.xlu0 %3559
        %3561 = vrot.lane.b32.xlu0 %v3514, 15
        %v3562 = vpop.permute.xlu0 %3561
        %v3563 = vsel %vm1265, %v3560, %v3562
        %v3564 = vsel %vm1265, %v3558, %v3560
        %v3565 = vsel %vm1265, %v3556, %v3558
        %v3566 = vsel %vm1265, %v3554, %v3556
        %v3567 = vsel %vm1265, %v3552, %v3554
        %v3568 = vsel %vm1265, %v3550, %v3552
        %v3569 = vsel %vm1265, %v3548, %v3550
        %v3570 = vsel %vm1265, %v3546, %v3548
        %v3571 = vsel %vm1265, %v3544, %v3546
        %v3572 = vsel %vm1265, %v3542, %v3544
        %v3573 = vsel %vm1265, %v3540, %v3542
        %v3574 = vsel %vm1265, %v3538, %v3540
        %v3575 = vsel %vm1265, %v3536, %v3538
        %v3576 = vsel %vm1265, %v3534, %v3536
        %v3577 = vsel %vm1265, %v3532, %v3534
        %v3578 = vsel %vm1265, %v3562, %v3532
        %s3579 = scalar_lea.vmem %s6, 260
        %v3580 = vld [vmem:[%s3579] ss:$8 sm:$0xf]
        %v3581 = vld [vmem:[%s3579] ss:$8 sm:$0xf0]
        %v3582 = vor.u32 %v3580, %v3581
        %s3583 = scalar_lea.vmem %s6, 324
        %v3584 = vld [vmem:[%s3583] ss:$8 sm:$0xf]
        %v3585 = vld [vmem:[%s3583] ss:$8 sm:$0xf0]
        %v3586 = vor.u32 %v3584, %v3585
        %v3603 = vrot.slane %v3575, 7
        %v3604 = vrot.slane %v3574, 6
        %v3605 = vrot.slane %v3573, 5
        %v3606 = vrot.slane %v3572, 4
        %v3607 = vrot.slane %v3571, 3
        %v3608 = vrot.slane %v3570, 2
        %v3609 = vrot.slane %v3569, 1
        %v3610 = vrot.slane %v3567, 7
        %v3611 = vrot.slane %v3566, 6
        %v3612 = vrot.slane %v3565, 5
        %v3613 = vrot.slane %v3564, 4
        %v3614 = vrot.slane %v3563, 3
        %v3615 = vrot.slane %v3578, 2
        %v3616 = vrot.slane %v3577, 1
        %v3617 = vsel %vm1019, %v3576, %v3603
        %v3618 = vsel %vm1021, %v3604, %v3605
        %v3619 = vsel %vm1023, %v3617, %v3618
        %v3620 = vsel %vm1025, %v3606, %v3607
        %v3621 = vsel %vm1027, %v3608, %v3609
        %v3622 = vsel %vm1029, %v3620, %v3621
        %v3623 = vsel %vm1031, %v3619, %v3622
        %v3624 = vsel %vm1019, %v3568, %v3610
        %v3625 = vsel %vm1021, %v3611, %v3612
        %v3626 = vsel %vm1023, %v3624, %v3625
        %v3627 = vsel %vm1025, %v3613, %v3614
        %v3628 = vsel %vm1027, %v3615, %v3616
        %v3629 = vsel %vm1029, %v3627, %v3628
        %v3630 = vsel %vm1031, %v3626, %v3629
        %v3633 = vmul.f32 %v3582, %v3623
        %v3634 = vmul.f32 %v3586, %v3630
        %v3635 = vadd.f32 %v3497, %v3633
        %v3636 = vadd.f32 %v3498, %v3634
        %v3637 = vrot.slane %v491, 5
        %v3638 = vrot.slane %v520, 5
        %v3639 = vrot.slane %v549, 5
        %v3640 = vrot.slane %v578, 5
        %v3641 = vrot.slane %v607, 5
        %v3642 = vrot.slane %v636, 5
        %v3643 = vrot.slane %v665, 5
        %v3644 = vrot.slane %v694, 5
        %v3645 = vrot.slane %v723, 5
        %v3646 = vrot.slane %v752, 5
        %v3647 = vrot.slane %v781, 5
        %v3648 = vrot.slane %v810, 5
        %v3649 = vrot.slane %v839, 5
        %v3650 = vrot.slane %v868, 5
        %v3651 = vrot.slane %v897, 5
        %v3652 = vrot.slane %v926, 5
        %3669 = vrot.lane.b32.xlu0 %v3637, 1
        %v3670 = vpop.permute.xlu0 %3669
        %3671 = vrot.lane.b32.xlu0 %v3638, 1
        %v3672 = vpop.permute.xlu0 %3671
        %3673 = vrot.lane.b32.xlu0 %v3639, 1
        %v3674 = vpop.permute.xlu0 %3673
        %3675 = vrot.lane.b32.xlu0 %v3640, 1
        %v3676 = vpop.permute.xlu0 %3675
        %3677 = vrot.lane.b32.xlu0 %v3641, 1
        %v3678 = vpop.permute.xlu0 %3677
        %3679 = vrot.lane.b32.xlu0 %v3642, 1
        %v3680 = vpop.permute.xlu0 %3679
        %3681 = vrot.lane.b32.xlu0 %v3643, 1
        %v3682 = vpop.permute.xlu0 %3681
        %3683 = vrot.lane.b32.xlu0 %v3644, 1
        %v3684 = vpop.permute.xlu0 %3683
        %3685 = vrot.lane.b32.xlu0 %v3645, 1
        %v3686 = vpop.permute.xlu0 %3685
        %3687 = vrot.lane.b32.xlu0 %v3646, 1
        %v3688 = vpop.permute.xlu0 %3687
        %3689 = vrot.lane.b32.xlu0 %v3647, 1
        %v3690 = vpop.permute.xlu0 %3689
        %3691 = vrot.lane.b32.xlu0 %v3648, 1
        %v3692 = vpop.permute.xlu0 %3691
        %3693 = vrot.lane.b32.xlu0 %v3649, 1
        %v3694 = vpop.permute.xlu0 %3693
        %3695 = vrot.lane.b32.xlu0 %v3650, 1
        %v3696 = vpop.permute.xlu0 %3695
        %3697 = vrot.lane.b32.xlu0 %v3651, 1
        %v3698 = vpop.permute.xlu0 %3697
        %3699 = vrot.lane.b32.xlu0 %v3652, 1
        %v3700 = vpop.permute.xlu0 %3699
        %v3701 = vsel %vm1404, %v3698, %v3700
        %v3702 = vsel %vm1404, %v3696, %v3698
        %v3703 = vsel %vm1404, %v3694, %v3696
        %v3704 = vsel %vm1404, %v3692, %v3694
        %v3705 = vsel %vm1404, %v3690, %v3692
        %v3706 = vsel %vm1404, %v3688, %v3690
        %v3707 = vsel %vm1404, %v3686, %v3688
        %v3708 = vsel %vm1404, %v3684, %v3686
        %v3709 = vsel %vm1404, %v3682, %v3684
        %v3710 = vsel %vm1404, %v3680, %v3682
        %v3711 = vsel %vm1404, %v3678, %v3680
        %v3712 = vsel %vm1404, %v3676, %v3678
        %v3713 = vsel %vm1404, %v3674, %v3676
        %v3714 = vsel %vm1404, %v3672, %v3674
        %v3715 = vsel %vm1404, %v3670, %v3672
        %v3716 = vsel %vm1404, %v3700, %v3670
        %s3717 = scalar_lea.vmem %s6, 261
        %v3718 = vld [vmem:[%s3717] ss:$8 sm:$0xf]
        %v3719 = vld [vmem:[%s3717] ss:$8 sm:$0xf0]
        %v3720 = vor.u32 %v3718, %v3719
        %s3721 = scalar_lea.vmem %s6, 325
        %v3722 = vld [vmem:[%s3721] ss:$8 sm:$0xf]
        %v3723 = vld [vmem:[%s3721] ss:$8 sm:$0xf0]
        %v3724 = vor.u32 %v3722, %v3723
        %v3741 = vrot.slane %v3713, 7
        %v3742 = vrot.slane %v3712, 6
        %v3743 = vrot.slane %v3711, 5
        %v3744 = vrot.slane %v3710, 4
        %v3745 = vrot.slane %v3709, 3
        %v3746 = vrot.slane %v3708, 2
        %v3747 = vrot.slane %v3707, 1
        %v3748 = vrot.slane %v3705, 7
        %v3749 = vrot.slane %v3704, 6
        %v3750 = vrot.slane %v3703, 5
        %v3751 = vrot.slane %v3702, 4
        %v3752 = vrot.slane %v3701, 3
        %v3753 = vrot.slane %v3716, 2
        %v3754 = vrot.slane %v3715, 1
        %v3755 = vsel %vm1019, %v3714, %v3741
        %v3756 = vsel %vm1021, %v3742, %v3743
        %v3757 = vsel %vm1023, %v3755, %v3756
        %v3758 = vsel %vm1025, %v3744, %v3745
        %v3759 = vsel %vm1027, %v3746, %v3747
        %v3760 = vsel %vm1029, %v3758, %v3759
        %v3761 = vsel %vm1031, %v3757, %v3760
        %v3762 = vsel %vm1019, %v3706, %v3748
        %v3763 = vsel %vm1021, %v3749, %v3750
        %v3764 = vsel %vm1023, %v3762, %v3763
        %v3765 = vsel %vm1025, %v3751, %v3752
        %v3766 = vsel %vm1027, %v3753, %v3754
        %v3767 = vsel %vm1029, %v3765, %v3766
        %v3768 = vsel %vm1031, %v3764, %v3767
        %v3771 = vmul.f32 %v3720, %v3761
        %v3772 = vmul.f32 %v3724, %v3768
        %v3773 = vadd.f32 %v3635, %v3771
        %v3774 = vadd.f32 %v3636, %v3772
        %v3775 = vrot.slane %v491, 6
        %v3776 = vrot.slane %v520, 6
        %v3777 = vrot.slane %v549, 6
        %v3778 = vrot.slane %v578, 6
        %v3779 = vrot.slane %v607, 6
        %v3780 = vrot.slane %v636, 6
        %v3781 = vrot.slane %v665, 6
        %v3782 = vrot.slane %v694, 6
        %v3783 = vrot.slane %v723, 6
        %v3784 = vrot.slane %v752, 6
        %v3785 = vrot.slane %v781, 6
        %v3786 = vrot.slane %v810, 6
        %v3787 = vrot.slane %v839, 6
        %v3788 = vrot.slane %v868, 6
        %v3789 = vrot.slane %v897, 6
        %v3790 = vrot.slane %v926, 6
        %s3791 = scalar_lea.vmem %s6, 262
        %v3792 = vld [vmem:[%s3791] ss:$8 sm:$0xf]
        %v3793 = vld [vmem:[%s3791] ss:$8 sm:$0xf0]
        %v3794 = vor.u32 %v3792, %v3793
        %s3795 = scalar_lea.vmem %s6, 326
        %v3796 = vld [vmem:[%s3795] ss:$8 sm:$0xf]
        %v3797 = vld [vmem:[%s3795] ss:$8 sm:$0xf0]
        %v3798 = vor.u32 %v3796, %v3797
        %v3799 = vrot.slane %v3778, 7
        %v3800 = vrot.slane %v3779, 6
        %v3801 = vrot.slane %v3780, 5
        %v3802 = vrot.slane %v3781, 4
        %v3803 = vrot.slane %v3782, 3
        %v3804 = vrot.slane %v3783, 2
        %v3805 = vrot.slane %v3784, 1
        %v3806 = vrot.slane %v3786, 7
        %v3807 = vrot.slane %v3787, 6
        %v3808 = vrot.slane %v3788, 5
        %v3809 = vrot.slane %v3789, 4
        %v3810 = vrot.slane %v3790, 3
        %v3811 = vrot.slane %v3775, 2
        %v3812 = vrot.slane %v3776, 1
        %v3813 = vsel %vm1019, %v3777, %v3799
        %v3814 = vsel %vm1021, %v3800, %v3801
        %v3815 = vsel %vm1023, %v3813, %v3814
        %v3816 = vsel %vm1025, %v3802, %v3803
        %v3817 = vsel %vm1027, %v3804, %v3805
        %v3818 = vsel %vm1029, %v3816, %v3817
        %v3819 = vsel %vm1031, %v3815, %v3818
        %v3820 = vsel %vm1019, %v3785, %v3806
        %v3821 = vsel %vm1021, %v3807, %v3808
        %v3822 = vsel %vm1023, %v3820, %v3821
        %v3823 = vsel %vm1025, %v3809, %v3810
        %v3824 = vsel %vm1027, %v3811, %v3812
        %v3825 = vsel %vm1029, %v3823, %v3824
        %v3826 = vsel %vm1031, %v3822, %v3825
        %v3829 = vmul.f32 %v3794, %v3819
        %v3830 = vmul.f32 %v3798, %v3826
        %v3831 = vadd.f32 %v3773, %v3829
        %v3832 = vadd.f32 %v3774, %v3830
        %v3833 = vrot.slane %v491, 7
        %v3834 = vrot.slane %v520, 7
        %v3835 = vrot.slane %v549, 7
        %v3836 = vrot.slane %v578, 7
        %v3837 = vrot.slane %v607, 7
        %v3838 = vrot.slane %v636, 7
        %v3839 = vrot.slane %v665, 7
        %v3840 = vrot.slane %v694, 7
        %v3841 = vrot.slane %v723, 7
        %v3842 = vrot.slane %v752, 7
        %v3843 = vrot.slane %v781, 7
        %v3844 = vrot.slane %v810, 7
        %v3845 = vrot.slane %v839, 7
        %v3846 = vrot.slane %v868, 7
        %v3847 = vrot.slane %v897, 7
        %v3848 = vrot.slane %v926, 7
        %3865 = vrot.lane.b32.xlu0 %v3833, 127
        %v3866 = vpop.permute.xlu0 %3865
        %3867 = vrot.lane.b32.xlu0 %v3834, 127
        %v3868 = vpop.permute.xlu0 %3867
        %3869 = vrot.lane.b32.xlu0 %v3835, 127
        %v3870 = vpop.permute.xlu0 %3869
        %3871 = vrot.lane.b32.xlu0 %v3836, 127
        %v3872 = vpop.permute.xlu0 %3871
        %3873 = vrot.lane.b32.xlu0 %v3837, 127
        %v3874 = vpop.permute.xlu0 %3873
        %3875 = vrot.lane.b32.xlu0 %v3838, 127
        %v3876 = vpop.permute.xlu0 %3875
        %3877 = vrot.lane.b32.xlu0 %v3839, 127
        %v3878 = vpop.permute.xlu0 %3877
        %3879 = vrot.lane.b32.xlu0 %v3840, 127
        %v3880 = vpop.permute.xlu0 %3879
        %3881 = vrot.lane.b32.xlu0 %v3841, 127
        %v3882 = vpop.permute.xlu0 %3881
        %3883 = vrot.lane.b32.xlu0 %v3842, 127
        %v3884 = vpop.permute.xlu0 %3883
        %3885 = vrot.lane.b32.xlu0 %v3843, 127
        %v3886 = vpop.permute.xlu0 %3885
        %3887 = vrot.lane.b32.xlu0 %v3844, 127
        %v3888 = vpop.permute.xlu0 %3887
        %3889 = vrot.lane.b32.xlu0 %v3845, 127
        %v3890 = vpop.permute.xlu0 %3889
        %3891 = vrot.lane.b32.xlu0 %v3846, 127
        %v3892 = vpop.permute.xlu0 %3891
        %3893 = vrot.lane.b32.xlu0 %v3847, 127
        %v3894 = vpop.permute.xlu0 %3893
        %3895 = vrot.lane.b32.xlu0 %v3848, 127
        %v3896 = vpop.permute.xlu0 %3895
        %v3897 = vsel %vm1601, %v3894, %v3896
        %v3898 = vsel %vm1601, %v3892, %v3894
        %v3899 = vsel %vm1601, %v3890, %v3892
        %v3900 = vsel %vm1601, %v3888, %v3890
        %v3901 = vsel %vm1601, %v3886, %v3888
        %v3902 = vsel %vm1601, %v3884, %v3886
        %v3903 = vsel %vm1601, %v3882, %v3884
        %v3904 = vsel %vm1601, %v3880, %v3882
        %v3905 = vsel %vm1601, %v3878, %v3880
        %v3906 = vsel %vm1601, %v3876, %v3878
        %v3907 = vsel %vm1601, %v3874, %v3876
        %v3908 = vsel %vm1601, %v3872, %v3874
        %v3909 = vsel %vm1601, %v3870, %v3872
        %v3910 = vsel %vm1601, %v3868, %v3870
        %v3911 = vsel %vm1601, %v3866, %v3868
        %v3912 = vsel %vm1601, %v3896, %v3866
        %s3913 = scalar_lea.vmem %s6, 263
        %v3914 = vld [vmem:[%s3913] ss:$8 sm:$0xf]
        %v3915 = vld [vmem:[%s3913] ss:$8 sm:$0xf0]
        %v3916 = vor.u32 %v3914, %v3915
        %s3917 = scalar_lea.vmem %s6, 327
        %v3918 = vld [vmem:[%s3917] ss:$8 sm:$0xf]
        %v3919 = vld [vmem:[%s3917] ss:$8 sm:$0xf0]
        %v3920 = vor.u32 %v3918, %v3919
        %v3937 = vrot.slane %v3908, 7
        %v3938 = vrot.slane %v3907, 6
        %v3939 = vrot.slane %v3906, 5
        %v3940 = vrot.slane %v3905, 4
        %v3941 = vrot.slane %v3904, 3
        %v3942 = vrot.slane %v3903, 2
        %v3943 = vrot.slane %v3902, 1
        %v3944 = vrot.slane %v3900, 7
        %v3945 = vrot.slane %v3899, 6
        %v3946 = vrot.slane %v3898, 5
        %v3947 = vrot.slane %v3897, 4
        %v3948 = vrot.slane %v3912, 3
        %v3949 = vrot.slane %v3911, 2
        %v3950 = vrot.slane %v3910, 1
        %v3951 = vsel %vm1019, %v3909, %v3937
        %v3952 = vsel %vm1021, %v3938, %v3939
        %v3953 = vsel %vm1023, %v3951, %v3952
        %v3954 = vsel %vm1025, %v3940, %v3941
        %v3955 = vsel %vm1027, %v3942, %v3943
        %v3956 = vsel %vm1029, %v3954, %v3955
        %v3957 = vsel %vm1031, %v3953, %v3956
        %v3958 = vsel %vm1019, %v3901, %v3944
        %v3959 = vsel %vm1021, %v3945, %v3946
        %v3960 = vsel %vm1023, %v3958, %v3959
        %v3961 = vsel %vm1025, %v3947, %v3948
        %v3962 = vsel %vm1027, %v3949, %v3950
        %v3963 = vsel %vm1029, %v3961, %v3962
        %v3964 = vsel %vm1031, %v3960, %v3963
        %v3967 = vmul.f32 %v3916, %v3957
        %v3968 = vmul.f32 %v3920, %v3964
        %v3969 = vadd.f32 %v3831, %v3967
        %v3970 = vadd.f32 %v3832, %v3968
        %3971 = vrot.lane.b32.xlu0 %v494, 113
        %v3972 = vpop.permute.xlu0 %3971
        %3973 = vrot.lane.b32.xlu0 %v523, 113
        %v3974 = vpop.permute.xlu0 %3973
        %3975 = vrot.lane.b32.xlu0 %v552, 113
        %v3976 = vpop.permute.xlu0 %3975
        %3977 = vrot.lane.b32.xlu0 %v581, 113
        %v3978 = vpop.permute.xlu0 %3977
        %3979 = vrot.lane.b32.xlu0 %v610, 113
        %v3980 = vpop.permute.xlu0 %3979
        %3981 = vrot.lane.b32.xlu0 %v639, 113
        %v3982 = vpop.permute.xlu0 %3981
        %3983 = vrot.lane.b32.xlu0 %v668, 113
        %v3984 = vpop.permute.xlu0 %3983
        %3985 = vrot.lane.b32.xlu0 %v697, 113
        %v3986 = vpop.permute.xlu0 %3985
        %3987 = vrot.lane.b32.xlu0 %v726, 113
        %v3988 = vpop.permute.xlu0 %3987
        %3989 = vrot.lane.b32.xlu0 %v755, 113
        %v3990 = vpop.permute.xlu0 %3989
        %3991 = vrot.lane.b32.xlu0 %v784, 113
        %v3992 = vpop.permute.xlu0 %3991
        %3993 = vrot.lane.b32.xlu0 %v813, 113
        %v3994 = vpop.permute.xlu0 %3993
        %3995 = vrot.lane.b32.xlu0 %v842, 113
        %v3996 = vpop.permute.xlu0 %3995
        %3997 = vrot.lane.b32.xlu0 %v871, 113
        %v3998 = vpop.permute.xlu0 %3997
        %3999 = vrot.lane.b32.xlu0 %v900, 113
        %v4000 = vpop.permute.xlu0 %3999
        %4001 = vrot.lane.b32.xlu0 %v929, 113
        %v4002 = vpop.permute.xlu0 %4001
        %v4003 = vsel %vm1740, %v4000, %v4002
        %v4004 = vsel %vm1740, %v3998, %v4000
        %v4005 = vsel %vm1740, %v3996, %v3998
        %v4006 = vsel %vm1740, %v3994, %v3996
        %v4007 = vsel %vm1740, %v3992, %v3994
        %v4008 = vsel %vm1740, %v3990, %v3992
        %v4009 = vsel %vm1740, %v3988, %v3990
        %v4010 = vsel %vm1740, %v3986, %v3988
        %v4011 = vsel %vm1740, %v3984, %v3986
        %v4012 = vsel %vm1740, %v3982, %v3984
        %v4013 = vsel %vm1740, %v3980, %v3982
        %v4014 = vsel %vm1740, %v3978, %v3980
        %v4015 = vsel %vm1740, %v3976, %v3978
        %v4016 = vsel %vm1740, %v3974, %v3976
        %v4017 = vsel %vm1740, %v3972, %v3974
        %v4018 = vsel %vm1740, %v4002, %v3972
        %s4019 = scalar_lea.vmem %s6, 384
        %v4020 = vld [vmem:[%s4019] ss:$8 sm:$0xf]
        %v4021 = vld [vmem:[%s4019] ss:$8 sm:$0xf0]
        %v4022 = vor.u32 %v4020, %v4021
        %s4023 = scalar_lea.vmem %s6, 448
        %v4024 = vld [vmem:[%s4023] ss:$8 sm:$0xf]
        %v4025 = vld [vmem:[%s4023] ss:$8 sm:$0xf0]
        %v4026 = vor.u32 %v4024, %v4025
        %v4043 = vrot.slane %v4014, 7
        %v4044 = vrot.slane %v4013, 6
        %v4045 = vrot.slane %v4012, 5
        %v4046 = vrot.slane %v4011, 4
        %v4047 = vrot.slane %v4010, 3
        %v4048 = vrot.slane %v4009, 2
        %v4049 = vrot.slane %v4008, 1
        %v4050 = vrot.slane %v4006, 7
        %v4051 = vrot.slane %v4005, 6
        %v4052 = vrot.slane %v4004, 5
        %v4053 = vrot.slane %v4003, 4
        %v4054 = vrot.slane %v4018, 3
        %v4055 = vrot.slane %v4017, 2
        %v4056 = vrot.slane %v4016, 1
        %v4057 = vsel %vm1019, %v4015, %v4043
        %v4058 = vsel %vm1021, %v4044, %v4045
        %v4059 = vsel %vm1023, %v4057, %v4058
        %v4060 = vsel %vm1025, %v4046, %v4047
        %v4061 = vsel %vm1027, %v4048, %v4049
        %v4062 = vsel %vm1029, %v4060, %v4061
        %v4063 = vsel %vm1031, %v4059, %v4062
        %v4064 = vsel %vm1019, %v4007, %v4050
        %v4065 = vsel %vm1021, %v4051, %v4052
        %v4066 = vsel %vm1023, %v4064, %v4065
        %v4067 = vsel %vm1025, %v4053, %v4054
        %v4068 = vsel %vm1027, %v4055, %v4056
        %v4069 = vsel %vm1029, %v4067, %v4068
        %v4070 = vsel %vm1031, %v4066, %v4069
        %v4073 = vmul.f32 %v4022, %v4063
        %v4074 = vmul.f32 %v4026, %v4070
        %v4075 = vadd.f32 %v3969, %v4073
        %v4076 = vadd.f32 %v3970, %v4074
        %v4093 = vrot.slane %v494, 1
        %v4094 = vrot.slane %v523, 1
        %v4095 = vrot.slane %v552, 1
        %v4096 = vrot.slane %v581, 1
        %v4097 = vrot.slane %v610, 1
        %v4098 = vrot.slane %v639, 1
        %v4099 = vrot.slane %v668, 1
        %v4100 = vrot.slane %v697, 1
        %v4101 = vrot.slane %v726, 1
        %v4102 = vrot.slane %v755, 1
        %v4103 = vrot.slane %v784, 1
        %v4104 = vrot.slane %v813, 1
        %v4105 = vrot.slane %v842, 1
        %v4106 = vrot.slane %v871, 1
        %v4107 = vrot.slane %v900, 1
        %v4108 = vrot.slane %v929, 1
        %4125 = vrot.lane.b32.xlu0 %v4093, 112
        %v4126 = vpop.permute.xlu0 %4125
        %4127 = vrot.lane.b32.xlu0 %v4094, 112
        %v4128 = vpop.permute.xlu0 %4127
        %4129 = vrot.lane.b32.xlu0 %v4095, 112
        %v4130 = vpop.permute.xlu0 %4129
        %4131 = vrot.lane.b32.xlu0 %v4096, 112
        %v4132 = vpop.permute.xlu0 %4131
        %4133 = vrot.lane.b32.xlu0 %v4097, 112
        %v4134 = vpop.permute.xlu0 %4133
        %4135 = vrot.lane.b32.xlu0 %v4098, 112
        %v4136 = vpop.permute.xlu0 %4135
        %4137 = vrot.lane.b32.xlu0 %v4099, 112
        %v4138 = vpop.permute.xlu0 %4137
        %4139 = vrot.lane.b32.xlu0 %v4100, 112
        %v4140 = vpop.permute.xlu0 %4139
        %4141 = vrot.lane.b32.xlu0 %v4101, 112
        %v4142 = vpop.permute.xlu0 %4141
        %4143 = vrot.lane.b32.xlu0 %v4102, 112
        %v4144 = vpop.permute.xlu0 %4143
        %4145 = vrot.lane.b32.xlu0 %v4103, 112
        %v4146 = vpop.permute.xlu0 %4145
        %4147 = vrot.lane.b32.xlu0 %v4104, 112
        %v4148 = vpop.permute.xlu0 %4147
        %4149 = vrot.lane.b32.xlu0 %v4105, 112
        %v4150 = vpop.permute.xlu0 %4149
        %4151 = vrot.lane.b32.xlu0 %v4106, 112
        %v4152 = vpop.permute.xlu0 %4151
        %4153 = vrot.lane.b32.xlu0 %v4107, 112
        %v4154 = vpop.permute.xlu0 %4153
        %4155 = vrot.lane.b32.xlu0 %v4108, 112
        %v4156 = vpop.permute.xlu0 %4155
        %v4157 = vsel %vm1879, %v4154, %v4156
        %v4158 = vsel %vm1879, %v4152, %v4154
        %v4159 = vsel %vm1879, %v4150, %v4152
        %v4160 = vsel %vm1879, %v4148, %v4150
        %v4161 = vsel %vm1879, %v4146, %v4148
        %v4162 = vsel %vm1879, %v4144, %v4146
        %v4163 = vsel %vm1879, %v4142, %v4144
        %v4164 = vsel %vm1879, %v4140, %v4142
        %v4165 = vsel %vm1879, %v4138, %v4140
        %v4166 = vsel %vm1879, %v4136, %v4138
        %v4167 = vsel %vm1879, %v4134, %v4136
        %v4168 = vsel %vm1879, %v4132, %v4134
        %v4169 = vsel %vm1879, %v4130, %v4132
        %v4170 = vsel %vm1879, %v4128, %v4130
        %v4171 = vsel %vm1879, %v4126, %v4128
        %v4172 = vsel %vm1879, %v4156, %v4126
        %s4173 = scalar_lea.vmem %s6, 385
        %v4174 = vld [vmem:[%s4173] ss:$8 sm:$0xf]
        %v4175 = vld [vmem:[%s4173] ss:$8 sm:$0xf0]
        %v4176 = vor.u32 %v4174, %v4175
        %s4177 = scalar_lea.vmem %s6, 449
        %v4178 = vld [vmem:[%s4177] ss:$8 sm:$0xf]
        %v4179 = vld [vmem:[%s4177] ss:$8 sm:$0xf0]
        %v4180 = vor.u32 %v4178, %v4179
        %v4197 = vrot.slane %v4168, 7
        %v4198 = vrot.slane %v4167, 6
        %v4199 = vrot.slane %v4166, 5
        %v4200 = vrot.slane %v4165, 4
        %v4201 = vrot.slane %v4164, 3
        %v4202 = vrot.slane %v4163, 2
        %v4203 = vrot.slane %v4162, 1
        %v4204 = vrot.slane %v4160, 7
        %v4205 = vrot.slane %v4159, 6
        %v4206 = vrot.slane %v4158, 5
        %v4207 = vrot.slane %v4157, 4
        %v4208 = vrot.slane %v4172, 3
        %v4209 = vrot.slane %v4171, 2
        %v4210 = vrot.slane %v4170, 1
        %v4211 = vsel %vm1019, %v4169, %v4197
        %v4212 = vsel %vm1021, %v4198, %v4199
        %v4213 = vsel %vm1023, %v4211, %v4212
        %v4214 = vsel %vm1025, %v4200, %v4201
        %v4215 = vsel %vm1027, %v4202, %v4203
        %v4216 = vsel %vm1029, %v4214, %v4215
        %v4217 = vsel %vm1031, %v4213, %v4216
        %v4218 = vsel %vm1019, %v4161, %v4204
        %v4219 = vsel %vm1021, %v4205, %v4206
        %v4220 = vsel %vm1023, %v4218, %v4219
        %v4221 = vsel %vm1025, %v4207, %v4208
        %v4222 = vsel %vm1027, %v4209, %v4210
        %v4223 = vsel %vm1029, %v4221, %v4222
        %v4224 = vsel %vm1031, %v4220, %v4223
        %v4227 = vmul.f32 %v4176, %v4217
        %v4228 = vmul.f32 %v4180, %v4224
        %v4229 = vadd.f32 %v4075, %v4227
        %v4230 = vadd.f32 %v4076, %v4228
        %v4231 = vrot.slane %v494, 2
        %v4232 = vrot.slane %v523, 2
        %v4233 = vrot.slane %v552, 2
        %v4234 = vrot.slane %v581, 2
        %v4235 = vrot.slane %v610, 2
        %v4236 = vrot.slane %v639, 2
        %v4237 = vrot.slane %v668, 2
        %v4238 = vrot.slane %v697, 2
        %v4239 = vrot.slane %v726, 2
        %v4240 = vrot.slane %v755, 2
        %v4241 = vrot.slane %v784, 2
        %v4242 = vrot.slane %v813, 2
        %v4243 = vrot.slane %v842, 2
        %v4244 = vrot.slane %v871, 2
        %v4245 = vrot.slane %v900, 2
        %v4246 = vrot.slane %v929, 2
        %4263 = vrot.lane.b32.xlu0 %v4231, 111
        %v4264 = vpop.permute.xlu0 %4263
        %4265 = vrot.lane.b32.xlu0 %v4232, 111
        %v4266 = vpop.permute.xlu0 %4265
        %4267 = vrot.lane.b32.xlu0 %v4233, 111
        %v4268 = vpop.permute.xlu0 %4267
        %4269 = vrot.lane.b32.xlu0 %v4234, 111
        %v4270 = vpop.permute.xlu0 %4269
        %4271 = vrot.lane.b32.xlu0 %v4235, 111
        %v4272 = vpop.permute.xlu0 %4271
        %4273 = vrot.lane.b32.xlu0 %v4236, 111
        %v4274 = vpop.permute.xlu0 %4273
        %4275 = vrot.lane.b32.xlu0 %v4237, 111
        %v4276 = vpop.permute.xlu0 %4275
        %4277 = vrot.lane.b32.xlu0 %v4238, 111
        %v4278 = vpop.permute.xlu0 %4277
        %4279 = vrot.lane.b32.xlu0 %v4239, 111
        %v4280 = vpop.permute.xlu0 %4279
        %4281 = vrot.lane.b32.xlu0 %v4240, 111
        %v4282 = vpop.permute.xlu0 %4281
        %4283 = vrot.lane.b32.xlu0 %v4241, 111
        %v4284 = vpop.permute.xlu0 %4283
        %4285 = vrot.lane.b32.xlu0 %v4242, 111
        %v4286 = vpop.permute.xlu0 %4285
        %4287 = vrot.lane.b32.xlu0 %v4243, 111
        %v4288 = vpop.permute.xlu0 %4287
        %4289 = vrot.lane.b32.xlu0 %v4244, 111
        %v4290 = vpop.permute.xlu0 %4289
        %4291 = vrot.lane.b32.xlu0 %v4245, 111
        %v4292 = vpop.permute.xlu0 %4291
        %4293 = vrot.lane.b32.xlu0 %v4246, 111
        %v4294 = vpop.permute.xlu0 %4293
        %v4295 = vsel %vm1986, %v4292, %v4294
        %v4296 = vsel %vm1986, %v4290, %v4292
        %v4297 = vsel %vm1986, %v4288, %v4290
        %v4298 = vsel %vm1986, %v4286, %v4288
        %v4299 = vsel %vm1986, %v4284, %v4286
        %v4300 = vsel %vm1986, %v4282, %v4284
        %v4301 = vsel %vm1986, %v4280, %v4282
        %v4302 = vsel %vm1986, %v4278, %v4280
        %v4303 = vsel %vm1986, %v4276, %v4278
        %v4304 = vsel %vm1986, %v4274, %v4276
        %v4305 = vsel %vm1986, %v4272, %v4274
        %v4306 = vsel %vm1986, %v4270, %v4272
        %v4307 = vsel %vm1986, %v4268, %v4270
        %v4308 = vsel %vm1986, %v4266, %v4268
        %v4309 = vsel %vm1986, %v4264, %v4266
        %v4310 = vsel %vm1986, %v4294, %v4264
        %s4311 = scalar_lea.vmem %s6, 386
        %v4312 = vld [vmem:[%s4311] ss:$8 sm:$0xf]
        %v4313 = vld [vmem:[%s4311] ss:$8 sm:$0xf0]
        %v4314 = vor.u32 %v4312, %v4313
        %s4315 = scalar_lea.vmem %s6, 450
        %v4316 = vld [vmem:[%s4315] ss:$8 sm:$0xf]
        %v4317 = vld [vmem:[%s4315] ss:$8 sm:$0xf0]
        %v4318 = vor.u32 %v4316, %v4317
        %v4335 = vrot.slane %v4306, 7
        %v4336 = vrot.slane %v4305, 6
        %v4337 = vrot.slane %v4304, 5
        %v4338 = vrot.slane %v4303, 4
        %v4339 = vrot.slane %v4302, 3
        %v4340 = vrot.slane %v4301, 2
        %v4341 = vrot.slane %v4300, 1
        %v4342 = vrot.slane %v4298, 7
        %v4343 = vrot.slane %v4297, 6
        %v4344 = vrot.slane %v4296, 5
        %v4345 = vrot.slane %v4295, 4
        %v4346 = vrot.slane %v4310, 3
        %v4347 = vrot.slane %v4309, 2
        %v4348 = vrot.slane %v4308, 1
        %v4349 = vsel %vm1019, %v4307, %v4335
        %v4350 = vsel %vm1021, %v4336, %v4337
        %v4351 = vsel %vm1023, %v4349, %v4350
        %v4352 = vsel %vm1025, %v4338, %v4339
        %v4353 = vsel %vm1027, %v4340, %v4341
        %v4354 = vsel %vm1029, %v4352, %v4353
        %v4355 = vsel %vm1031, %v4351, %v4354
        %v4356 = vsel %vm1019, %v4299, %v4342
        %v4357 = vsel %vm1021, %v4343, %v4344
        %v4358 = vsel %vm1023, %v4356, %v4357
        %v4359 = vsel %vm1025, %v4345, %v4346
        %v4360 = vsel %vm1027, %v4347, %v4348
        %v4361 = vsel %vm1029, %v4359, %v4360
        %v4362 = vsel %vm1031, %v4358, %v4361
        %v4365 = vmul.f32 %v4314, %v4355
        %v4366 = vmul.f32 %v4318, %v4362
        %v4367 = vadd.f32 %v4229, %v4365
        %v4368 = vadd.f32 %v4230, %v4366
        %v4369 = vld [vmem:[#allocation2] sm:$0x1]
        %4371 = vset.pattern.permute.xlu0 0
        %4372 = vperm.xlu0 %4371, %v4369
        %v4373 = vpop.permute.xlu0 %4372
        %v4375 = vperm.slane %v4373, 0
        %v4376 = vadd.f32 %v4367, %v4375
        %v4377 = vadd.f32 %v4368, %v4375
        %vm4378 = vcmp.gt.f32.partialorder %v4376, 0.0
        %vm4379 = vcmp.gt.f32.partialorder %v4377, 0.0
        %v4380 = vmul.f32 %v4376, 0.2
        %v4381 = vmul.f32 %v4377, 0.2
        %v4382 = vsel %vm4378, %v4376, %v4380
        %v4383 = vsel %vm4379, %v4377, %v4381
        %v4384 = vld [vmem:[%s7] sm:$0x1]
        %4386 = vset.pattern.permute.xlu0 1
        %4387 = vperm.xlu0 %4386, %v4384
        %v4388 = vpop.permute.xlu0 %4387
        %v4390 = vperm.slane %v4388, 0
        %v4391 = vmul.f32 %v4390, %v4382
        %v4392 = vmul.f32 %v4390, %v4383
        %v4393 = vld [vmem:[#allocation3] sm:$0x1]
        %4395 = vset.pattern.permute.xlu0 0
        %4396 = vperm.xlu0 %4395, %v4393
        %v4397 = vpop.permute.xlu0 %4396
        %v4399 = vperm.slane %v4397, 0
        %v4400 = vadd.f32 %v4391, %v4399
        %v4401 = vadd.f32 %v4392, %v4399
        %v4402 = vld [vmem:[%s341] sm:$0xff]
        %v4403 = vld [vmem:[%s341 + $0x8] sm:$0xff]
        %4404 = vset.pattern.permute.xlu0 0
        %4405 = vperm.xlu0 %4404, %v4384
        %v4406 = vpop.permute.xlu0 %4405
        %v4408 = vperm.slane %v4406, 0
        %v4409 = vmul.f32 %v4408, %v4402
        %v4410 = vmul.f32 %v4408, %v4403
        %v4411 = vadd.f32 %v4400, %v4409
        %v4412 = vadd.f32 %v4401, %v4410
        %4413 = vst [vmem:[%s345] sm:$0xff] %v4411
        %4414 = vst [vmem:[%s345 + $0x8] sm:$0xff] %v4412
        %p4415 = scmp.lt.s32.totalorder %s25, 1
        %s4416 = scalar_select %p4415, %s25, 1
        %s4417 = smul.addr %s4416, 16
        %s4418 = scalar_lea.vmem %s9, %s4417
        // Predicated region
        $region61: #{swin_gan_forward.1} parent=55 // pred_check
          %p4419 = pneg %p237
        $region62: #{swin_gan_forward.1} parent=55 // pred_check_branch
          %4421 = sbr.rel (%p4419) target = $region64
        $region63: #{swin_gan_forward.1} parent=55 // pred_region
          _
        $region64: #{swin_gan_forward.1} parent=55 // pred_fallthru
          _
      $region56: #{swin_gan_forward.1} parent=5 // pred_fallthru
        _
      %p4422 = scmp.le.s32.totalorder 2, %s20
      // Predicated region
      $region65: #{swin_gan_forward.1} parent=5 // pred_check
        %p4423 = pneg %p4422
      $region66: #{swin_gan_forward.1} parent=5 // pred_check_branch
        %4425 = sbr.rel (%p4423) target = $region68
      $region67: #{swin_gan_forward.1} parent=5 // pred_region
        %s4426 = ssub.s32 %s20, 2
        // Predicated region
        $region69: #{swin_gan_forward.1} parent=67 // pred_check
          %p4427 = pneg %p243
        $region70: #{swin_gan_forward.1} parent=67 // pred_check_branch
          %4429 = sbr.rel (%p4427) target = $region72
        $region71: #{swin_gan_forward.1} parent=67 // pred_region
          %p4430 = scmp.lt.s32.totalorder %s26, 1
          %s4431 = scalar_select %p4430, %s26, 1
          %s4432 = smul.addr %s4431, 16
          %s4433 = scalar_lea.vmem %s9, %s4432
        $region72: #{swin_gan_forward.1} parent=67 // pred_fallthru
          _
      $region68: #{swin_gan_forward.1} parent=5 // pred_fallthru
        _
    $region6: #{swin_gan_forward.1} parent=1 // loop_footer
      %s24 = sadd.s32 1, %s20
    $region7: #{swin_gan_forward.1} parent=1 // loop_footer_branch
      %19 = sbr.rel target = $region3
    $region8: #{swin_gan_forward.1} parent=1 // loop_exit
      _
    %4434 = vsyncpa [#allocation5], 1
    %s4435 = scalar_lea.sflag [#allocation5], 1
    %4436 = vsyncpa %s4435, 1

</llo_original>
